<compile_context>
chip_gen: v7x
topology: tpu7x:2x2x1
jax: 0.10.0
libtpu: 0.0.40
codegen_flags: <defaults>
</compile_context>

<pallas_src>
import math
from functools import partial

import numpy as np
import jax
import jax.numpy as jnp
from jax import lax
from jax.experimental import pallas as pl
from jax.experimental.pallas import tpu as pltpu

_NEG_INF = float("-inf")


def _round_up(x: int, m: int) -> int:
    return ((x + m - 1) // m) * m


# ---------------------------------------------------------------------------
# Kernel 1: frequency-domain complex multiply  z = filt * img
#   filt: (F, U, Vp) split re/im,  img: (B, U, Vp) split re/im
#   out : (B, F, U, Vp) split re/im
# Grid (B, U/TU, F): the image tile's block index does not depend on f, so the
# pipeline keeps it resident across the inner F loop (no redundant re-reads).
# ---------------------------------------------------------------------------
def _comp_mul_kernel(fr_ref, fi_ref, gr_ref, gi_ref, or_ref, oi_ref):
    xr = fr_ref[...]
    xi = fi_ref[...]
    yr = gr_ref[...]
    yi = gi_ref[...]
    or_ref[...] = xr * yr - xi * yi
    oi_ref[...] = xr * yi + xi * yr


def comp_mul_pallas(f_re, f_im, g_re, g_im, *, u_tile):
    F, U, Vp = f_re.shape
    B = g_re.shape[0]
    assert U % u_tile == 0
    n_u = U // u_tile

    filt_spec = pl.BlockSpec((None, u_tile, Vp), lambda b, u, f: (f, u, 0))
    img_spec = pl.BlockSpec((None, u_tile, Vp), lambda b, u, f: (b, u, 0))
    out_spec = pl.BlockSpec((None, None, u_tile, Vp),
                            lambda b, u, f: (b, f, u, 0))
    out_shape = jax.ShapeDtypeStruct((B, F, U, Vp), jnp.float32)

    # 6 planes (4 in, 2 out), double-buffered, f32.
    est = 6 * 2 * u_tile * Vp * 4
    vmem_limit = int(min(max(2 * est, 32 << 20), 112 << 20))

    return pl.pallas_call(
        _comp_mul_kernel,
        out_shape=(out_shape, out_shape),
        grid=(B, n_u, F),
        in_specs=[filt_spec, filt_spec, img_spec, img_spec],
        out_specs=(out_spec, out_spec),
        compiler_params=pltpu.CompilerParams(
            dimension_semantics=("parallel", "parallel", "arbitrary"),
            vmem_limit_bytes=vmem_limit),
    )(f_re, f_im, g_re, g_im)


# ---------------------------------------------------------------------------
# Kernel 2: DoG + sigma scaling + MaxPool3d(k=3, s=1, pad=1, -inf) + peak mask.
# One grid step handles a (F, TH, W) slab of one batch element; two extra
# 8-row blocks of the same array supply the +-1 row halo for the H-axis max.
# ---------------------------------------------------------------------------
def _dog_maxpool_kernel(g_ref, gp_ref, gn_ref, sig_ref, mask_ref, lm_ref, *,
                        threshold, img_h, tile_h):
    t = pl.program_id(1)
    g = g_ref[...]                               # (F, TH, W)
    sig = sig_ref[...]                           # (C, 1, 1)
    C = sig.shape[0]
    W = g.shape[2]

    dog = (g[:-1] - g[1:]) * sig                 # (C, TH, W)

    # Rows past the image (grid padding when H % TH != 0) -> -inf before pooling.
    row = t * tile_h + lax.broadcasted_iota(jnp.int32, (1, tile_h, 1), 1)
    dogm = jnp.where(row < img_h, dog, _NEG_INF)

    # Halo DoG rows: row t*TH-1 (last row of 8-row block t*TH/8 - 1) and row
    # (t+1)*TH (first row of 8-row block (t+1)*TH/8).  Outside the image -> -inf.
    gp = gp_ref[...]                             # (F, 8, W)
    gn = gn_ref[...]
    dog_prev = (gp[:-1, 7:8, :] - gp[1:, 7:8, :]) * sig   # (C, 1, W)
    dog_next = (gn[:-1, 0:1, :] - gn[1:, 0:1, :]) * sig
    prev_row = row[:, 0:1, :] - 1                # == t*TH - 1
    next_row = row[:, 0:1, :] + tile_h           # == (t+1)*TH
    dog_prev = jnp.where(prev_row >= 0, dog_prev, _NEG_INF)
    dog_next = jnp.where(next_row < img_h, dog_next, _NEG_INF)

    # --- 3-wide max along H (sublane axis); halo rows supply the borders -----
    up = jnp.concatenate([dog_prev, dogm[:, :-1, :]], axis=1)
    dn = jnp.concatenate([dogm[:, 1:, :], dog_next], axis=1)
    hmax = jnp.maximum(jnp.maximum(up, dogm), dn)

    # --- 3-wide max along W (lane axis) --------------------------------------
    if W % 128 == 0:
        # roll keeps the shift on the XLU; the two wrapped boundary lanes are
        # recomputed explicitly so the result does not depend on roll direction.
        r1 = pltpu.roll(hmax, 1, axis=2)
        r2 = pltpu.roll(hmax, W - 1, axis=2)
        wmax = jnp.maximum(jnp.maximum(hmax, r1), r2)
        lane = lax.broadcasted_iota(jnp.int32, (1, 1, W), 2)
        left_edge = jnp.max(hmax[:, :, 0:2], axis=2, keepdims=True)
        right_edge = jnp.max(hmax[:, :, W - 2:W], axis=2, keepdims=True)
        wmax = jnp.where(lane == 0, left_edge,
                         jnp.where(lane == W - 1, right_edge, wmax))
    else:
        # fallback for lane widths that are not vreg aligned (tiny test images)
        ncol = jnp.full((C, tile_h, 1), _NEG_INF, jnp.float32)
        wl = jnp.concatenate([ncol, hmax[:, :, :-1]], axis=2)
        wr = jnp.concatenate([hmax[:, :, 1:], ncol], axis=2)
        wmax = jnp.maximum(jnp.maximum(wl, hmax), wr)

    # --- 3-wide max along the channel (leading) axis --------------------------
    npl_ = jnp.full((1, tile_h, W), _NEG_INF, jnp.float32)
    cu = jnp.concatenate([npl_, wmax[:-1]], axis=0)
    cd = jnp.concatenate([wmax[1:], npl_], axis=0)
    lm = jnp.maximum(jnp.maximum(cu, wmax), cd)

    mask_ref[...] = jnp.logical_and(lm == dogm, dogm > threshold).astype(jnp.int8)
    lm_ref[...] = lm


def dog_maxpool_pallas(gaussian_images, sigmas, threshold, *, tile_h):
    B, F, H, W = gaussian_images.shape
    C = F - 1
    tile_h = max(8, _round_up(min(tile_h, _round_up(H, 8)), 8))
    n_h = -(-H // tile_h)
    hb = tile_h // 8
    n8 = -(-H // 8)

    sig = sigmas[:C].astype(jnp.float32).reshape(C, 1, 1)

    g_spec = pl.BlockSpec((None, F, tile_h, W), lambda b, t: (b, 0, t, 0))
    gp_spec = pl.BlockSpec((None, F, 8, W),
                           lambda b, t: (b, 0, jnp.maximum(t * hb - 1, 0), 0))
    gn_spec = pl.BlockSpec((None, F, 8, W),
                           lambda b, t: (b, 0, jnp.minimum((t + 1) * hb, n8 - 1), 0))
    sig_spec = pl.BlockSpec((C, 1, 1), lambda b, t: (0, 0, 0))
    out_spec = pl.BlockSpec((None, C, tile_h, W), lambda b, t: (b, 0, t, 0))

    kernel = partial(_dog_maxpool_kernel, threshold=float(threshold),
                     img_h=H, tile_h=tile_h)

    mask_shape = jax.ShapeDtypeStruct((B, C, H, W), jnp.int8)
    lm_shape = jax.ShapeDtypeStruct((B, C, H, W), jnp.float32)

    # double-buffered IO (main in + 2 halos + f32 lm + i8 mask), margin for temps
    est = 2 * (F * tile_h * W * 4 + 2 * F * 8 * W * 4
               + C * tile_h * W * 4 + C * tile_h * W)
    vmem_limit = int(min(max(4 * est, 32 << 20), 112 << 20))

    mask_i8, lm = pl.pallas_call(
        kernel,
        out_shape=(mask_shape, lm_shape),
        grid=(B, n_h),
        in_specs=[g_spec, gp_spec, gn_spec, sig_spec],
        out_specs=(out_spec, out_spec),
        compiler_params=pltpu.CompilerParams(
            dimension_semantics=("parallel", "parallel"),
            vmem_limit_bytes=vmem_limit),
    )(gaussian_images, gaussian_images, gaussian_images, sig)
    return mask_i8, lm


# ---------------------------------------------------------------------------
# Glue: deterministic parameter construction + FFT plumbing.
# ---------------------------------------------------------------------------
def np_gaussian_kernel(width: int, sigma: float) -> np.ndarray:
    x = np.arange(width, dtype=np.float32)
    mean = (width - 1) / 2.0
    g = (1.0 / (sigma * math.sqrt(2 * math.pi))) * np.exp(
        -(((x - mean) / sigma) ** 2) / 2.0)
    k = np.outer(g, g)
    return (k / k.sum()).astype(np.float32)


class DifferenceOfGaussiansFFTPallas:
    def __init__(self, *, img_height, img_width, min_sigma=1, max_sigma=10,
                 sigma_bins=50, truncate=4.0, maxpool_footprint=3,
                 threshold=0.001, u_tile=None, dog_tile_h=32):
        assert maxpool_footprint == 3  # TODO(synk): generalize beyond 3x3x3 maxpool
        self.img_height = img_height
        self.img_width = img_width
        self.threshold = float(threshold)

        self.sigma_list = np.concatenate([
            np.linspace(min_sigma, max_sigma, sigma_bins),
            [max_sigma + (max_sigma - min_sigma) / (sigma_bins - 1)]])
        self.max_radius = int(truncate * self.sigma_list.max() + 0.5)
        max_bandwidth = 2 * self.max_radius + 1
        padded_h = img_height + max_bandwidth - 1
        padded_w = img_width + max_bandwidth - 1
        self.fft_height = 2 ** math.ceil(math.log2(padded_h))
        self.fft_width = 2 ** math.ceil(math.log2(padded_w))
        self.Vr = self.fft_width // 2 + 1
        self.Vp = _round_up(self.Vr, 128)        # lane-dense one-sided fft width

        kernels = []
        for s in self.sigma_list:
            radius = int(truncate * s + 0.5)
            width = 2 * radius + 1
            k = np_gaussian_kernel(width, float(s))
            cpad = self.max_radius - radius
            if cpad > 0:
                k = np.pad(k, ((cpad, cpad), (cpad, cpad)))
            k = np.pad(k, ((0, self.fft_height - max_bandwidth),
                           (0, self.fft_width - max_bandwidth)))
            kernels.append(k)
        pyramid = np.stack(kernels, axis=0)                      # (F, fh, fw)
        f_pyr = np.fft.rfft2(pyramid, axes=(-2, -1))             # (F, fh, Vr)
        vpad = ((0, 0), (0, 0), (0, self.Vp - self.Vr))
        self.f_pyr_re = jnp.asarray(np.pad(f_pyr.real, vpad), jnp.float32)
        self.f_pyr_im = jnp.asarray(np.pad(f_pyr.imag, vpad), jnp.float32)
        self.sigmas = jnp.asarray(self.sigma_list, jnp.float32)

        # U-tile for comp_mul: largest power of two keeping the 6x double-
        # buffered block budget ~16 MiB (fits comfortably on v5e/v6e/v7x).
        U = self.fft_height
        if u_tile is None:
            budget = 16 << 20
            tu = 8
            while tu * 2 <= min(U, 256) and 48 * (tu * 2) * self.Vp <= budget:
                tu *= 2
            u_tile = min(tu, U)
        assert U % u_tile == 0 and (u_tile % 8 == 0 or u_tile == U)
        self.u_tile = u_tile
        self.dog_tile_h = dog_tile_h

    def __call__(self, x):
        B, H, W = x.shape
        assert (H, W) == (self.img_height, self.img_width)
        padded = jnp.pad(
            x.astype(jnp.float32),
            ((0, 0), (0, self.fft_height - H), (0, self.fft_width - W)))
        # TODO(synk): rfft2 / irfft2 have no Pallas TPU primitive; they stay in XLA.
        f_img = jnp.fft.rfft2(padded, axes=(-2, -1))
        vpad = ((0, 0), (0, 0), (0, self.Vp - self.Vr))
        f_re = jnp.pad(jnp.real(f_img).astype(jnp.float32), vpad)
        f_im = jnp.pad(jnp.imag(f_img).astype(jnp.float32), vpad)

        o_re, o_im = comp_mul_pallas(self.f_pyr_re, self.f_pyr_im, f_re, f_im,
                                     u_tile=self.u_tile)
        # TODO(synk): XLA BitcastConvert does not support complex dtypes, so the
        # re/im -> complex64 recombine is one fused slice+complex pass here.
        f_gauss = lax.complex(o_re[..., :self.Vr], o_im[..., :self.Vr])
        gaussian_images = jnp.fft.irfft2(
            f_gauss, s=(self.fft_height, self.fft_width), axes=(-2, -1)
        ).astype(jnp.float32)                                    # (B, F, fh, fw)

        r = self.max_radius
        # TODO(synk): crop is a plain XLA slice; fusing it into the DoG kernel
        # needs element-offset (pl.Element) or manual-DMA indexing.
        gaussian_images = gaussian_images[:, :, r:H + r, r:W + r]  # (B, F, H, W)

        mask_i8, local_maxima = dog_maxpool_pallas(
            gaussian_images, self.sigmas, self.threshold, tile_h=self.dog_tile_h)
        return mask_i8.astype(jnp.bool_), local_maxima


def reference_forward(model, x):
    """Pure-JAX (XLA-only) reference for correctness checking."""
    H, W = model.img_height, model.img_width
    padded = jnp.pad(x.astype(jnp.float32),
                     ((0, 0), (0, model.fft_height - H), (0, model.fft_width - W)))
    f_img = jnp.fft.rfft2(padded, axes=(-2, -1))
    f_filt = lax.complex(model.f_pyr_re[..., :model.Vr],
                         model.f_pyr_im[..., :model.Vr])
    f_gauss = f_filt[None, :, :, :] * f_img[:, None, :, :]
    g = jnp.fft.irfft2(f_gauss, s=(model.fft_height, model.fft_width),
                       axes=(-2, -1)).astype(jnp.float32)
    r = model.max_radius
    g = g[:, :, r:H + r, r:W + r]
    C = g.shape[1] - 1
    sig = model.sigmas[:C].reshape(1, C, 1, 1)
    dog = (g[:, :-1] - g[:, 1:]) * sig
    lm = lax.reduce_window(dog, jnp.float32(-jnp.inf), lax.max,
                           window_dimensions=(1, 3, 3, 3),
                           window_strides=(1, 1, 1, 1),
                           padding=((0, 0), (1, 1), (1, 1), (1, 1)))
    mask = jnp.logical_and(lm == dog, dog > model.threshold)
    return mask, lm


if __name__ == "__main__":
    key = jax.random.PRNGKey(0)
    B, H, W = 2, 128, 128
    x = jax.random.uniform(key, (B, H, W), dtype=jnp.float32)

    dog = DifferenceOfGaussiansFFTPallas(
        img_height=H, img_width=W, min_sigma=1, max_sigma=2, sigma_bins=4,
        truncate=4.0, maxpool_footprint=3, threshold=0.001,
        u_tile=64, dog_tile_h=32)   # small tiles so the demo exercises tiling/halos

    forward = jax.jit(lambda inp: dog(inp))
    mask, local_maxima = forward(x)
    jax.block_until_ready((mask, local_maxima))

    C = len(dog.sigma_list) - 1
    assert mask.shape == (B, C, H, W) and mask.dtype == jnp.bool_
    assert local_maxima.shape == (B, C, H, W)
    assert local_maxima.dtype == jnp.float32
    assert bool(jnp.all(jnp.isfinite(local_maxima)))

    # Validate against a pure-JAX reference of the same forward pass.
    mask_ref, lm_ref = reference_forward(dog, x)
    np.testing.assert_allclose(np.asarray(local_maxima), np.asarray(lm_ref),
                               rtol=1e-4, atol=1e-5)
    mismatch = float(jnp.mean((mask != mask_ref).astype(jnp.float32)))
    assert mismatch < 1e-3, f"mask mismatch fraction {mismatch}"

    print("KERNEL_OK")
</pallas_src>

<mosaic_0001>
module attributes {stable_mosaic.version = 11 : i64} {
  func.func @_comp_mul_kernel(%arg0: i32, %arg1: i32, %arg2: i32, %arg3: memref<1x64x256xf32, #tpu.memory_space<vmem>>, %arg4: memref<1x64x256xf32, #tpu.memory_space<vmem>>, %arg5: memref<1x64x256xf32, #tpu.memory_space<vmem>>, %arg6: memref<1x64x256xf32, #tpu.memory_space<vmem>>, %arg7: memref<1x1x64x256xf32, #tpu.memory_space<vmem>>, %arg8: memref<1x1x64x256xf32, #tpu.memory_space<vmem>>) attributes {dimension_semantics = [#tpu.dimension_semantics<parallel>, #tpu.dimension_semantics<parallel>, #tpu.dimension_semantics<arbitrary>], iteration_bounds = array<i64: 2, 4, 5>, scalar_prefetch = 0 : i64, scratch_operands = 0 : i64, tpu.core_type = #tpu.core_type<tc>, window_params = [{transform_indices = @transform_0, window_bounds = array<i64: 1, 64, 256>}, {transform_indices = @transform_1, window_bounds = array<i64: 1, 64, 256>}, {transform_indices = @transform_2, window_bounds = array<i64: 1, 64, 256>}, {transform_indices = @transform_3, window_bounds = array<i64: 1, 64, 256>}, {transform_indices = @transform_4, window_bounds = array<i64: 1, 1, 64, 256>}, {transform_indices = @transform_5, window_bounds = array<i64: 1, 1, 64, 256>}]} {
    %c0 = arith.constant 0 : index
    %c0_0 = arith.constant 0 : index
    %c0_1 = arith.constant 0 : index
    %0 = vector.load %arg3[%c0, %c0_0, %c0_1] : memref<1x64x256xf32, #tpu.memory_space<vmem>>, vector<1x64x256xf32>
    %1 = vector.shape_cast %0 : vector<1x64x256xf32> to vector<64x256xf32>
    %c0_2 = arith.constant 0 : index
    %c0_3 = arith.constant 0 : index
    %c0_4 = arith.constant 0 : index
    %2 = vector.load %arg4[%c0_2, %c0_3, %c0_4] : memref<1x64x256xf32, #tpu.memory_space<vmem>>, vector<1x64x256xf32>
    %3 = vector.shape_cast %2 : vector<1x64x256xf32> to vector<64x256xf32>
    %c0_5 = arith.constant 0 : index
    %c0_6 = arith.constant 0 : index
    %c0_7 = arith.constant 0 : index
    %4 = vector.load %arg5[%c0_5, %c0_6, %c0_7] : memref<1x64x256xf32, #tpu.memory_space<vmem>>, vector<1x64x256xf32>
    %5 = vector.shape_cast %4 : vector<1x64x256xf32> to vector<64x256xf32>
    %c0_8 = arith.constant 0 : index
    %c0_9 = arith.constant 0 : index
    %c0_10 = arith.constant 0 : index
    %6 = vector.load %arg6[%c0_8, %c0_9, %c0_10] : memref<1x64x256xf32, #tpu.memory_space<vmem>>, vector<1x64x256xf32>
    %7 = vector.shape_cast %6 : vector<1x64x256xf32> to vector<64x256xf32>
    %8 = arith.mulf %1, %5 : vector<64x256xf32>
    %9 = arith.mulf %3, %7 : vector<64x256xf32>
    %10 = arith.subf %8, %9 : vector<64x256xf32>
    %c0_11 = arith.constant 0 : index
    %c0_12 = arith.constant 0 : index
    %c0_13 = arith.constant 0 : index
    %c0_14 = arith.constant 0 : index
    %11 = vector.load %arg7[%c0_11, %c0_12, %c0_13, %c0_14] : memref<1x1x64x256xf32, #tpu.memory_space<vmem>>, vector<1x1x64x256xf32>
    %12 = vector.shape_cast %11 : vector<1x1x64x256xf32> to vector<64x256xf32>
    %13 = vector.shape_cast %10 : vector<64x256xf32> to vector<1x1x64x256xf32>
    tpu.vector_store %arg7[%c0_11, %c0_12, %c0_13, %c0_14], %13 {strides = array<i32>} : memref<1x1x64x256xf32, #tpu.memory_space<vmem>>, vector<1x1x64x256xf32>,
    %14 = arith.mulf %1, %7 : vector<64x256xf32>
    %15 = arith.mulf %3, %5 : vector<64x256xf32>
    %16 = arith.addf %14, %15 : vector<64x256xf32>
    %c0_15 = arith.constant 0 : index
    %c0_16 = arith.constant 0 : index
    %c0_17 = arith.constant 0 : index
    %c0_18 = arith.constant 0 : index
    %17 = vector.load %arg8[%c0_15, %c0_16, %c0_17, %c0_18] : memref<1x1x64x256xf32, #tpu.memory_space<vmem>>, vector<1x1x64x256xf32>
    %18 = vector.shape_cast %17 : vector<1x1x64x256xf32> to vector<64x256xf32>
    %19 = vector.shape_cast %16 : vector<64x256xf32> to vector<1x1x64x256xf32>
    tpu.vector_store %arg8[%c0_15, %c0_16, %c0_17, %c0_18], %19 {strides = array<i32>} : memref<1x1x64x256xf32, #tpu.memory_space<vmem>>, vector<1x1x64x256xf32>,
    return
  }
  func.func @transform_0(%arg0: i32, %arg1: i32, %arg2: i32) -> (i32, i32, i32) {
    %c0_i32 = arith.constant 0 : i32
    %c0_i32_0 = arith.constant 0 : i32
    return %arg2, %arg1, %c0_i32 : i32, i32, i32
  }
  func.func @transform_1(%arg0: i32, %arg1: i32, %arg2: i32) -> (i32, i32, i32) {
    %c0_i32 = arith.constant 0 : i32
    %c0_i32_0 = arith.constant 0 : i32
    return %arg2, %arg1, %c0_i32 : i32, i32, i32
  }
  func.func @transform_2(%arg0: i32, %arg1: i32, %arg2: i32) -> (i32, i32, i32) {
    %c0_i32 = arith.constant 0 : i32
    %c0_i32_0 = arith.constant 0 : i32
    return %arg0, %arg1, %c0_i32 : i32, i32, i32
  }
  func.func @transform_3(%arg0: i32, %arg1: i32, %arg2: i32) -> (i32, i32, i32) {
    %c0_i32 = arith.constant 0 : i32
    %c0_i32_0 = arith.constant 0 : i32
    return %arg0, %arg1, %c0_i32 : i32, i32, i32
  }
  func.func @transform_4(%arg0: i32, %arg1: i32, %arg2: i32) -> (i32, i32, i32, i32) {
    %c0_i32 = arith.constant 0 : i32
    %c0_i32_0 = arith.constant 0 : i32
    return %arg0, %arg2, %arg1, %c0_i32 : i32, i32, i32, i32
  }
  func.func @transform_5(%arg0: i32, %arg1: i32, %arg2: i32) -> (i32, i32, i32, i32) {
    %c0_i32 = arith.constant 0 : i32
    %c0_i32_0 = arith.constant 0 : i32
    return %arg0, %arg2, %arg1, %c0_i32 : i32, i32, i32, i32
  }
}

module attributes {stable_mosaic.version = 11 : i64} {
  func.func @_dog_maxpool_kernel(%arg0: i32, %arg1: i32, %arg2: memref<1x5x32x128xf32, #tpu.memory_space<vmem>>, %arg3: memref<1x5x8x128xf32, #tpu.memory_space<vmem>>, %arg4: memref<1x5x8x128xf32, #tpu.memory_space<vmem>>, %arg5: memref<4x1x1xf32, #tpu.memory_space<vmem>>, %arg6: memref<1x4x32x128xi8, #tpu.memory_space<vmem>>, %arg7: memref<1x4x32x128xf32, #tpu.memory_space<vmem>>) attributes {dimension_semantics = [#tpu.dimension_semantics<parallel>, #tpu.dimension_semantics<parallel>], iteration_bounds = array<i64: 2, 4>, scalar_prefetch = 0 : i64, scratch_operands = 0 : i64, tpu.core_type = #tpu.core_type<tc>, window_params = [{transform_indices = @transform_0, window_bounds = array<i64: 1, 5, 32, 128>}, {transform_indices = @transform_1, window_bounds = array<i64: 1, 5, 8, 128>}, {transform_indices = @transform_2, window_bounds = array<i64: 1, 5, 8, 128>}, {pipeline_mode = #tpu.pipeline_mode<synchronous>, transform_indices = @transform_3, window_bounds = array<i64: 4, 1, 1>}, {transform_indices = @transform_4, window_bounds = array<i64: 1, 4, 32, 128>}, {transform_indices = @transform_5, window_bounds = array<i64: 1, 4, 32, 128>}]} {
    %c0 = arith.constant 0 : index
    %c0_0 = arith.constant 0 : index
    %c0_1 = arith.constant 0 : index
    %c0_2 = arith.constant 0 : index
    %0 = vector.load %arg2[%c0, %c0_0, %c0_1, %c0_2] : memref<1x5x32x128xf32, #tpu.memory_space<vmem>>, vector<1x5x32x128xf32>
    %1 = vector.shape_cast %0 : vector<1x5x32x128xf32> to vector<5x32x128xf32>
    %c0_3 = arith.constant 0 : index
    %c0_4 = arith.constant 0 : index
    %c0_5 = arith.constant 0 : index
    %2 = vector.load %arg5[%c0_3, %c0_4, %c0_5] : memref<4x1x1xf32, #tpu.memory_space<vmem>>, vector<4x1x1xf32>
    %3 = vector.extract_strided_slice %1 {offsets = [0, 0, 0], sizes = [4, 32, 128], strides = [1, 1, 1]} : vector<5x32x128xf32> to vector<4x32x128xf32>
    %4 = vector.extract_strided_slice %1 {offsets = [1, 0, 0], sizes = [4, 32, 128], strides = [1, 1, 1]} : vector<5x32x128xf32> to vector<4x32x128xf32>
    %5 = arith.subf %3, %4 : vector<4x32x128xf32>
    %6 = vector.broadcast %2 : vector<4x1x1xf32> to vector<4x32x128xf32>
    %7 = arith.mulf %5, %6 : vector<4x32x128xf32>
    %c32_i32 = arith.constant 32 : i32
    %8 = arith.muli %arg1, %c32_i32 : i32
    %9 = tpu.iota {dimensions = array<i32: 1>} : vector<1x32x1xi32>
    %10 = vector.broadcast %8 : i32 to vector<1x32x1xi32>
    %11 = arith.addi %10, %9 : vector<1x32x1xi32>
    %c128_i32 = arith.constant 128 : i32
    %12 = vector.broadcast %c128_i32 : i32 to vector<1x32x1xi32>
    %13 = arith.cmpi slt, %11, %12 : vector<1x32x1xi32>
    %cst = arith.constant 0xFF800000 : f32
    %14 = vector.shape_cast %13 : vector<1x32x1xi1> to vector<1x32x1xi1>
    %15 = vector.broadcast %14 : vector<1x32x1xi1> to vector<4x32x128xi1>
    %16 = vector.broadcast %cst : f32 to vector<4x32x128xf32>
    %17 = arith.select %15, %7, %16 : vector<4x32x128xi1>, vector<4x32x128xf32>
    %c0_6 = arith.constant 0 : index
    %c0_7 = arith.constant 0 : index
    %c0_8 = arith.constant 0 : index
    %c0_9 = arith.constant 0 : index
    %18 = vector.load %arg3[%c0_6, %c0_7, %c0_8, %c0_9] : memref<1x5x8x128xf32, #tpu.memory_space<vmem>>, vector<1x5x8x128xf32>
    %19 = vector.shape_cast %18 : vector<1x5x8x128xf32> to vector<5x8x128xf32>
    %c0_10 = arith.constant 0 : index
    %c0_11 = arith.constant 0 : index
    %c0_12 = arith.constant 0 : index
    %c0_13 = arith.constant 0 : index
    %20 = vector.load %arg4[%c0_10, %c0_11, %c0_12, %c0_13] : memref<1x5x8x128xf32, #tpu.memory_space<vmem>>, vector<1x5x8x128xf32>
    %21 = vector.shape_cast %20 : vector<1x5x8x128xf32> to vector<5x8x128xf32>
    %22 = vector.extract_strided_slice %19 {offsets = [0, 7, 0], sizes = [4, 1, 128], strides = [1, 1, 1]} : vector<5x8x128xf32> to vector<4x1x128xf32>
    %23 = vector.extract_strided_slice %19 {offsets = [1, 7, 0], sizes = [4, 1, 128], strides = [1, 1, 1]} : vector<5x8x128xf32> to vector<4x1x128xf32>
    %24 = arith.subf %22, %23 : vector<4x1x128xf32>
    %25 = vector.broadcast %2 : vector<4x1x1xf32> to vector<4x1x128xf32>
    %26 = arith.mulf %24, %25 : vector<4x1x128xf32>
    %27 = vector.extract_strided_slice %21 {offsets = [0, 0, 0], sizes = [4, 1, 128], strides = [1, 1, 1]} : vector<5x8x128xf32> to vector<4x1x128xf32>
    %28 = vector.extract_strided_slice %21 {offsets = [1, 0, 0], sizes = [4, 1, 128], strides = [1, 1, 1]} : vector<5x8x128xf32> to vector<4x1x128xf32>
    %29 = arith.subf %27, %28 : vector<4x1x128xf32>
    %30 = vector.broadcast %2 : vector<4x1x1xf32> to vector<4x1x128xf32>
    %31 = arith.mulf %29, %30 : vector<4x1x128xf32>
    %32 = vector.extract_strided_slice %11 {offsets = [0, 0, 0], sizes = [1, 1, 1], strides = [1, 1, 1]} : vector<1x32x1xi32> to vector<1x1x1xi32>
    %c1_i32 = arith.constant 1 : i32
    %33 = vector.broadcast %c1_i32 : i32 to vector<1x1x1xi32>
    %34 = arith.subi %32, %33 : vector<1x1x1xi32>
    %35 = vector.extract_strided_slice %11 {offsets = [0, 0, 0], sizes = [1, 1, 1], strides = [1, 1, 1]} : vector<1x32x1xi32> to vector<1x1x1xi32>
    %c32_i32_14 = arith.constant 32 : i32
    %36 = vector.broadcast %c32_i32_14 : i32 to vector<1x1x1xi32>
    %37 = arith.addi %35, %36 : vector<1x1x1xi32>
    %c0_i32 = arith.constant 0 : i32
    %38 = vector.broadcast %c0_i32 : i32 to vector<1x1x1xi32>
    %39 = arith.cmpi sge, %34, %38 : vector<1x1x1xi32>
    %cst_15 = arith.constant 0xFF800000 : f32
    %40 = vector.shape_cast %39 : vector<1x1x1xi1> to vector<1x1x1xi1>
    %41 = vector.broadcast %40 : vector<1x1x1xi1> to vector<4x1x128xi1>
    %42 = vector.broadcast %cst_15 : f32 to vector<4x1x128xf32>
    %43 = arith.select %41, %26, %42 : vector<4x1x128xi1>, vector<4x1x128xf32>
    %c128_i32_16 = arith.constant 128 : i32
    %44 = vector.broadcast %c128_i32_16 : i32 to vector<1x1x1xi32>
    %45 = arith.cmpi slt, %37, %44 : vector<1x1x1xi32>
    %cst_17 = arith.constant 0xFF800000 : f32
    %46 = vector.shape_cast %45 : vector<1x1x1xi1> to vector<1x1x1xi1>
    %47 = vector.broadcast %46 : vector<1x1x1xi1> to vector<4x1x128xi1>
    %48 = vector.broadcast %cst_17 : f32 to vector<4x1x128xf32>
    %49 = arith.select %47, %31, %48 : vector<4x1x128xi1>, vector<4x1x128xf32>
    %50 = vector.extract_strided_slice %17 {offsets = [0, 0, 0], sizes = [4, 31, 128], strides = [1, 1, 1]} : vector<4x32x128xf32> to vector<4x31x128xf32>
    %51 = tpu.concatenate %43, %50 in 1 : vector<4x1x128xf32>, vector<4x31x128xf32> -> vector<4x32x128xf32>
    %52 = vector.extract_strided_slice %17 {offsets = [0, 1, 0], sizes = [4, 31, 128], strides = [1, 1, 1]} : vector<4x32x128xf32> to vector<4x31x128xf32>
    %53 = tpu.concatenate %52, %49 in 1 : vector<4x31x128xf32>, vector<4x1x128xf32> -> vector<4x32x128xf32>
    %54 = arith.maximumf %51, %17 : vector<4x32x128xf32>
    %55 = arith.maximumf %54, %53 : vector<4x32x128xf32>
    %c1_i32_18 = arith.constant 1 : i32
    %56 = tpu.dynamic_rotate %55 by %c1_i32_18 dim 2 : vector<4x32x128xf32>, i32 -> vector<4x32x128xf32>
    %c127_i32 = arith.constant 127 : i32
    %57 = tpu.dynamic_rotate %55 by %c127_i32 dim 2 : vector<4x32x128xf32>, i32 -> vector<4x32x128xf32>
    %58 = arith.maximumf %55, %56 : vector<4x32x128xf32>
    %59 = arith.maximumf %58, %57 : vector<4x32x128xf32>
    %60 = tpu.iota {dimensions = array<i32: 2>} : vector<1x1x128xi32>
    %61 = vector.extract_strided_slice %55 {offsets = [0, 0, 0], sizes = [4, 32, 2], strides = [1, 1, 1]} : vector<4x32x128xf32> to vector<4x32x2xf32>
    %cst_19 = arith.constant dense<0xFF800000> : vector<4x32xf32>
    %62 = vector.multi_reduction <maximumf>, %61, %cst_19 [2] : vector<4x32x2xf32> to vector<4x32xf32>
    %63 = vector.shape_cast %62 : vector<4x32xf32> to vector<4x32x1xf32>
    %64 = vector.extract_strided_slice %55 {offsets = [0, 0, 126], sizes = [4, 32, 2], strides = [1, 1, 1]} : vector<4x32x128xf32> to vector<4x32x2xf32>
    %cst_20 = arith.constant dense<0xFF800000> : vector<4x32xf32>
    %65 = vector.multi_reduction <maximumf>, %64, %cst_20 [2] : vector<4x32x2xf32> to vector<4x32xf32>
    %66 = vector.shape_cast %65 : vector<4x32xf32> to vector<4x32x1xf32>
    %c0_i32_21 = arith.constant 0 : i32
    %67 = vector.broadcast %c0_i32_21 : i32 to vector<1x1x128xi32>
    %68 = arith.cmpi eq, %60, %67 : vector<1x1x128xi32>
    %c127_i32_22 = arith.constant 127 : i32
    %69 = vector.broadcast %c127_i32_22 : i32 to vector<1x1x128xi32>
    %70 = arith.cmpi eq, %60, %69 : vector<1x1x128xi32>
    %71 = vector.shape_cast %70 : vector<1x1x128xi1> to vector<1x1x128xi1>
    %72 = vector.broadcast %71 : vector<1x1x128xi1> to vector<4x32x128xi1>
    %73 = vector.shape_cast %66 : vector<4x32x1xf32> to vector<4x32x1xf32>
    %74 = vector.broadcast %73 : vector<4x32x1xf32> to vector<4x32x128xf32>
    %75 = arith.select %72, %74, %59 : vector<4x32x128xi1>, vector<4x32x128xf32>
    %76 = vector.shape_cast %68 : vector<1x1x128xi1> to vector<1x1x128xi1>
    %77 = vector.broadcast %76 : vector<1x1x128xi1> to vector<4x32x128xi1>
    %78 = vector.shape_cast %63 : vector<4x32x1xf32> to vector<4x32x1xf32>
    %79 = vector.broadcast %78 : vector<4x32x1xf32> to vector<4x32x128xf32>
    %80 = arith.select %77, %79, %75 : vector<4x32x128xi1>, vector<4x32x128xf32>
    %cst_23 = arith.constant 0xFF800000 : f32
    %81 = vector.broadcast %cst_23 : f32 to vector<1x32x128xf32>
    %82 = vector.extract_strided_slice %80 {offsets = [0, 0, 0], sizes = [3, 32, 128], strides = [1, 1, 1]} : vector<4x32x128xf32> to vector<3x32x128xf32>
    %83 = tpu.concatenate %81, %82 in 0 : vector<1x32x128xf32>, vector<3x32x128xf32> -> vector<4x32x128xf32>
    %84 = vector.extract_strided_slice %80 {offsets = [1, 0, 0], sizes = [3, 32, 128], strides = [1, 1, 1]} : vector<4x32x128xf32> to vector<3x32x128xf32>
    %85 = tpu.concatenate %84, %81 in 0 : vector<3x32x128xf32>, vector<1x32x128xf32> -> vector<4x32x128xf32>
    %86 = arith.maximumf %83, %80 : vector<4x32x128xf32>
    %87 = arith.maximumf %86, %85 : vector<4x32x128xf32>
    %88 = arith.cmpf oeq, %87, %17 : vector<4x32x128xf32>
    %cst_24 = arith.constant 1.000000e-03 : f32
    %89 = vector.broadcast %cst_24 : f32 to vector<4x32x128xf32>
    %90 = arith.cmpf ogt, %17, %89 : vector<4x32x128xf32>
    %91 = arith.andi %88, %90 : vector<4x32x128xi1>
    %92 = arith.extui %91 : vector<4x32x128xi1> to vector<4x32x128xi8>
    %c0_25 = arith.constant 0 : index
    %c0_26 = arith.constant 0 : index
    %c0_27 = arith.constant 0 : index
    %c0_28 = arith.constant 0 : index
    %93 = vector.load %arg6[%c0_25, %c0_26, %c0_27, %c0_28] : memref<1x4x32x128xi8, #tpu.memory_space<vmem>>, vector<1x4x32x128xi8>
    %94 = vector.shape_cast %93 : vector<1x4x32x128xi8> to vector<4x32x128xi8>
    %95 = vector.shape_cast %92 : vector<4x32x128xi8> to vector<1x4x32x128xi8>
    tpu.vector_store %arg6[%c0_25, %c0_26, %c0_27, %c0_28], %95 {strides = array<i32>} : memref<1x4x32x128xi8, #tpu.memory_space<vmem>>, vector<1x4x32x128xi8>,
    %c0_29 = arith.constant 0 : index
    %c0_30 = arith.constant 0 : index
    %c0_31 = arith.constant 0 : index
    %c0_32 = arith.constant 0 : index
    %96 = vector.load %arg7[%c0_29, %c0_30, %c0_31, %c0_32] : memref<1x4x32x128xf32, #tpu.memory_space<vmem>>, vector<1x4x32x128xf32>
    %97 = vector.shape_cast %96 : vector<1x4x32x128xf32> to vector<4x32x128xf32>
    %98 = vector.shape_cast %87 : vector<4x32x128xf32> to vector<1x4x32x128xf32>
    tpu.vector_store %arg7[%c0_29, %c0_30, %c0_31, %c0_32], %98 {strides = array<i32>} : memref<1x4x32x128xf32, #tpu.memory_space<vmem>>, vector<1x4x32x128xf32>,
    return
  }
  func.func @transform_0(%arg0: i32, %arg1: i32) -> (i32, i32, i32, i32) {
    %c0_i32 = arith.constant 0 : i32
    %c0_i32_0 = arith.constant 0 : i32
    %c0_i32_1 = arith.constant 0 : i32
    return %arg0, %c0_i32, %arg1, %c0_i32_0 : i32, i32, i32, i32
  }
  func.func @transform_1(%arg0: i32, %arg1: i32) -> (i32, i32, i32, i32) {
    %c4_i32 = arith.constant 4 : i32
    %0 = arith.muli %arg1, %c4_i32 : i32
    %c1_i32 = arith.constant 1 : i32
    %1 = arith.subi %0, %c1_i32 : i32
    %c0_i32 = arith.constant 0 : i32
    %2 = arith.maxsi %1, %c0_i32 : i32
    %c0_i32_0 = arith.constant 0 : i32
    %c0_i32_1 = arith.constant 0 : i32
    %c0_i32_2 = arith.constant 0 : i32
    return %arg0, %c0_i32_0, %2, %c0_i32_1 : i32, i32, i32, i32
  }
  func.func @transform_2(%arg0: i32, %arg1: i32) -> (i32, i32, i32, i32) {
    %c1_i32 = arith.constant 1 : i32
    %0 = arith.addi %arg1, %c1_i32 : i32
    %c4_i32 = arith.constant 4 : i32
    %1 = arith.muli %0, %c4_i32 : i32
    %c15_i32 = arith.constant 15 : i32
    %2 = arith.minsi %1, %c15_i32 : i32
    %c0_i32 = arith.constant 0 : i32
    %c0_i32_0 = arith.constant 0 : i32
    %c0_i32_1 = arith.constant 0 : i32
    return %arg0, %c0_i32, %2, %c0_i32_0 : i32, i32, i32, i32
  }
  func.func @transform_3(%arg0: i32, %arg1: i32) -> (i32, i32, i32) {
    %c0_i32 = arith.constant 0 : i32
    %c0_i32_0 = arith.constant 0 : i32
    %c0_i32_1 = arith.constant 0 : i32
    %c0_i32_2 = arith.constant 0 : i32
    return %c0_i32, %c0_i32_0, %c0_i32_1 : i32, i32, i32
  }
  func.func @transform_4(%arg0: i32, %arg1: i32) -> (i32, i32, i32, i32) {
    %c0_i32 = arith.constant 0 : i32
    %c0_i32_0 = arith.constant 0 : i32
    %c0_i32_1 = arith.constant 0 : i32
    return %arg0, %c0_i32, %arg1, %c0_i32_0 : i32, i32, i32, i32
  }
  func.func @transform_5(%arg0: i32, %arg1: i32) -> (i32, i32, i32, i32) {
    %c0_i32 = arith.constant 0 : i32
    %c0_i32_0 = arith.constant 0 : i32
    %c0_i32_1 = arith.constant 0 : i32
    return %arg0, %c0_i32, %arg1, %c0_i32_0 : i32, i32, i32, i32
  }
}

</mosaic_0001>

<llo_original>
// kernel: _lambda_.2
$region0: #{_lambda_.2}
  #allocation0 [shape = 'u32[]', space=smem, size = 0x4, offset = 0x4, fixed_abs, tag = 'smem constant byte address 0x4 - core index']
  #allocation1 [shape = 'u32[144,128]{1,0:T(1,128)}', space=vmem, size = 0x12000, scoped, tag = 'internal scratch']
  %s0 = inlined_call_operand.vmem [shape: f32[5,256,256], index: 0, kind: input, shape index: {}]
  %s1 = inlined_call_operand.vmem [shape: f32[5,256,256], index: 1, kind: input, shape index: {}]
  %s2 = inlined_call_operand.vmem [shape: f32[2,256,256], index: 2, kind: input, shape index: {}]
  %s3 = inlined_call_operand.vmem [shape: f32[2,256,256], index: 3, kind: input, shape index: {}]
  %s4 = inlined_call_operand.vmem [shape: f32[2,5,256,256], index: 4, kind: output, shape index: {0}]
  %s5 = inlined_call_operand.vmem [shape: f32[2,5,256,256], index: 5, kind: output, shape index: {1}]
  %6 = xla_tuple %s4, %s5
  %s7 = sld [smem:[#allocation0]]
  $region57: #{_lambda_.2} parent=0
    _
  %s9 = ssub.s32 1, %s7
  %s10 = scalar_select 0, %s9, %s7
  loop: start=0, step=1, limit=42
  $region2: #{_lambda_.2} parent=0 // loop_pre_header
    _
  $region3: #{_lambda_.2} parent=0 // loop_header
    %s12 = sphi 0, %s16
    %p13 = scmp.ge.s32.totalorder %s12, 42
    %s19 = sphi 0, %s38
    %s20 = sphi 0, %s34
    %s21 = sphi 0, %s30
    %s22 = sphi 0, %s19
    %s23 = sphi 0, %s20
    %s24 = sphi 0, %s21
    %s25 = sphi 0, %s22
    %s26 = sphi 0, %s23
    %s27 = sphi 0, %s24
    %s43 = sphi 0, %s45
    %s46 = sphi 0, %s43
    %s47 = sphi 0, %s46
    %s63 = sphi 0, %s47
    %s71 = sphi 0, %s73
    %s74 = sphi 0, %s71
    %s75 = sphi 0, %s74
    %s91 = sphi 0, %s75
    %s99 = sphi 0, %s101
    %s102 = sphi 0, %s99
    %s103 = sphi 0, %s102
    %s119 = sphi 0, %s103
    %s127 = sphi 0, %s129
    %s130 = sphi 0, %s127
    %s131 = sphi 0, %s130
    %s147 = sphi 0, %s131
    %s157 = sphi 0, %s159
    %s160 = sphi 0, %s157
    %s161 = sphi 0, %s160
    %s177 = sphi 0, %s161
    %s187 = sphi 0, %s189
    %s190 = sphi 0, %s187
    %s191 = sphi 0, %s190
    %s207 = sphi 0, %s191
  $region4: #{_lambda_.2} parent=0 // loop_header_branch
    %15 = sbr.rel (%p13) target = $region8
  $region5: #{_lambda_.2} parent=0 // loop_body
    %s17 = ssub.s32 %s12, 1
    %s18 = ssub.s32 %s12, 2
    %s28 = sadd.s32 1, %s21
    %p29 = scmp.ge.s32.totalorder %s28, 5
    %s30 = scalar_select %p29, 0, %s28
    %s31 = sadd.s32 1, %s20
    %s32 = scalar_select %p29, %s31, %s20
    %p33 = scmp.ge.s32.totalorder %s32, 4
    %s34 = scalar_select %p33, 0, %s32
    %s35 = sadd.s32 1, %s19
    %s36 = scalar_select %p33, %s35, %s19
    %p37 = scmp.ge.s32.totalorder %s36, 2
    %s38 = scalar_select %p37, 0, %s36
    %s39 = ssub.s32 %s21, %s30
    %s40 = ssub.s32 %s20, %s34
    %s41 = sor.u32 %s39, %s40
    %p42 = scmp.eq.s32.totalorder %s41, 0
    %s44 = sadd.s32 %s43, 1
    %s45 = scalar_select %p42, %s43, %s44
    %p48 = pneg %p42
    %p49 = scmp.eq.s32.totalorder %s12, 39
    %p50 = por %p48, %p49
    %p51 = scmp.ne.s32.totalorder %s43, %s46
    %p52 = scmp.eq.s32.totalorder %s12, 0
    %p53 = por %p51, %p52
    %p54 = scmp.ne.s32.totalorder %s43, %s46
    %p55 = scmp.eq.s32.totalorder %s17, 39
    %p56 = por %p54, %p55
    %p57 = scmp.ne.s32.totalorder %s46, %s47
    %p58 = scmp.eq.s32.totalorder %s17, 0
    %p59 = por %p57, %p58
    %p60 = scmp.ne.s32.totalorder %s46, %s47
    %p61 = scmp.eq.s32.totalorder %s18, 39
    %p62 = por %p60, %p61
    %p64 = scmp.ne.s32.totalorder %s47, %s63
    %p65 = scmp.eq.s32.totalorder %s18, 0
    %p66 = por %p64, %p65
    %s67 = ssub.s32 %s21, %s30
    %s68 = ssub.s32 %s20, %s34
    %s69 = sor.u32 %s67, %s68
    %p70 = scmp.eq.s32.totalorder %s69, 0
    %s72 = sadd.s32 %s71, 1
    %s73 = scalar_select %p70, %s71, %s72
    %p76 = pneg %p70
    %p77 = scmp.eq.s32.totalorder %s12, 39
    %p78 = por %p76, %p77
    %p79 = scmp.ne.s32.totalorder %s71, %s74
    %p80 = scmp.eq.s32.totalorder %s12, 0
    %p81 = por %p79, %p80
    %p82 = scmp.ne.s32.totalorder %s71, %s74
    %p83 = scmp.eq.s32.totalorder %s17, 39
    %p84 = por %p82, %p83
    %p85 = scmp.ne.s32.totalorder %s74, %s75
    %p86 = scmp.eq.s32.totalorder %s17, 0
    %p87 = por %p85, %p86
    %p88 = scmp.ne.s32.totalorder %s74, %s75
    %p89 = scmp.eq.s32.totalorder %s18, 39
    %p90 = por %p88, %p89
    %p92 = scmp.ne.s32.totalorder %s75, %s91
    %p93 = scmp.eq.s32.totalorder %s18, 0
    %p94 = por %p92, %p93
    %s95 = ssub.s32 %s19, %s38
    %s96 = ssub.s32 %s20, %s34
    %s97 = sor.u32 %s95, %s96
    %p98 = scmp.eq.s32.totalorder %s97, 0
    %s100 = sadd.s32 %s99, 1
    %s101 = scalar_select %p98, %s99, %s100
    %p104 = pneg %p98
    %p105 = scmp.eq.s32.totalorder %s12, 39
    %p106 = por %p104, %p105
    %p107 = scmp.ne.s32.totalorder %s99, %s102
    %p108 = scmp.eq.s32.totalorder %s12, 0
    %p109 = por %p107, %p108
    %p110 = scmp.ne.s32.totalorder %s99, %s102
    %p111 = scmp.eq.s32.totalorder %s17, 39
    %p112 = por %p110, %p111
    %p113 = scmp.ne.s32.totalorder %s102, %s103
    %p114 = scmp.eq.s32.totalorder %s17, 0
    %p115 = por %p113, %p114
    %p116 = scmp.ne.s32.totalorder %s102, %s103
    %p117 = scmp.eq.s32.totalorder %s18, 39
    %p118 = por %p116, %p117
    %p120 = scmp.ne.s32.totalorder %s103, %s119
    %p121 = scmp.eq.s32.totalorder %s18, 0
    %p122 = por %p120, %p121
    %s123 = ssub.s32 %s19, %s38
    %s124 = ssub.s32 %s20, %s34
    %s125 = sor.u32 %s123, %s124
    %p126 = scmp.eq.s32.totalorder %s125, 0
    %s128 = sadd.s32 %s127, 1
    %s129 = scalar_select %p126, %s127, %s128
    %p132 = pneg %p126
    %p133 = scmp.eq.s32.totalorder %s12, 39
    %p134 = por %p132, %p133
    %p135 = scmp.ne.s32.totalorder %s127, %s130
    %p136 = scmp.eq.s32.totalorder %s12, 0
    %p137 = por %p135, %p136
    %p138 = scmp.ne.s32.totalorder %s127, %s130
    %p139 = scmp.eq.s32.totalorder %s17, 39
    %p140 = por %p138, %p139
    %p141 = scmp.ne.s32.totalorder %s130, %s131
    %p142 = scmp.eq.s32.totalorder %s17, 0
    %p143 = por %p141, %p142
    %p144 = scmp.ne.s32.totalorder %s130, %s131
    %p145 = scmp.eq.s32.totalorder %s18, 39
    %p146 = por %p144, %p145
    %p148 = scmp.ne.s32.totalorder %s131, %s147
    %p149 = scmp.eq.s32.totalorder %s18, 0
    %p150 = por %p148, %p149
    %s151 = ssub.s32 %s19, %s38
    %s152 = ssub.s32 %s21, %s30
    %s153 = sor.u32 %s151, %s152
    %s154 = ssub.s32 %s20, %s34
    %s155 = sor.u32 %s153, %s154
    %p156 = scmp.eq.s32.totalorder %s155, 0
    %s158 = sadd.s32 %s157, 1
    %s159 = scalar_select %p156, %s157, %s158
    %p162 = pneg %p156
    %p163 = scmp.eq.s32.totalorder %s12, 39
    %p164 = por %p162, %p163
    %p165 = scmp.ne.s32.totalorder %s157, %s160
    %p166 = scmp.eq.s32.totalorder %s12, 0
    %p167 = por %p165, %p166
    %p168 = scmp.ne.s32.totalorder %s157, %s160
    %p169 = scmp.eq.s32.totalorder %s17, 39
    %p170 = por %p168, %p169
    %p171 = scmp.ne.s32.totalorder %s160, %s161
    %p172 = scmp.eq.s32.totalorder %s17, 0
    %p173 = por %p171, %p172
    %p174 = scmp.ne.s32.totalorder %s160, %s161
    %p175 = scmp.eq.s32.totalorder %s18, 39
    %p176 = por %p174, %p175
    %p178 = scmp.ne.s32.totalorder %s161, %s177
    %p179 = scmp.eq.s32.totalorder %s18, 0
    %p180 = por %p178, %p179
    %s181 = ssub.s32 %s19, %s38
    %s182 = ssub.s32 %s21, %s30
    %s183 = sor.u32 %s181, %s182
    %s184 = ssub.s32 %s20, %s34
    %s185 = sor.u32 %s183, %s184
    %p186 = scmp.eq.s32.totalorder %s185, 0
    %s188 = sadd.s32 %s187, 1
    %s189 = scalar_select %p186, %s187, %s188
    %p192 = pneg %p186
    %p193 = scmp.eq.s32.totalorder %s12, 39
    %p194 = por %p192, %p193
    %p195 = scmp.ne.s32.totalorder %s187, %s190
    %p196 = scmp.eq.s32.totalorder %s12, 0
    %p197 = por %p195, %p196
    %p198 = scmp.ne.s32.totalorder %s187, %s190
    %p199 = scmp.eq.s32.totalorder %s17, 39
    %p200 = por %p198, %p199
    %p201 = scmp.ne.s32.totalorder %s190, %s191
    %p202 = scmp.eq.s32.totalorder %s17, 0
    %p203 = por %p201, %p202
    %p204 = scmp.ne.s32.totalorder %s190, %s191
    %p205 = scmp.eq.s32.totalorder %s18, 39
    %p206 = por %p204, %p205
    %p208 = scmp.ne.s32.totalorder %s191, %s207
    %p209 = scmp.eq.s32.totalorder %s18, 0
    %p210 = por %p208, %p209
    %p211 = scmp.le.s32.totalorder 1, %s12
    %p212 = scmp.lt.s32.totalorder %s12, 41
    %p213 = pnand %p211, %p212
    %p214 = pneg %p213
    // Predicated region
    $region9: #{_lambda_.2} parent=5 // pred_check
      _
    $region10: #{_lambda_.2} parent=5 // pred_check_branch
      %216 = sbr.rel (%p213) target = $region12
    $region11: #{_lambda_.2} parent=5 // pred_region
      %s217 = ssub.s32 %s12, 1
    $region12: #{_lambda_.2} parent=5 // pred_fallthru
      _
    %p218 = scmp.lt.s32.totalorder %s12, 40
    // Predicated region
    $region13: #{_lambda_.2} parent=5 // pred_check
      %p219 = pneg %p218
    $region14: #{_lambda_.2} parent=5 // pred_check_branch
      %221 = sbr.rel (%p219) target = $region16
    $region15: #{_lambda_.2} parent=5 // pred_region
      // Predicated region
      $region17: #{_lambda_.2} parent=15 // pred_check
        %p222 = pneg %p53
      $region18: #{_lambda_.2} parent=15 // pred_check_branch
        %224 = sbr.rel (%p222) target = $region20
      $region19: #{_lambda_.2} parent=15 // pred_region
        %s225 = smul.u32 8, %s20
        %p226 = scmp.lt.s32.totalorder %s21, 4
        %s227 = scalar_select %p226, %s21, 4
        %p228 = scmp.lt.s32.totalorder %s225, 31
        %s229 = scalar_select %p228, %s225, 31
        %s230 = smul.addr %s229, 2
        %s231 = smul.addr %s227, 64
        %s232 = sadd.s32 %s230, %s231
        %s233 = smul.addr %s232, 8
        %s234 = scalar_lea.vmem %s0, %s233
        %s235 = smul.u32 8, %s20
      $region20: #{_lambda_.2} parent=15 // pred_fallthru
        _
      // Predicated region
      $region21: #{_lambda_.2} parent=15 // pred_check
        %p236 = pneg %p81
      $region22: #{_lambda_.2} parent=15 // pred_check_branch
        %238 = sbr.rel (%p236) target = $region24
      $region23: #{_lambda_.2} parent=15 // pred_region
        %s239 = smul.u32 8, %s20
        %p240 = scmp.lt.s32.totalorder %s21, 4
        %s241 = scalar_select %p240, %s21, 4
        %p242 = scmp.lt.s32.totalorder %s239, 31
        %s243 = scalar_select %p242, %s239, 31
        %s244 = smul.addr %s243, 2
        %s245 = smul.addr %s241, 64
        %s246 = sadd.s32 %s244, %s245
        %s247 = smul.addr %s246, 8
        %s248 = scalar_lea.vmem %s1, %s247
        %s249 = smul.u32 8, %s20
      $region24: #{_lambda_.2} parent=15 // pred_fallthru
        _
      // Predicated region
      $region25: #{_lambda_.2} parent=15 // pred_check
        %p250 = pneg %p109
      $region26: #{_lambda_.2} parent=15 // pred_check_branch
        %252 = sbr.rel (%p250) target = $region28
      $region27: #{_lambda_.2} parent=15 // pred_region
        %s253 = smul.u32 8, %s20
        %p254 = scmp.lt.s32.totalorder %s19, 1
        %s255 = scalar_select %p254, %s19, 1
        %p256 = scmp.lt.s32.totalorder %s253, 31
        %s257 = scalar_select %p256, %s253, 31
        %s258 = smul.addr %s257, 2
        %s259 = smul.addr %s255, 64
        %s260 = sadd.s32 %s258, %s259
        %s261 = smul.addr %s260, 8
        %s262 = scalar_lea.vmem %s2, %s261
        %s263 = smul.u32 8, %s20
      $region28: #{_lambda_.2} parent=15 // pred_fallthru
        _
      // Predicated region
      $region29: #{_lambda_.2} parent=15 // pred_check
        %p264 = pneg %p137
      $region30: #{_lambda_.2} parent=15 // pred_check_branch
        %266 = sbr.rel (%p264) target = $region32
      $region31: #{_lambda_.2} parent=15 // pred_region
        %s267 = smul.u32 8, %s20
        %p268 = scmp.lt.s32.totalorder %s19, 1
        %s269 = scalar_select %p268, %s19, 1
        %p270 = scmp.lt.s32.totalorder %s267, 31
        %s271 = scalar_select %p270, %s267, 31
        %s272 = smul.addr %s271, 2
        %s273 = smul.addr %s269, 64
        %s274 = sadd.s32 %s272, %s273
        %s275 = smul.addr %s274, 8
        %s276 = scalar_lea.vmem %s3, %s275
        %s277 = smul.u32 8, %s20
      $region32: #{_lambda_.2} parent=15 // pred_fallthru
        _
    $region16: #{_lambda_.2} parent=5 // pred_fallthru
      _
    %p278 = scmp.le.s32.totalorder 1, %s12
    %p279 = scmp.lt.s32.totalorder %s12, 41
    %p280 = pnand %p278, %p279
    %p281 = pneg %p280
    // Predicated region
    $region33: #{_lambda_.2} parent=5 // pred_check
      _
    $region34: #{_lambda_.2} parent=5 // pred_check_branch
      %283 = sbr.rel (%p280) target = $region36
    $region35: #{_lambda_.2} parent=5 // pred_region
      %s284 = ssub.s32 %s12, 1
      %s285 = smul.u32 8, %s23
      %p286 = scmp.lt.s32.totalorder %s24, 4
      %s287 = scalar_select %p286, %s24, 4
      %p288 = scmp.lt.s32.totalorder %s285, 31
      %s289 = scalar_select %p288, %s285, 31
      %s290 = smul.addr %s289, 2
      %s291 = smul.addr %s287, 64
      %s292 = sadd.s32 %s290, %s291
      %s293 = smul.addr %s292, 8
      %s294 = scalar_lea.vmem %s0, %s293
      %p295 = pneg %p59
      %p296 = pneg %p56
      %s297 = smul.u32 8, %s23
      %p298 = scmp.lt.s32.totalorder %s24, 4
      %s299 = scalar_select %p298, %s24, 4
      %p300 = scmp.lt.s32.totalorder %s297, 31
      %s301 = scalar_select %p300, %s297, 31
      %s302 = smul.addr %s301, 2
      %s303 = smul.addr %s299, 64
      %s304 = sadd.s32 %s302, %s303
      %s305 = smul.addr %s304, 8
      %s306 = scalar_lea.vmem %s1, %s305
      %p307 = pneg %p87
      %p308 = pneg %p84
      %s309 = smul.u32 8, %s23
      %p310 = scmp.lt.s32.totalorder %s22, 1
      %s311 = scalar_select %p310, %s22, 1
      %p312 = scmp.lt.s32.totalorder %s309, 31
      %s313 = scalar_select %p312, %s309, 31
      %s314 = smul.addr %s313, 2
      %s315 = smul.addr %s311, 64
      %s316 = sadd.s32 %s314, %s315
      %s317 = smul.addr %s316, 8
      %s318 = scalar_lea.vmem %s2, %s317
      %p319 = pneg %p115
      %p320 = pneg %p112
      %s321 = smul.u32 8, %s23
      %p322 = scmp.lt.s32.totalorder %s22, 1
      %s323 = scalar_select %p322, %s22, 1
      %p324 = scmp.lt.s32.totalorder %s321, 31
      %s325 = scalar_select %p324, %s321, 31
      %s326 = smul.addr %s325, 2
      %s327 = smul.addr %s323, 64
      %s328 = sadd.s32 %s326, %s327
      %s329 = smul.addr %s328, 8
      %s330 = scalar_lea.vmem %s3, %s329
      %p331 = pneg %p143
      %p332 = pneg %p140
      %p333 = pneg %p173
      %p334 = pneg %p170
      %s335 = smul.u32 8, %s23
      %p336 = scmp.lt.s32.totalorder %s22, 1
      %s337 = scalar_select %p336, %s22, 1
      %p338 = scmp.lt.s32.totalorder %s24, 4
      %s339 = scalar_select %p338, %s24, 4
      %p340 = scmp.lt.s32.totalorder %s335, 31
      %s341 = scalar_select %p340, %s335, 31
      %s342 = smul.addr %s341, 2
      %s343 = smul.addr %s339, 64
      %s344 = sadd.s32 %s342, %s343
      %s345 = smul.addr %s337, 320
      %s346 = sadd.s32 %s344, %s345
      %s347 = smul.addr %s346, 8
      %s348 = scalar_lea.vmem %s4, %s347
      %p349 = pneg %p203
      %p350 = pneg %p200
      %s351 = smul.u32 8, %s23
      %p352 = scmp.lt.s32.totalorder %s22, 1
      %s353 = scalar_select %p352, %s22, 1
      %p354 = scmp.lt.s32.totalorder %s24, 4
      %s355 = scalar_select %p354, %s24, 4
      %p356 = scmp.lt.s32.totalorder %s351, 31
      %s357 = scalar_select %p356, %s351, 31
      %s358 = smul.addr %s357, 2
      %s359 = smul.addr %s355, 64
      %s360 = sadd.s32 %s358, %s359
      %s361 = smul.addr %s353, 320
      %s362 = sadd.s32 %s360, %s361
      %s363 = smul.addr %s362, 8
      %s364 = scalar_lea.vmem %s5, %s363
      %s365 = smul.u32 8, %s23
      %p366 = scmp.lt.s32.totalorder %s24, 4
      %s367 = scalar_select %p366, %s24, 4
      %p368 = scmp.lt.s32.totalorder %s365, 31
      %s369 = scalar_select %p368, %s365, 31
      %s370 = smul.addr %s369, 2
      %s371 = smul.addr %s367, 64
      %s372 = sadd.s32 %s370, %s371
      %s373 = smul.addr %s372, 8
      %s374 = scalar_lea.vmem %s0, %s373
      %s375 = smul.u32 8, %s23
      %s376 = smul.u32 8, %s23
      %p377 = scmp.lt.s32.totalorder %s24, 4
      %s378 = scalar_select %p377, %s24, 4
      %p379 = scmp.lt.s32.totalorder %s376, 31
      %s380 = scalar_select %p379, %s376, 31
      %s381 = smul.addr %s380, 2
      %s382 = smul.addr %s378, 64
      %s383 = sadd.s32 %s381, %s382
      %s384 = smul.addr %s383, 8
      %s385 = scalar_lea.vmem %s1, %s384
      %s386 = smul.u32 8, %s23
      %s387 = smul.u32 8, %s23
      %p388 = scmp.lt.s32.totalorder %s22, 1
      %s389 = scalar_select %p388, %s22, 1
      %p390 = scmp.lt.s32.totalorder %s387, 31
      %s391 = scalar_select %p390, %s387, 31
      %s392 = smul.addr %s391, 2
      %s393 = smul.addr %s389, 64
      %s394 = sadd.s32 %s392, %s393
      %s395 = smul.addr %s394, 8
      %s396 = scalar_lea.vmem %s2, %s395
      %s397 = smul.u32 8, %s23
      %s398 = smul.u32 8, %s23
      %p399 = scmp.lt.s32.totalorder %s22, 1
      %s400 = scalar_select %p399, %s22, 1
      %p401 = scmp.lt.s32.totalorder %s398, 31
      %s402 = scalar_select %p401, %s398, 31
      %s403 = smul.addr %s402, 2
      %s404 = smul.addr %s400, 64
      %s405 = sadd.s32 %s403, %s404
      %s406 = smul.addr %s405, 8
      %s407 = scalar_lea.vmem %s3, %s406
      %s408 = smul.u32 8, %s23
      %s409 = smul.u32 8, %s23
      %p410 = scmp.lt.s32.totalorder %s22, 1
      %s411 = scalar_select %p410, %s22, 1
      %p412 = scmp.lt.s32.totalorder %s24, 4
      %s413 = scalar_select %p412, %s24, 4
      %p414 = scmp.lt.s32.totalorder %s409, 31
      %s415 = scalar_select %p414, %s409, 31
      %s416 = smul.addr %s415, 2
      %s417 = smul.addr %s413, 64
      %s418 = sadd.s32 %s416, %s417
      %s419 = smul.addr %s411, 320
      %s420 = sadd.s32 %s418, %s419
      %s421 = smul.addr %s420, 8
      %s422 = scalar_lea.vmem %s4, %s421
      %s423 = smul.u32 8, %s23
      %s424 = smul.u32 8, %s23
      %p425 = scmp.lt.s32.totalorder %s22, 1
      %s426 = scalar_select %p425, %s22, 1
      %p427 = scmp.lt.s32.totalorder %s24, 4
      %s428 = scalar_select %p427, %s24, 4
      %p429 = scmp.lt.s32.totalorder %s424, 31
      %s430 = scalar_select %p429, %s424, 31
      %s431 = smul.addr %s430, 2
      %s432 = smul.addr %s428, 64
      %s433 = sadd.s32 %s431, %s432
      %s434 = smul.addr %s426, 320
      %s435 = sadd.s32 %s433, %s434
      %s436 = smul.addr %s435, 8
      %s437 = scalar_lea.vmem %s5, %s436
      %s438 = smul.u32 8, %s23
      %v439 = vld [vmem:[%s374] sm:$0xff]
      %v440 = vld [vmem:[%s374 + $0x8] sm:$0xff]
      %v441 = vld [vmem:[%s374 + $0x10] sm:$0xff]
      %v442 = vld [vmem:[%s374 + $0x18] sm:$0xff]
      %v443 = vld [vmem:[%s374 + $0x20] sm:$0xff]
      %v444 = vld [vmem:[%s374 + $0x28] sm:$0xff]
      %v445 = vld [vmem:[%s374 + $0x30] sm:$0xff]
      %v446 = vld [vmem:[%s374 + $0x38] sm:$0xff]
      %v447 = vld [vmem:[%s374 + $0x40] sm:$0xff]
      %v448 = vld [vmem:[%s374 + $0x48] sm:$0xff]
      %v449 = vld [vmem:[%s374 + $0x50] sm:$0xff]
      %v450 = vld [vmem:[%s374 + $0x58] sm:$0xff]
      %v451 = vld [vmem:[%s374 + $0x60] sm:$0xff]
      %v452 = vld [vmem:[%s374 + $0x68] sm:$0xff]
      %v453 = vld [vmem:[%s374 + $0x70] sm:$0xff]
      %v454 = vld [vmem:[%s374 + $0x78] sm:$0xff]
      %v455 = vld [vmem:[%s385] sm:$0xff]
      %v456 = vld [vmem:[%s385 + $0x8] sm:$0xff]
      %v457 = vld [vmem:[%s385 + $0x10] sm:$0xff]
      %v458 = vld [vmem:[%s385 + $0x18] sm:$0xff]
      %v459 = vld [vmem:[%s385 + $0x20] sm:$0xff]
      %v460 = vld [vmem:[%s385 + $0x28] sm:$0xff]
      %v461 = vld [vmem:[%s385 + $0x30] sm:$0xff]
      %v462 = vld [vmem:[%s385 + $0x38] sm:$0xff]
      %v463 = vld [vmem:[%s385 + $0x40] sm:$0xff]
      %v464 = vld [vmem:[%s385 + $0x48] sm:$0xff]
      %v465 = vld [vmem:[%s385 + $0x50] sm:$0xff]
      %v466 = vld [vmem:[%s385 + $0x58] sm:$0xff]
      %v467 = vld [vmem:[%s385 + $0x60] sm:$0xff]
      %v468 = vld [vmem:[%s385 + $0x68] sm:$0xff]
      %v469 = vld [vmem:[%s385 + $0x70] sm:$0xff]
      %v470 = vld [vmem:[%s385 + $0x78] sm:$0xff]
      %v471 = vld [vmem:[%s396] sm:$0xff]
      %v472 = vld [vmem:[%s396 + $0x8] sm:$0xff]
      %v473 = vld [vmem:[%s396 + $0x10] sm:$0xff]
      %v474 = vld [vmem:[%s396 + $0x18] sm:$0xff]
      %v475 = vld [vmem:[%s396 + $0x20] sm:$0xff]
      %v476 = vld [vmem:[%s396 + $0x28] sm:$0xff]
      %v477 = vld [vmem:[%s396 + $0x30] sm:$0xff]
      %v478 = vld [vmem:[%s396 + $0x38] sm:$0xff]
      %v479 = vld [vmem:[%s396 + $0x40] sm:$0xff]
      %v480 = vld [vmem:[%s396 + $0x48] sm:$0xff]
      %v481 = vld [vmem:[%s396 + $0x50] sm:$0xff]
      %v482 = vld [vmem:[%s396 + $0x58] sm:$0xff]
      %v483 = vld [vmem:[%s396 + $0x60] sm:$0xff]
      %v484 = vld [vmem:[%s396 + $0x68] sm:$0xff]
      %v485 = vld [vmem:[%s396 + $0x70] sm:$0xff]
      %v486 = vld [vmem:[%s396 + $0x78] sm:$0xff]
      %v487 = vld [vmem:[%s407] sm:$0xff]
      %v488 = vld [vmem:[%s407 + $0x8] sm:$0xff]
      %v489 = vld [vmem:[%s407 + $0x10] sm:$0xff]
      %v490 = vld [vmem:[%s407 + $0x18] sm:$0xff]
      %v491 = vld [vmem:[%s407 + $0x20] sm:$0xff]
      %v492 = vld [vmem:[%s407 + $0x28] sm:$0xff]
      %v493 = vld [vmem:[%s407 + $0x30] sm:$0xff]
      %v494 = vld [vmem:[%s407 + $0x38] sm:$0xff]
      %v495 = vld [vmem:[%s407 + $0x40] sm:$0xff]
      %v496 = vld [vmem:[%s407 + $0x48] sm:$0xff]
      %v497 = vld [vmem:[%s407 + $0x50] sm:$0xff]
      %v498 = vld [vmem:[%s407 + $0x58] sm:$0xff]
      %v499 = vld [vmem:[%s407 + $0x60] sm:$0xff]
      %v500 = vld [vmem:[%s407 + $0x68] sm:$0xff]
      %v501 = vld [vmem:[%s407 + $0x70] sm:$0xff]
      %v502 = vld [vmem:[%s407 + $0x78] sm:$0xff]
      %v503 = vmul.f32 %v439, %v471
      %v504 = vmul.f32 %v440, %v472
      %v505 = vmul.f32 %v441, %v473
      %v506 = vmul.f32 %v442, %v474
      %v507 = vmul.f32 %v443, %v475
      %v508 = vmul.f32 %v444, %v476
      %v509 = vmul.f32 %v445, %v477
      %v510 = vmul.f32 %v446, %v478
      %v511 = vmul.f32 %v447, %v479
      %v512 = vmul.f32 %v448, %v480
      %v513 = vmul.f32 %v449, %v481
      %v514 = vmul.f32 %v450, %v482
      %v515 = vmul.f32 %v451, %v483
      %v516 = vmul.f32 %v452, %v484
      %v517 = vmul.f32 %v453, %v485
      %v518 = vmul.f32 %v454, %v486
      %v519 = vmul.f32 %v455, %v487
      %v520 = vmul.f32 %v456, %v488
      %v521 = vmul.f32 %v457, %v489
      %v522 = vmul.f32 %v458, %v490
      %v523 = vmul.f32 %v459, %v491
      %v524 = vmul.f32 %v460, %v492
      %v525 = vmul.f32 %v461, %v493
      %v526 = vmul.f32 %v462, %v494
      %v527 = vmul.f32 %v463, %v495
      %v528 = vmul.f32 %v464, %v496
      %v529 = vmul.f32 %v465, %v497
      %v530 = vmul.f32 %v466, %v498
      %v531 = vmul.f32 %v467, %v499
      %v532 = vmul.f32 %v468, %v500
      %v533 = vmul.f32 %v469, %v501
      %v534 = vmul.f32 %v470, %v502
      %v535 = vsub.f32 %v503, %v519
      %v536 = vsub.f32 %v504, %v520
      %v537 = vsub.f32 %v505, %v521
      %v538 = vsub.f32 %v506, %v522
      %v539 = vsub.f32 %v507, %v523
      %v540 = vsub.f32 %v508, %v524
      %v541 = vsub.f32 %v509, %v525
      %v542 = vsub.f32 %v510, %v526
      %v543 = vsub.f32 %v511, %v527
      %v544 = vsub.f32 %v512, %v528
      %v545 = vsub.f32 %v513, %v529
      %v546 = vsub.f32 %v514, %v530
      %v547 = vsub.f32 %v515, %v531
      %v548 = vsub.f32 %v516, %v532
      %v549 = vsub.f32 %v517, %v533
      %v550 = vsub.f32 %v518, %v534
      %551 = vst [vmem:[%s422] sm:$0xff] %v535
      %552 = vst [vmem:[%s422 + $0x8] sm:$0xff] %v536
      %553 = vst [vmem:[%s422 + $0x10] sm:$0xff] %v537
      %554 = vst [vmem:[%s422 + $0x18] sm:$0xff] %v538
      %555 = vst [vmem:[%s422 + $0x20] sm:$0xff] %v539
      %556 = vst [vmem:[%s422 + $0x28] sm:$0xff] %v540
      %557 = vst [vmem:[%s422 + $0x30] sm:$0xff] %v541
      %558 = vst [vmem:[%s422 + $0x38] sm:$0xff] %v542
      %559 = vst [vmem:[%s422 + $0x40] sm:$0xff] %v543
      %560 = vst [vmem:[%s422 + $0x48] sm:$0xff] %v544
      %561 = vst [vmem:[%s422 + $0x50] sm:$0xff] %v545
      %562 = vst [vmem:[%s422 + $0x58] sm:$0xff] %v546
      %563 = vst [vmem:[%s422 + $0x60] sm:$0xff] %v547
      %564 = vst [vmem:[%s422 + $0x68] sm:$0xff] %v548
      %565 = vst [vmem:[%s422 + $0x70] sm:$0xff] %v549
      %566 = vst [vmem:[%s422 + $0x78] sm:$0xff] %v550
      %v567 = vmul.f32 %v439, %v487
      %v568 = vmul.f32 %v440, %v488
      %v569 = vmul.f32 %v441, %v489
      %v570 = vmul.f32 %v442, %v490
      %v571 = vmul.f32 %v443, %v491
      %v572 = vmul.f32 %v444, %v492
      %v573 = vmul.f32 %v445, %v493
      %v574 = vmul.f32 %v446, %v494
      %v575 = vmul.f32 %v447, %v495
      %v576 = vmul.f32 %v448, %v496
      %v577 = vmul.f32 %v449, %v497
      %v578 = vmul.f32 %v450, %v498
      %v579 = vmul.f32 %v451, %v499
      %v580 = vmul.f32 %v452, %v500
      %v581 = vmul.f32 %v453, %v501
      %v582 = vmul.f32 %v454, %v502
      %v583 = vmul.f32 %v455, %v471
      %v584 = vmul.f32 %v456, %v472
      %v585 = vmul.f32 %v457, %v473
      %v586 = vmul.f32 %v458, %v474
      %v587 = vmul.f32 %v459, %v475
      %v588 = vmul.f32 %v460, %v476
      %v589 = vmul.f32 %v461, %v477
      %v590 = vmul.f32 %v462, %v478
      %v591 = vmul.f32 %v463, %v479
      %v592 = vmul.f32 %v464, %v480
      %v593 = vmul.f32 %v465, %v481
      %v594 = vmul.f32 %v466, %v482
      %v595 = vmul.f32 %v467, %v483
      %v596 = vmul.f32 %v468, %v484
      %v597 = vmul.f32 %v469, %v485
      %v598 = vmul.f32 %v470, %v486
      %v599 = vadd.f32 %v567, %v583
      %v600 = vadd.f32 %v568, %v584
      %v601 = vadd.f32 %v569, %v585
      %v602 = vadd.f32 %v570, %v586
      %v603 = vadd.f32 %v571, %v587
      %v604 = vadd.f32 %v572, %v588
      %v605 = vadd.f32 %v573, %v589
      %v606 = vadd.f32 %v574, %v590
      %v607 = vadd.f32 %v575, %v591
      %v608 = vadd.f32 %v576, %v592
      %v609 = vadd.f32 %v577, %v593
      %v610 = vadd.f32 %v578, %v594
      %v611 = vadd.f32 %v579, %v595
      %v612 = vadd.f32 %v580, %v596
      %v613 = vadd.f32 %v581, %v597
      %v614 = vadd.f32 %v582, %v598
      %615 = vst [vmem:[%s437] sm:$0xff] %v599
      %616 = vst [vmem:[%s437 + $0x8] sm:$0xff] %v600
      %617 = vst [vmem:[%s437 + $0x10] sm:$0xff] %v601
      %618 = vst [vmem:[%s437 + $0x18] sm:$0xff] %v602
      %619 = vst [vmem:[%s437 + $0x20] sm:$0xff] %v603
      %620 = vst [vmem:[%s437 + $0x28] sm:$0xff] %v604
      %621 = vst [vmem:[%s437 + $0x30] sm:$0xff] %v605
      %622 = vst [vmem:[%s437 + $0x38] sm:$0xff] %v606
      %623 = vst [vmem:[%s437 + $0x40] sm:$0xff] %v607
      %624 = vst [vmem:[%s437 + $0x48] sm:$0xff] %v608
      %625 = vst [vmem:[%s437 + $0x50] sm:$0xff] %v609
      %626 = vst [vmem:[%s437 + $0x58] sm:$0xff] %v610
      %627 = vst [vmem:[%s437 + $0x60] sm:$0xff] %v611
      %628 = vst [vmem:[%s437 + $0x68] sm:$0xff] %v612
      %629 = vst [vmem:[%s437 + $0x70] sm:$0xff] %v613
      %630 = vst [vmem:[%s437 + $0x78] sm:$0xff] %v614
      %s631 = smul.u32 8, %s23
      %p632 = scmp.lt.s32.totalorder %s22, 1
      %s633 = scalar_select %p632, %s22, 1
      %p634 = scmp.lt.s32.totalorder %s24, 4
      %s635 = scalar_select %p634, %s24, 4
      %p636 = scmp.lt.s32.totalorder %s631, 31
      %s637 = scalar_select %p636, %s631, 31
      %s638 = smul.addr %s637, 2
      %s639 = smul.addr %s635, 64
      %s640 = sadd.s32 %s638, %s639
      %s641 = smul.addr %s633, 320
      %s642 = sadd.s32 %s640, %s641
      %s643 = smul.addr %s642, 8
      %s644 = scalar_lea.vmem %s4, %s643
      %s645 = smul.u32 8, %s23
      %p646 = scmp.lt.s32.totalorder %s22, 1
      %s647 = scalar_select %p646, %s22, 1
      %p648 = scmp.lt.s32.totalorder %s24, 4
      %s649 = scalar_select %p648, %s24, 4
      %p650 = scmp.lt.s32.totalorder %s645, 31
      %s651 = scalar_select %p650, %s645, 31
      %s652 = smul.addr %s651, 2
      %s653 = smul.addr %s649, 64
      %s654 = sadd.s32 %s652, %s653
      %s655 = smul.addr %s647, 320
      %s656 = sadd.s32 %s654, %s655
      %s657 = smul.addr %s656, 8
      %s658 = scalar_lea.vmem %s5, %s657
      // Predicated region
      $region37: #{_lambda_.2} parent=35 // pred_check
        %p659 = pneg %p170
      $region38: #{_lambda_.2} parent=35 // pred_check_branch
        %661 = sbr.rel (%p659) target = $region40
      $region39: #{_lambda_.2} parent=35 // pred_region
        %s662 = smul.u32 8, %s23
      $region40: #{_lambda_.2} parent=35 // pred_fallthru
        _
      // Predicated region
      $region41: #{_lambda_.2} parent=35 // pred_check
        %p663 = pneg %p200
      $region42: #{_lambda_.2} parent=35 // pred_check_branch
        %665 = sbr.rel (%p663) target = $region44
      $region43: #{_lambda_.2} parent=35 // pred_region
        %s666 = smul.u32 8, %s23
      $region44: #{_lambda_.2} parent=35 // pred_fallthru
        _
    $region36: #{_lambda_.2} parent=5 // pred_fallthru
      _
    %p667 = scmp.le.s32.totalorder 2, %s12
    // Predicated region
    $region45: #{_lambda_.2} parent=5 // pred_check
      %p668 = pneg %p667
    $region46: #{_lambda_.2} parent=5 // pred_check_branch
      %670 = sbr.rel (%p668) target = $region48
    $region47: #{_lambda_.2} parent=5 // pred_region
      %s671 = ssub.s32 %s12, 2
      // Predicated region
      $region49: #{_lambda_.2} parent=47 // pred_check
        %p672 = pneg %p176
      $region50: #{_lambda_.2} parent=47 // pred_check_branch
        %674 = sbr.rel (%p672) target = $region52
      $region51: #{_lambda_.2} parent=47 // pred_region
        %s675 = smul.u32 8, %s26
        %p676 = scmp.lt.s32.totalorder %s25, 1
        %s677 = scalar_select %p676, %s25, 1
        %p678 = scmp.lt.s32.totalorder %s27, 4
        %s679 = scalar_select %p678, %s27, 4
        %p680 = scmp.lt.s32.totalorder %s675, 31
        %s681 = scalar_select %p680, %s675, 31
        %s682 = smul.addr %s681, 2
        %s683 = smul.addr %s679, 64
        %s684 = sadd.s32 %s682, %s683
        %s685 = smul.addr %s677, 320
        %s686 = sadd.s32 %s684, %s685
        %s687 = smul.addr %s686, 8
        %s688 = scalar_lea.vmem %s4, %s687
      $region52: #{_lambda_.2} parent=47 // pred_fallthru
        _
      // Predicated region
      $region53: #{_lambda_.2} parent=47 // pred_check
        %p689 = pneg %p206
      $region54: #{_lambda_.2} parent=47 // pred_check_branch
        %691 = sbr.rel (%p689) target = $region56
      $region55: #{_lambda_.2} parent=47 // pred_region
        %s692 = smul.u32 8, %s26
        %p693 = scmp.lt.s32.totalorder %s25, 1
        %s694 = scalar_select %p693, %s25, 1
        %p695 = scmp.lt.s32.totalorder %s27, 4
        %s696 = scalar_select %p695, %s27, 4
        %p697 = scmp.lt.s32.totalorder %s692, 31
        %s698 = scalar_select %p697, %s692, 31
        %s699 = smul.addr %s698, 2
        %s700 = smul.addr %s696, 64
        %s701 = sadd.s32 %s699, %s700
        %s702 = smul.addr %s694, 320
        %s703 = sadd.s32 %s701, %s702
        %s704 = smul.addr %s703, 8
        %s705 = scalar_lea.vmem %s5, %s704
      $region56: #{_lambda_.2} parent=47 // pred_fallthru
        _
    $region48: #{_lambda_.2} parent=5 // pred_fallthru
      _
  $region6: #{_lambda_.2} parent=0 // loop_footer
    %s16 = sadd.s32 1, %s12
  $region7: #{_lambda_.2} parent=0 // loop_footer_branch
    %11 = sbr.rel target = $region3
  $region8: #{_lambda_.2} parent=0 // loop_exit
    _

// kernel: reverse.1
$region0: #{reverse.1}
  %s0 = inlined_call_operand.vmem [shape: f32[2,5,256,127], index: 0, kind: input, shape index: {}]
  %s1 = inlined_call_operand.vmem [shape: f32[2,5,256,127], index: 1, kind: output, shape index: {}]
  $region1: #{reverse.1} parent=0
    #allocation0 [shape = 'u8[139264]{0}', space=vmem, size = 0x22000, scoped, tag = 'operand span for operand 0']
    #allocation1 [shape = 'u8[131072]{0}', space=vmem, size = 0x20000, scoped, tag = 'operand span for operand 1']
    loop: start=0, step=1, limit=22
    $region2: #{reverse.1} parent=1 // loop_pre_header
      _
    $region3: #{reverse.1} parent=1 // loop_header
      %s3 = sphi 0, %s7
      %p4 = scmp.ge.s32.totalorder %s3, 22
      %s10 = sphi 0, %s36
      %s11 = sphi 0, %s32
      %s12 = sphi 0, %s28
      %s13 = sphi 0, %s24
      %s14 = sphi 0, %s10
      %s15 = sphi 0, %s11
      %s16 = sphi 0, %s12
      %s17 = sphi 0, %s13
      %s18 = sphi 0, %s14
      %s19 = sphi 0, %s15
      %s20 = sphi 0, %s16
      %s21 = sphi 0, %s17
    $region4: #{reverse.1} parent=1 // loop_header_branch
      %6 = sbr.rel (%p4) target = $region8
    $region5: #{reverse.1} parent=1 // loop_body
      %s8 = ssub.s32 %s3, 1
      %s9 = ssub.s32 %s3, 2
      %s22 = sadd.s32 1, %s13
      %p23 = scmp.ge.s32.totalorder %s22, 2
      %s24 = scalar_select %p23, 0, %s22
      %s25 = sadd.s32 1, %s12
      %s26 = scalar_select %p23, %s25, %s12
      %p27 = scmp.ge.s32.totalorder %s26, 1
      %s28 = scalar_select %p27, 0, %s26
      %s29 = sadd.s32 1, %s11
      %s30 = scalar_select %p27, %s29, %s11
      %p31 = scmp.ge.s32.totalorder %s30, 5
      %s32 = scalar_select %p31, 0, %s30
      %s33 = sadd.s32 1, %s10
      %s34 = scalar_select %p31, %s33, %s10
      %p35 = scmp.ge.s32.totalorder %s34, 2
      %s36 = scalar_select %p35, 0, %s34
      %p37 = scmp.le.s32.totalorder 1, %s3
      %p38 = scmp.lt.s32.totalorder %s3, 21
      %p39 = pnand %p37, %p38
      %p40 = pneg %p39
      // Predicated region
      $region9: #{reverse.1} parent=5 // pred_check
        _
      $region10: #{reverse.1} parent=5 // pred_check_branch
        %42 = sbr.rel (%p39) target = $region12
      $region11: #{reverse.1} parent=5 // pred_region
        %s43 = ssub.s32 %s3, 1
      $region12: #{reverse.1} parent=5 // pred_fallthru
        _
      %p44 = scmp.lt.s32.totalorder %s3, 20
      // Predicated region
      $region13: #{reverse.1} parent=5 // pred_check
        %p45 = pneg %p44
      $region14: #{reverse.1} parent=5 // pred_check_branch
        %47 = sbr.rel (%p45) target = $region16
      $region15: #{reverse.1} parent=5 // pred_region
        %s48 = sand.u32 %s3, 1
        %s49 = sand.u32 %s3, 1
        %s50 = smul.addr %s49, 136
        %s51 = scalar_lea.vmem [#allocation0], %s50
        %s52 = ssub.s32 0, %s12
        %s53 = smul.u32 16, %s52
        %s54 = ssub.s32 1, %s53
        %s55 = ssub.s32 17, %s54
        %s56 = smul.u32 128, %s55
        %p57 = scmp.ne.s32.totalorder 0, %s56
        %s58 = sadd.s32 %s53, %s54
        %s59 = ssub.s32 %s58, 1
        %s60 = smul.addr %s59, 2
        %s61 = sadd.s32 %s13, %s60
        %s62 = smul.addr %s11, 32
        %s63 = sadd.s32 %s61, %s62
        %s64 = smul.addr %s10, 160
        %s65 = sadd.s32 %s63, %s64
        %s66 = smul.addr %s65, 8
        %s67 = scalar_lea.vmem %s0, %s66
        %s68 = smul.addr %s54, 8
        %s69 = scalar_lea.vmem %s51, %s68 [#allocation0]
        %s70 = ssub.s32 17, %s54
        // Predicated region
        $region17: #{reverse.1} parent=15 // pred_check
          %p71 = pneg %p57
        $region18: #{reverse.1} parent=15 // pred_check_branch
          %73 = sbr.rel (%p71) target = $region20
        $region19: #{reverse.1} parent=15 // pred_region
          // Predicated region
          $region21: #{reverse.1} parent=19 // pred_check
            _
          $region22: #{reverse.1} parent=19 // pred_check_branch
            %75 = sbr.rel (0) target = $region24
          $region23: #{reverse.1} parent=19 // pred_region
            // Predicated region
            $region43: #{reverse.1} parent=23 // pred_check
              _
            $region44: #{reverse.1} parent=23 // pred_check_branch
              %154 = sbr.rel (0) target = $region46
            $region45: #{reverse.1} parent=23 // pred_region
              %s155 = sshrl.u32 %s70, 4
              // While loop
              $region47: #{reverse.1} parent=45 // loop_pre_header
                _
              $region48: #{reverse.1} parent=45 // loop_header
                %s157 = sphi 0, %s159
                %p158 = scmp.ge.s32.totalorder %s157, %s155
                %s162 = sphi 0, %s199
                %s163 = sphi %s67, %s202
                %s164 = sphi %s69, %s203
              $region49: #{reverse.1} parent=45 // loop_header_branch
                %161 = sbr.rel (%p158) target = $region53
              $region50: #{reverse.1} parent=45 // loop_body
                %v165 = vld [vmem:[%s163] sm:$0xff]
                %166 = vst [vmem:[%s164] sm:$0xff] %v165
                %v167 = vld [vmem:[%s163 + $0x10] sm:$0xff]
                %168 = vst [vmem:[%s164 + $0x8] sm:$0xff] %v167
                %v169 = vld [vmem:[%s163 + $0x20] sm:$0xff]
                %170 = vst [vmem:[%s164 + $0x10] sm:$0xff] %v169
                %v171 = vld [vmem:[%s163 + $0x30] sm:$0xff]
                %172 = vst [vmem:[%s164 + $0x18] sm:$0xff] %v171
                %v173 = vld [vmem:[%s163 + $0x40] sm:$0xff]
                %174 = vst [vmem:[%s164 + $0x20] sm:$0xff] %v173
                %v175 = vld [vmem:[%s163 + $0x50] sm:$0xff]
                %176 = vst [vmem:[%s164 + $0x28] sm:$0xff] %v175
                %v177 = vld [vmem:[%s163 + $0x60] sm:$0xff]
                %178 = vst [vmem:[%s164 + $0x30] sm:$0xff] %v177
                %v179 = vld [vmem:[%s163 + $0x70] sm:$0xff]
                %180 = vst [vmem:[%s164 + $0x38] sm:$0xff] %v179
                %v181 = vld [vmem:[%s163 + $0x80] sm:$0xff]
                %182 = vst [vmem:[%s164 + $0x40] sm:$0xff] %v181
                %v183 = vld [vmem:[%s163 + $0x90] sm:$0xff]
                %184 = vst [vmem:[%s164 + $0x48] sm:$0xff] %v183
                %v185 = vld [vmem:[%s163 + $0xa0] sm:$0xff]
                %186 = vst [vmem:[%s164 + $0x50] sm:$0xff] %v185
                %v187 = vld [vmem:[%s163 + $0xb0] sm:$0xff]
                %188 = vst [vmem:[%s164 + $0x58] sm:$0xff] %v187
                %v189 = vld [vmem:[%s163 + $0xc0] sm:$0xff]
                %190 = vst [vmem:[%s164 + $0x60] sm:$0xff] %v189
                %v191 = vld [vmem:[%s163 + $0xd0] sm:$0xff]
                %192 = vst [vmem:[%s164 + $0x68] sm:$0xff] %v191
                %v193 = vld [vmem:[%s163 + $0xe0] sm:$0xff]
                %194 = vst [vmem:[%s164 + $0x70] sm:$0xff] %v193
                %v195 = vld [vmem:[%s163 + $0xf0] sm:$0xff]
                %196 = vst [vmem:[%s164 + $0x78] sm:$0xff] %v195
                %s197 = sadd.s32 1, %s162
                %p198 = scmp.ge.s32.totalorder %s197, %s155
                %s199 = scalar_select %p198, 0, %s197
                %s200 = smul.u32 %s199, 256
                %s201 = smul.u32 %s199, 128
                %s202 = scalar_lea.vmem %s67, %s200
                %s203 = scalar_lea.vmem %s69, %s201 [#allocation0]
              $region51: #{reverse.1} parent=45 // loop_footer
                %s159 = sadd.s32 %s157, 1
              $region52: #{reverse.1} parent=45 // loop_footer_branch
                %156 = sbr.rel target = $region48
              $region53: #{reverse.1} parent=45 // loop_exit
                _
              %s204 = sshrl.u32 %s70, 4
              %s205 = sand.u32 %s70, 15
              %s206 = smul.u32 %s204, 16
              %s207 = smul.u32 16, %s206
              %s208 = scalar_lea.vmem %s67, %s207
              %s209 = smul.u32 8, %s206
              %s210 = scalar_lea.vmem %s69, %s209 [#allocation0]
              // While loop
              $region54: #{reverse.1} parent=45 // loop_pre_header
                _
              $region55: #{reverse.1} parent=45 // loop_header
                %s212 = sphi 0, %s214
                %p213 = scmp.ge.s32.totalorder %s212, %s205
                %s217 = sphi 0, %s224
                %s218 = sphi %s208, %s227
                %s219 = sphi %s210, %s228
              $region56: #{reverse.1} parent=45 // loop_header_branch
                %216 = sbr.rel (%p213) target = $region60
              $region57: #{reverse.1} parent=45 // loop_body
                %v220 = vld [vmem:[%s218] sm:$0xff]
                %221 = vst [vmem:[%s219] sm:$0xff] %v220
                %s222 = sadd.s32 1, %s217
                %p223 = scmp.ge.s32.totalorder %s222, %s205
                %s224 = scalar_select %p223, 0, %s222
                %s225 = smul.u32 %s224, 16
                %s226 = smul.u32 %s224, 8
                %s227 = scalar_lea.vmem %s208, %s225
                %s228 = scalar_lea.vmem %s210, %s226 [#allocation0]
              $region58: #{reverse.1} parent=45 // loop_footer
                %s214 = sadd.s32 %s212, 1
              $region59: #{reverse.1} parent=45 // loop_footer_branch
                %211 = sbr.rel target = $region55
              $region60: #{reverse.1} parent=45 // loop_exit
                _
            $region46: #{reverse.1} parent=23 // pred_fallthru
              _
            // Predicated region
            $region61: #{reverse.1} parent=23 // pred_check
              _
            $region62: #{reverse.1} parent=23 // pred_check_branch
              %230 = sbr.rel target = $region64
            $region63: #{reverse.1} parent=23 // pred_region
              _
            $region64: #{reverse.1} parent=23 // pred_fallthru
              _
          $region24: #{reverse.1} parent=19 // pred_fallthru
            _
          // Predicated region
          $region25: #{reverse.1} parent=19 // pred_check
            _
          $region26: #{reverse.1} parent=19 // pred_check_branch
            %77 = sbr.rel target = $region28
          $region27: #{reverse.1} parent=19 // pred_region
            %s79 = sshrl.u32 %s70, 4
            // While loop
            $region29: #{reverse.1} parent=27 // loop_pre_header
              _
            $region30: #{reverse.1} parent=27 // loop_header
              %s81 = sphi 0, %s83
              %p82 = scmp.ge.s32.totalorder %s81, %s79
              %s86 = sphi 0, %s123
              %s87 = sphi %s67, %s126
              %s88 = sphi %s69, %s127
            $region31: #{reverse.1} parent=27 // loop_header_branch
              %85 = sbr.rel (%p82) target = $region35
            $region32: #{reverse.1} parent=27 // loop_body
              %v89 = vld [vmem:[%s87] sm:$0xff]
              %90 = vst [vmem:[%s88] sm:$0xff] %v89
              %v91 = vld [vmem:[%s87 + $0x10] sm:$0xff]
              %92 = vst [vmem:[%s88 + $0x8] sm:$0xff] %v91
              %v93 = vld [vmem:[%s87 + $0x20] sm:$0xff]
              %94 = vst [vmem:[%s88 + $0x10] sm:$0xff] %v93
              %v95 = vld [vmem:[%s87 + $0x30] sm:$0xff]
              %96 = vst [vmem:[%s88 + $0x18] sm:$0xff] %v95
              %v97 = vld [vmem:[%s87 + $0x40] sm:$0xff]
              %98 = vst [vmem:[%s88 + $0x20] sm:$0xff] %v97
              %v99 = vld [vmem:[%s87 + $0x50] sm:$0xff]
              %100 = vst [vmem:[%s88 + $0x28] sm:$0xff] %v99
              %v101 = vld [vmem:[%s87 + $0x60] sm:$0xff]
              %102 = vst [vmem:[%s88 + $0x30] sm:$0xff] %v101
              %v103 = vld [vmem:[%s87 + $0x70] sm:$0xff]
              %104 = vst [vmem:[%s88 + $0x38] sm:$0xff] %v103
              %v105 = vld [vmem:[%s87 + $0x80] sm:$0xff]
              %106 = vst [vmem:[%s88 + $0x40] sm:$0xff] %v105
              %v107 = vld [vmem:[%s87 + $0x90] sm:$0xff]
              %108 = vst [vmem:[%s88 + $0x48] sm:$0xff] %v107
              %v109 = vld [vmem:[%s87 + $0xa0] sm:$0xff]
              %110 = vst [vmem:[%s88 + $0x50] sm:$0xff] %v109
              %v111 = vld [vmem:[%s87 + $0xb0] sm:$0xff]
              %112 = vst [vmem:[%s88 + $0x58] sm:$0xff] %v111
              %v113 = vld [vmem:[%s87 + $0xc0] sm:$0xff]
              %114 = vst [vmem:[%s88 + $0x60] sm:$0xff] %v113
              %v115 = vld [vmem:[%s87 + $0xd0] sm:$0xff]
              %116 = vst [vmem:[%s88 + $0x68] sm:$0xff] %v115
              %v117 = vld [vmem:[%s87 + $0xe0] sm:$0xff]
              %118 = vst [vmem:[%s88 + $0x70] sm:$0xff] %v117
              %v119 = vld [vmem:[%s87 + $0xf0] sm:$0xff]
              %120 = vst [vmem:[%s88 + $0x78] sm:$0xff] %v119
              %s121 = sadd.s32 1, %s86
              %p122 = scmp.ge.s32.totalorder %s121, %s79
              %s123 = scalar_select %p122, 0, %s121
              %s124 = smul.u32 %s123, 256
              %s125 = smul.u32 %s123, 128
              %s126 = scalar_lea.vmem %s67, %s124
              %s127 = scalar_lea.vmem %s69, %s125 [#allocation0]
            $region33: #{reverse.1} parent=27 // loop_footer
              %s83 = sadd.s32 %s81, 1
            $region34: #{reverse.1} parent=27 // loop_footer_branch
              %80 = sbr.rel target = $region30
            $region35: #{reverse.1} parent=27 // loop_exit
              _
            %s128 = sshrl.u32 %s70, 4
            %s129 = sand.u32 %s70, 15
            %s130 = smul.u32 %s128, 16
            %s131 = smul.u32 16, %s130
            %s132 = scalar_lea.vmem %s67, %s131
            %s133 = smul.u32 8, %s130
            %s134 = scalar_lea.vmem %s69, %s133 [#allocation0]
            // While loop
            $region36: #{reverse.1} parent=27 // loop_pre_header
              _
            $region37: #{reverse.1} parent=27 // loop_header
              %s136 = sphi 0, %s138
              %p137 = scmp.ge.s32.totalorder %s136, %s129
              %s141 = sphi 0, %s148
              %s142 = sphi %s132, %s151
              %s143 = sphi %s134, %s152
            $region38: #{reverse.1} parent=27 // loop_header_branch
              %140 = sbr.rel (%p137) target = $region42
            $region39: #{reverse.1} parent=27 // loop_body
              %v144 = vld [vmem:[%s142] sm:$0xff]
              %145 = vst [vmem:[%s143] sm:$0xff] %v144
              %s146 = sadd.s32 1, %s141
              %p147 = scmp.ge.s32.totalorder %s146, %s129
              %s148 = scalar_select %p147, 0, %s146
              %s149 = smul.u32 %s148, 16
              %s150 = smul.u32 %s148, 8
              %s151 = scalar_lea.vmem %s132, %s149
              %s152 = scalar_lea.vmem %s134, %s150 [#allocation0]
            $region40: #{reverse.1} parent=27 // loop_footer
              %s138 = sadd.s32 %s136, 1
            $region41: #{reverse.1} parent=27 // loop_footer_branch
              %135 = sbr.rel target = $region37
            $region42: #{reverse.1} parent=27 // loop_exit
              _
          $region28: #{reverse.1} parent=19 // pred_fallthru
            _
        $region20: #{reverse.1} parent=15 // pred_fallthru
          _
        %231 = vnop
      $region16: #{reverse.1} parent=5 // pred_fallthru
        _
      %p232 = scmp.le.s32.totalorder 1, %s3
      %p233 = scmp.lt.s32.totalorder %s3, 21
      %p234 = pnand %p232, %p233
      %p235 = pneg %p234
      // Predicated region
      $region65: #{reverse.1} parent=5 // pred_check
        _
      $region66: #{reverse.1} parent=5 // pred_check_branch
        %237 = sbr.rel (%p234) target = $region68
      $region67: #{reverse.1} parent=5 // pred_region
        %s238 = ssub.s32 %s3, 1
        %s239 = sand.u32 %s8, 1
        %s240 = sand.u32 %s8, 1
        %s241 = smul.addr %s240, 136
        %s242 = scalar_lea.vmem [#allocation0], %s241
        %s243 = sand.u32 %s8, 1
        %s244 = sand.u32 %s8, 1
        %s245 = smul.addr %s244, 136
        %s246 = scalar_lea.vmem [#allocation0], %s245
        %s247 = sand.u32 %s8, 1
        %s248 = sand.u32 %s8, 1
        %s249 = smul.addr %s248, 128
        %s250 = scalar_lea.vmem [#allocation1], %s249
        %s251 = ssub.s32 0, %s16
        %s252 = smul.u32 16, %s251
        %s253 = ssub.s32 1, %s252
        %s254 = ssub.s32 17, %s253
        %s255 = smul.u32 128, %s254
        %s256 = smul.u32 16, %s16
        %s257 = scalar_lea.vmem %s242, 120 [#allocation0]
        %s258 = scalar_lea.vmem %s257, 7 [#allocation0]
        %v259 = vld [vmem:[%s258] ss:$-1 sm:$0xff]
        %v260 = vrot.slane %v259, 1
        %261 = vst [vmem:[%s250] sm:$0xff] %v260
        %s262 = scalar_lea.vmem %s242, 128 [#allocation0]
        %s263 = scalar_lea.vmem %s262, 7 [#allocation0]
        %v264 = vld [vmem:[%s263] ss:$-1 sm:$0xff]
        %v265 = vrot.slane %v264, 1
        %v266 = vlaneseq
        %v267 = vshrl.u32 %v266, 7
        %vm268 = vcmp.lt.s32.totalorder %v267, 7
        %269 = vst.msk [vmem:[%s250] sm:$0xff] %vm268, %v265
        %s270 = scalar_lea.vmem %s250, 8 [#allocation1]
        %s271 = scalar_lea.vmem %s242, 112 [#allocation0]
        %s272 = scalar_lea.vmem %s271, 7 [#allocation0]
        %v273 = vld [vmem:[%s272] ss:$-1 sm:$0xff]
        %v274 = vrot.slane %v273, 1
        %275 = vst [vmem:[%s270] sm:$0xff] %v274
        %s276 = scalar_lea.vmem %s242, 120 [#allocation0]
        %s277 = scalar_lea.vmem %s276, 7 [#allocation0]
        %v278 = vld [vmem:[%s277] ss:$-1 sm:$0xff]
        %v279 = vrot.slane %v278, 1
        %v280 = vlaneseq
        %v281 = vshrl.u32 %v280, 7
        %vm282 = vcmp.lt.s32.totalorder %v281, 7
        %283 = vst.msk [vmem:[%s270] sm:$0xff] %vm282, %v279
        %s284 = scalar_lea.vmem %s250, 16 [#allocation1]
        %s285 = scalar_lea.vmem %s242, 104 [#allocation0]
        %s286 = scalar_lea.vmem %s285, 7 [#allocation0]
        %v287 = vld [vmem:[%s286] ss:$-1 sm:$0xff]
        %v288 = vrot.slane %v287, 1
        %289 = vst [vmem:[%s284] sm:$0xff] %v288
        %s290 = scalar_lea.vmem %s242, 112 [#allocation0]
        %s291 = scalar_lea.vmem %s290, 7 [#allocation0]
        %v292 = vld [vmem:[%s291] ss:$-1 sm:$0xff]
        %v293 = vrot.slane %v292, 1
        %v294 = vlaneseq
        %v295 = vshrl.u32 %v294, 7
        %vm296 = vcmp.lt.s32.totalorder %v295, 7
        %297 = vst.msk [vmem:[%s284] sm:$0xff] %vm296, %v293
        %s298 = scalar_lea.vmem %s250, 24 [#allocation1]
        %s299 = scalar_lea.vmem %s242, 96 [#allocation0]
        %s300 = scalar_lea.vmem %s299, 7 [#allocation0]
        %v301 = vld [vmem:[%s300] ss:$-1 sm:$0xff]
        %v302 = vrot.slane %v301, 1
        %303 = vst [vmem:[%s298] sm:$0xff] %v302
        %s304 = scalar_lea.vmem %s242, 104 [#allocation0]
        %s305 = scalar_lea.vmem %s304, 7 [#allocation0]
        %v306 = vld [vmem:[%s305] ss:$-1 sm:$0xff]
        %v307 = vrot.slane %v306, 1
        %v308 = vlaneseq
        %v309 = vshrl.u32 %v308, 7
        %vm310 = vcmp.lt.s32.totalorder %v309, 7
        %311 = vst.msk [vmem:[%s298] sm:$0xff] %vm310, %v307
        %s312 = scalar_lea.vmem %s250, 32 [#allocation1]
        %s313 = scalar_lea.vmem %s242, 88 [#allocation0]
        %s314 = scalar_lea.vmem %s313, 7 [#allocation0]
        %v315 = vld [vmem:[%s314] ss:$-1 sm:$0xff]
        %v316 = vrot.slane %v315, 1
        %317 = vst [vmem:[%s312] sm:$0xff] %v316
        %s318 = scalar_lea.vmem %s242, 96 [#allocation0]
        %s319 = scalar_lea.vmem %s318, 7 [#allocation0]
        %v320 = vld [vmem:[%s319] ss:$-1 sm:$0xff]
        %v321 = vrot.slane %v320, 1
        %v322 = vlaneseq
        %v323 = vshrl.u32 %v322, 7
        %vm324 = vcmp.lt.s32.totalorder %v323, 7
        %325 = vst.msk [vmem:[%s312] sm:$0xff] %vm324, %v321
        %s326 = scalar_lea.vmem %s250, 40 [#allocation1]
        %s327 = scalar_lea.vmem %s242, 80 [#allocation0]
        %s328 = scalar_lea.vmem %s327, 7 [#allocation0]
        %v329 = vld [vmem:[%s328] ss:$-1 sm:$0xff]
        %v330 = vrot.slane %v329, 1
        %331 = vst [vmem:[%s326] sm:$0xff] %v330
        %s332 = scalar_lea.vmem %s242, 88 [#allocation0]
        %s333 = scalar_lea.vmem %s332, 7 [#allocation0]
        %v334 = vld [vmem:[%s333] ss:$-1 sm:$0xff]
        %v335 = vrot.slane %v334, 1
        %v336 = vlaneseq
        %v337 = vshrl.u32 %v336, 7
        %vm338 = vcmp.lt.s32.totalorder %v337, 7
        %339 = vst.msk [vmem:[%s326] sm:$0xff] %vm338, %v335
        %s340 = scalar_lea.vmem %s250, 48 [#allocation1]
        %s341 = scalar_lea.vmem %s242, 72 [#allocation0]
        %s342 = scalar_lea.vmem %s341, 7 [#allocation0]
        %v343 = vld [vmem:[%s342] ss:$-1 sm:$0xff]
        %v344 = vrot.slane %v343, 1
        %345 = vst [vmem:[%s340] sm:$0xff] %v344
        %s346 = scalar_lea.vmem %s242, 80 [#allocation0]
        %s347 = scalar_lea.vmem %s346, 7 [#allocation0]
        %v348 = vld [vmem:[%s347] ss:$-1 sm:$0xff]
        %v349 = vrot.slane %v348, 1
        %v350 = vlaneseq
        %v351 = vshrl.u32 %v350, 7
        %vm352 = vcmp.lt.s32.totalorder %v351, 7
        %353 = vst.msk [vmem:[%s340] sm:$0xff] %vm352, %v349
        %s354 = scalar_lea.vmem %s250, 56 [#allocation1]
        %s355 = scalar_lea.vmem %s242, 64 [#allocation0]
        %s356 = scalar_lea.vmem %s355, 7 [#allocation0]
        %v357 = vld [vmem:[%s356] ss:$-1 sm:$0xff]
        %v358 = vrot.slane %v357, 1
        %359 = vst [vmem:[%s354] sm:$0xff] %v358
        %s360 = scalar_lea.vmem %s242, 72 [#allocation0]
        %s361 = scalar_lea.vmem %s360, 7 [#allocation0]
        %v362 = vld [vmem:[%s361] ss:$-1 sm:$0xff]
        %v363 = vrot.slane %v362, 1
        %v364 = vlaneseq
        %v365 = vshrl.u32 %v364, 7
        %vm366 = vcmp.lt.s32.totalorder %v365, 7
        %367 = vst.msk [vmem:[%s354] sm:$0xff] %vm366, %v363
        %s368 = scalar_lea.vmem %s250, 64 [#allocation1]
        %s369 = scalar_lea.vmem %s242, 56 [#allocation0]
        %s370 = scalar_lea.vmem %s369, 7 [#allocation0]
        %v371 = vld [vmem:[%s370] ss:$-1 sm:$0xff]
        %v372 = vrot.slane %v371, 1
        %373 = vst [vmem:[%s368] sm:$0xff] %v372
        %s374 = scalar_lea.vmem %s242, 64 [#allocation0]
        %s375 = scalar_lea.vmem %s374, 7 [#allocation0]
        %v376 = vld [vmem:[%s375] ss:$-1 sm:$0xff]
        %v377 = vrot.slane %v376, 1
        %v378 = vlaneseq
        %v379 = vshrl.u32 %v378, 7
        %vm380 = vcmp.lt.s32.totalorder %v379, 7
        %381 = vst.msk [vmem:[%s368] sm:$0xff] %vm380, %v377
        %s382 = scalar_lea.vmem %s250, 72 [#allocation1]
        %s383 = scalar_lea.vmem %s242, 48 [#allocation0]
        %s384 = scalar_lea.vmem %s383, 7 [#allocation0]
        %v385 = vld [vmem:[%s384] ss:$-1 sm:$0xff]
        %v386 = vrot.slane %v385, 1
        %387 = vst [vmem:[%s382] sm:$0xff] %v386
        %s388 = scalar_lea.vmem %s242, 56 [#allocation0]
        %s389 = scalar_lea.vmem %s388, 7 [#allocation0]
        %v390 = vld [vmem:[%s389] ss:$-1 sm:$0xff]
        %v391 = vrot.slane %v390, 1
        %v392 = vlaneseq
        %v393 = vshrl.u32 %v392, 7
        %vm394 = vcmp.lt.s32.totalorder %v393, 7
        %395 = vst.msk [vmem:[%s382] sm:$0xff] %vm394, %v391
        %s396 = scalar_lea.vmem %s250, 80 [#allocation1]
        %s397 = scalar_lea.vmem %s242, 40 [#allocation0]
        %s398 = scalar_lea.vmem %s397, 7 [#allocation0]
        %v399 = vld [vmem:[%s398] ss:$-1 sm:$0xff]
        %v400 = vrot.slane %v399, 1
        %401 = vst [vmem:[%s396] sm:$0xff] %v400
        %s402 = scalar_lea.vmem %s242, 48 [#allocation0]
        %s403 = scalar_lea.vmem %s402, 7 [#allocation0]
        %v404 = vld [vmem:[%s403] ss:$-1 sm:$0xff]
        %v405 = vrot.slane %v404, 1
        %v406 = vlaneseq
        %v407 = vshrl.u32 %v406, 7
        %vm408 = vcmp.lt.s32.totalorder %v407, 7
        %409 = vst.msk [vmem:[%s396] sm:$0xff] %vm408, %v405
        %s410 = scalar_lea.vmem %s250, 88 [#allocation1]
        %s411 = scalar_lea.vmem %s242, 32 [#allocation0]
        %s412 = scalar_lea.vmem %s411, 7 [#allocation0]
        %v413 = vld [vmem:[%s412] ss:$-1 sm:$0xff]
        %v414 = vrot.slane %v413, 1
        %415 = vst [vmem:[%s410] sm:$0xff] %v414
        %s416 = scalar_lea.vmem %s242, 40 [#allocation0]
        %s417 = scalar_lea.vmem %s416, 7 [#allocation0]
        %v418 = vld [vmem:[%s417] ss:$-1 sm:$0xff]
        %v419 = vrot.slane %v418, 1
        %v420 = vlaneseq
        %v421 = vshrl.u32 %v420, 7
        %vm422 = vcmp.lt.s32.totalorder %v421, 7
        %423 = vst.msk [vmem:[%s410] sm:$0xff] %vm422, %v419
        %s424 = scalar_lea.vmem %s250, 96 [#allocation1]
        %s425 = scalar_lea.vmem %s242, 24 [#allocation0]
        %s426 = scalar_lea.vmem %s425, 7 [#allocation0]
        %v427 = vld [vmem:[%s426] ss:$-1 sm:$0xff]
        %v428 = vrot.slane %v427, 1
        %429 = vst [vmem:[%s424] sm:$0xff] %v428
        %s430 = scalar_lea.vmem %s242, 32 [#allocation0]
        %s431 = scalar_lea.vmem %s430, 7 [#allocation0]
        %v432 = vld [vmem:[%s431] ss:$-1 sm:$0xff]
        %v433 = vrot.slane %v432, 1
        %v434 = vlaneseq
        %v435 = vshrl.u32 %v434, 7
        %vm436 = vcmp.lt.s32.totalorder %v435, 7
        %437 = vst.msk [vmem:[%s424] sm:$0xff] %vm436, %v433
        %s438 = scalar_lea.vmem %s250, 104 [#allocation1]
        %s439 = scalar_lea.vmem %s242, 16 [#allocation0]
        %s440 = scalar_lea.vmem %s439, 7 [#allocation0]
        %v441 = vld [vmem:[%s440] ss:$-1 sm:$0xff]
        %v442 = vrot.slane %v441, 1
        %443 = vst [vmem:[%s438] sm:$0xff] %v442
        %s444 = scalar_lea.vmem %s242, 24 [#allocation0]
        %s445 = scalar_lea.vmem %s444, 7 [#allocation0]
        %v446 = vld [vmem:[%s445] ss:$-1 sm:$0xff]
        %v447 = vrot.slane %v446, 1
        %v448 = vlaneseq
        %v449 = vshrl.u32 %v448, 7
        %vm450 = vcmp.lt.s32.totalorder %v449, 7
        %451 = vst.msk [vmem:[%s438] sm:$0xff] %vm450, %v447
        %s452 = scalar_lea.vmem %s250, 112 [#allocation1]
        %s453 = scalar_lea.vmem %s242, 8 [#allocation0]
        %s454 = scalar_lea.vmem %s453, 7 [#allocation0]
        %v455 = vld [vmem:[%s454] ss:$-1 sm:$0xff]
        %v456 = vrot.slane %v455, 1
        %457 = vst [vmem:[%s452] sm:$0xff] %v456
        %s458 = scalar_lea.vmem %s242, 16 [#allocation0]
        %s459 = scalar_lea.vmem %s458, 7 [#allocation0]
        %v460 = vld [vmem:[%s459] ss:$-1 sm:$0xff]
        %v461 = vrot.slane %v460, 1
        %v462 = vlaneseq
        %v463 = vshrl.u32 %v462, 7
        %vm464 = vcmp.lt.s32.totalorder %v463, 7
        %465 = vst.msk [vmem:[%s452] sm:$0xff] %vm464, %v461
        %s466 = scalar_lea.vmem %s250, 120 [#allocation1]
        %s467 = scalar_lea.vmem %s242, 7 [#allocation0]
        %v468 = vld [vmem:[%s467] ss:$-1 sm:$0xff]
        %v469 = vrot.slane %v468, 1
        %470 = vst [vmem:[%s466] sm:$0xff] %v469
        %s471 = scalar_lea.vmem %s242, 8 [#allocation0]
        %s472 = scalar_lea.vmem %s471, 7 [#allocation0]
        %v473 = vld [vmem:[%s472] ss:$-1 sm:$0xff]
        %v474 = vrot.slane %v473, 1
        %v475 = vlaneseq
        %v476 = vshrl.u32 %v475, 7
        %vm477 = vcmp.lt.s32.totalorder %v476, 7
        %478 = vst.msk [vmem:[%s466] sm:$0xff] %vm477, %v474
        %s479 = sand.u32 %s8, 1
        %s480 = sand.u32 %s8, 1
        %s481 = smul.addr %s480, 128
        %s482 = scalar_lea.vmem [#allocation1], %s481
        %s483 = smul.u32 16, %s16
        %s484 = smul.addr %s483, 2
        %s485 = sadd.s32 %s17, %s484
        %s486 = smul.addr %s15, 32
        %s487 = sadd.s32 %s485, %s486
        %s488 = smul.addr %s14, 160
        %s489 = sadd.s32 %s487, %s488
        %s490 = smul.addr %s489, 8
        %s491 = scalar_lea.vmem %s1, %s490
        // Predicated region
        $region69: #{reverse.1} parent=67 // pred_check
          _
        $region70: #{reverse.1} parent=67 // pred_check_branch
          %493 = sbr.rel (0) target = $region72
        $region71: #{reverse.1} parent=67 // pred_region
          // Predicated region
          $region73: #{reverse.1} parent=71 // pred_check
            _
          $region74: #{reverse.1} parent=71 // pred_check_branch
            %495 = sbr.rel (0) target = $region76
          $region75: #{reverse.1} parent=71 // pred_region
            // Predicated region
            $region88: #{reverse.1} parent=75 // pred_check
              _
            $region89: #{reverse.1} parent=75 // pred_check_branch
              %540 = sbr.rel (0) target = $region91
            $region90: #{reverse.1} parent=75 // pred_region
              loop: start=0, step=1, limit=1
              $region92: #{reverse.1} parent=90 // loop_pre_header
                _
              $region93: #{reverse.1} parent=90 // loop_header
                %s542 = sphi 0, %s546
                %p543 = scmp.ge.s32.totalorder %s542, 1
                %s547 = sphi %s482, %s482
                %s548 = sphi %s491, %s491
              $region94: #{reverse.1} parent=90 // loop_header_branch
                %545 = sbr.rel (%p543) target = $region98
              $region95: #{reverse.1} parent=90 // loop_body
                %v549 = vld [vmem:[%s547] sm:$0xff]
                %550 = vst [vmem:[%s548] sm:$0xff] %v549
                %v551 = vld [vmem:[%s547 + $0x8] sm:$0xff]
                %552 = vst [vmem:[%s548 + $0x10] sm:$0xff] %v551
                %v553 = vld [vmem:[%s547 + $0x10] sm:$0xff]
                %554 = vst [vmem:[%s548 + $0x20] sm:$0xff] %v553
                %v555 = vld [vmem:[%s547 + $0x18] sm:$0xff]
                %556 = vst [vmem:[%s548 + $0x30] sm:$0xff] %v555
                %v557 = vld [vmem:[%s547 + $0x20] sm:$0xff]
                %558 = vst [vmem:[%s548 + $0x40] sm:$0xff] %v557
                %v559 = vld [vmem:[%s547 + $0x28] sm:$0xff]
                %560 = vst [vmem:[%s548 + $0x50] sm:$0xff] %v559
                %v561 = vld [vmem:[%s547 + $0x30] sm:$0xff]
                %562 = vst [vmem:[%s548 + $0x60] sm:$0xff] %v561
                %v563 = vld [vmem:[%s547 + $0x38] sm:$0xff]
                %564 = vst [vmem:[%s548 + $0x70] sm:$0xff] %v563
                %v565 = vld [vmem:[%s547 + $0x40] sm:$0xff]
                %566 = vst [vmem:[%s548 + $0x80] sm:$0xff] %v565
                %v567 = vld [vmem:[%s547 + $0x48] sm:$0xff]
                %568 = vst [vmem:[%s548 + $0x90] sm:$0xff] %v567
                %v569 = vld [vmem:[%s547 + $0x50] sm:$0xff]
                %570 = vst [vmem:[%s548 + $0xa0] sm:$0xff] %v569
                %v571 = vld [vmem:[%s547 + $0x58] sm:$0xff]
                %572 = vst [vmem:[%s548 + $0xb0] sm:$0xff] %v571
                %v573 = vld [vmem:[%s547 + $0x60] sm:$0xff]
                %574 = vst [vmem:[%s548 + $0xc0] sm:$0xff] %v573
                %v575 = vld [vmem:[%s547 + $0x68] sm:$0xff]
                %576 = vst [vmem:[%s548 + $0xd0] sm:$0xff] %v575
                %v577 = vld [vmem:[%s547 + $0x70] sm:$0xff]
                %578 = vst [vmem:[%s548 + $0xe0] sm:$0xff] %v577
                %v579 = vld [vmem:[%s547 + $0x78] sm:$0xff]
                %580 = vst [vmem:[%s548 + $0xf0] sm:$0xff] %v579
              $region96: #{reverse.1} parent=90 // loop_footer
                %s546 = sadd.s32 1, %s542
              $region97: #{reverse.1} parent=90 // loop_footer_branch
                %541 = sbr.rel target = $region93
              $region98: #{reverse.1} parent=90 // loop_exit
                _
            $region91: #{reverse.1} parent=75 // pred_fallthru
              _
            // Predicated region
            $region99: #{reverse.1} parent=75 // pred_check
              _
            $region100: #{reverse.1} parent=75 // pred_check_branch
              %582 = sbr.rel target = $region102
            $region101: #{reverse.1} parent=75 // pred_region
              _
            $region102: #{reverse.1} parent=75 // pred_fallthru
              _
          $region76: #{reverse.1} parent=71 // pred_fallthru
            _
          // Predicated region
          $region77: #{reverse.1} parent=71 // pred_check
            _
          $region78: #{reverse.1} parent=71 // pred_check_branch
            %497 = sbr.rel target = $region80
          $region79: #{reverse.1} parent=71 // pred_region
            loop: start=0, step=1, limit=1
            $region81: #{reverse.1} parent=79 // loop_pre_header
              _
            $region82: #{reverse.1} parent=79 // loop_header
              %s500 = sphi 0, %s504
              %p501 = scmp.ge.s32.totalorder %s500, 1
              %s505 = sphi %s482, %s482
              %s506 = sphi %s491, %s491
            $region83: #{reverse.1} parent=79 // loop_header_branch
              %503 = sbr.rel (%p501) target = $region87
            $region84: #{reverse.1} parent=79 // loop_body
              %v507 = vld [vmem:[%s505] sm:$0xff]
              %508 = vst [vmem:[%s506] sm:$0xff] %v507
              %v509 = vld [vmem:[%s505 + $0x8] sm:$0xff]
              %510 = vst [vmem:[%s506 + $0x10] sm:$0xff] %v509
              %v511 = vld [vmem:[%s505 + $0x10] sm:$0xff]
              %512 = vst [vmem:[%s506 + $0x20] sm:$0xff] %v511
              %v513 = vld [vmem:[%s505 + $0x18] sm:$0xff]
              %514 = vst [vmem:[%s506 + $0x30] sm:$0xff] %v513
              %v515 = vld [vmem:[%s505 + $0x20] sm:$0xff]
              %516 = vst [vmem:[%s506 + $0x40] sm:$0xff] %v515
              %v517 = vld [vmem:[%s505 + $0x28] sm:$0xff]
              %518 = vst [vmem:[%s506 + $0x50] sm:$0xff] %v517
              %v519 = vld [vmem:[%s505 + $0x30] sm:$0xff]
              %520 = vst [vmem:[%s506 + $0x60] sm:$0xff] %v519
              %v521 = vld [vmem:[%s505 + $0x38] sm:$0xff]
              %522 = vst [vmem:[%s506 + $0x70] sm:$0xff] %v521
              %v523 = vld [vmem:[%s505 + $0x40] sm:$0xff]
              %524 = vst [vmem:[%s506 + $0x80] sm:$0xff] %v523
              %v525 = vld [vmem:[%s505 + $0x48] sm:$0xff]
              %526 = vst [vmem:[%s506 + $0x90] sm:$0xff] %v525
              %v527 = vld [vmem:[%s505 + $0x50] sm:$0xff]
              %528 = vst [vmem:[%s506 + $0xa0] sm:$0xff] %v527
              %v529 = vld [vmem:[%s505 + $0x58] sm:$0xff]
              %530 = vst [vmem:[%s506 + $0xb0] sm:$0xff] %v529
              %v531 = vld [vmem:[%s505 + $0x60] sm:$0xff]
              %532 = vst [vmem:[%s506 + $0xc0] sm:$0xff] %v531
              %v533 = vld [vmem:[%s505 + $0x68] sm:$0xff]
              %534 = vst [vmem:[%s506 + $0xd0] sm:$0xff] %v533
              %v535 = vld [vmem:[%s505 + $0x70] sm:$0xff]
              %536 = vst [vmem:[%s506 + $0xe0] sm:$0xff] %v535
              %v537 = vld [vmem:[%s505 + $0x78] sm:$0xff]
              %538 = vst [vmem:[%s506 + $0xf0] sm:$0xff] %v537
            $region85: #{reverse.1} parent=79 // loop_footer
              %s504 = sadd.s32 1, %s500
            $region86: #{reverse.1} parent=79 // loop_footer_branch
              %499 = sbr.rel target = $region82
            $region87: #{reverse.1} parent=79 // loop_exit
              _
          $region80: #{reverse.1} parent=71 // pred_fallthru
            _
        $region72: #{reverse.1} parent=67 // pred_fallthru
          _
        %583 = vnop
      $region68: #{reverse.1} parent=5 // pred_fallthru
        _
      %p584 = scmp.le.s32.totalorder 2, %s3
      // Predicated region
      $region103: #{reverse.1} parent=5 // pred_check
        %p585 = pneg %p584
      $region104: #{reverse.1} parent=5 // pred_check_branch
        %587 = sbr.rel (%p585) target = $region106
      $region105: #{reverse.1} parent=5 // pred_region
        %s588 = ssub.s32 %s3, 2
        %s589 = sand.u32 %s9, 1
        %s590 = sand.u32 %s9, 1
        %s591 = smul.addr %s590, 128
        %s592 = scalar_lea.vmem [#allocation1], %s591
      $region106: #{reverse.1} parent=5 // pred_fallthru
        _
    $region6: #{reverse.1} parent=1 // loop_footer
      %s7 = sadd.s32 1, %s3
    $region7: #{reverse.1} parent=1 // loop_footer_branch
      %2 = sbr.rel target = $region3
    $region8: #{reverse.1} parent=1 // loop_exit
      _

// kernel: _lambda_.3
$region0: #{_lambda_.3}
  #allocation0 [shape = 'u32[]', space=smem, size = 0x4, offset = 0x4, fixed_abs, tag = 'smem constant byte address 0x4 - core index']
  #allocation1 [shape = 'u32[144,128]{1,0:T(1,128)}', space=vmem, size = 0x12000, scoped, tag = 'internal scratch']
  #allocation8 [shape = 's32[]', space=sflag, size = 0x4, offset = 0, fixed_abs, tag = 'sflag constant byte address 0x0 - dummy sync flag']
  %s0 = inlined_call_operand.vmem [shape: f32[2,5,128,128], index: 0, kind: input, shape index: {}, may-alias: {0,1,2}]
  %s1 = inlined_call_operand.vmem [shape: f32[2,5,128,128], index: 1, kind: input, shape index: {}, may-alias: {0,1,2}]
  %s2 = inlined_call_operand.vmem [shape: f32[2,5,128,128], index: 2, kind: input, shape index: {}, may-alias: {0,1,2}]
  %s3 = inlined_call_operand.vmem [shape: f32[4,1,1], index: 3, kind: input, shape index: {}]
  %s4 = inlined_call_operand.vmem [shape: s8[2,4,128,128], index: 4, kind: output, shape index: {0}]
  %s5 = inlined_call_operand.hbm [shape: f32[2,4,128,128], index: 5, kind: output, shape index: {1}]
  %6 = xla_tuple %s4, %s5
  %s7 = sld [smem:[#allocation0]]
  $region205: #{_lambda_.3} parent=0
    _
  %s9 = ssub.s32 1, %s7
  %s10 = scalar_select 0, %s9, %s7
  $region1: #{_lambda_.3} parent=0
    #allocation2 [shape = 'u8[163840]{0}', space=vmem, size = 0x28000, scoped, tag = 'input window, operand 0']
    #allocation3 [shape = 'u8[40960]{0}', space=vmem, size = 0xa000, scoped, tag = 'input window, operand 1']
    #allocation4 [shape = 'u8[40960]{0}', space=vmem, size = 0xa000, scoped, tag = 'input window, operand 2']
    #allocation5 [shape = 'u8[32768]{0}', space=vmem, size = 0x8000, scoped, tag = 'output window, operand 0']
    #allocation6 [shape = 'u8[131072]{0}', space=vmem, size = 0x20000, scoped, tag = 'output window, operand 1']
    #allocation7 [shape = 's32[2]{0}', space=sflag, size = 0x8, scoped, tag = 'scoped memory for _lambda_.3']
    %11 = vsyncpa [#allocation7], 0
    %s12 = scalar_lea.sflag [#allocation7], 1
    %13 = vsyncpa %s12, 0
    loop: start=0, step=1, limit=10
    $region2: #{_lambda_.3} parent=1 // loop_pre_header
      _
    $region3: #{_lambda_.3} parent=1 // loop_header
      %s15 = sphi 0, %s19
      %p16 = scmp.ge.s32.totalorder %s15, 10
      %s22 = sphi 0, %s34
      %s23 = sphi 0, %s30
      %s24 = sphi 0, %s22
      %s25 = sphi 0, %s23
      %s26 = sphi 0, %s24
      %s27 = sphi 0, %s25
      %s39 = sphi 0, %s41
      %s42 = sphi 0, %s39
      %s43 = sphi 0, %s42
      %s59 = sphi 0, %s43
      %s75 = sphi 0, %s77
      %s78 = sphi 0, %s75
      %s79 = sphi 0, %s78
      %s95 = sphi 0, %s79
      %s111 = sphi 0, %s113
      %s114 = sphi 0, %s111
      %s115 = sphi 0, %s114
      %s131 = sphi 0, %s115
      %s135 = sphi 0, %s135
      %s137 = sphi 0, %s135
      %s138 = sphi 0, %s137
      %s152 = sphi 0, %s138
      %s160 = sphi 0, %s162
      %s163 = sphi 0, %s160
      %s164 = sphi 0, %s163
      %s180 = sphi 0, %s164
      %s188 = sphi 0, %s190
      %s191 = sphi 0, %s188
      %s192 = sphi 0, %s191
      %s208 = sphi 0, %s192
    $region4: #{_lambda_.3} parent=1 // loop_header_branch
      %18 = sbr.rel (%p16) target = $region8
    $region5: #{_lambda_.3} parent=1 // loop_body
      %s20 = ssub.s32 %s15, 1
      %s21 = ssub.s32 %s15, 2
      %s28 = sadd.s32 1, %s23
      %p29 = scmp.ge.s32.totalorder %s28, 4
      %s30 = scalar_select %p29, 0, %s28
      %s31 = sadd.s32 1, %s22
      %s32 = scalar_select %p29, %s31, %s22
      %p33 = scmp.ge.s32.totalorder %s32, 2
      %s34 = scalar_select %p33, 0, %s32
      %s35 = ssub.s32 %s22, %s34
      %s36 = ssub.s32 %s23, %s30
      %s37 = sor.u32 %s35, %s36
      %p38 = scmp.eq.s32.totalorder %s37, 0
      %s40 = sadd.s32 %s39, 1
      %s41 = scalar_select %p38, %s39, %s40
      %p44 = pneg %p38
      %p45 = scmp.eq.s32.totalorder %s15, 7
      %p46 = por %p44, %p45
      %p47 = scmp.ne.s32.totalorder %s39, %s42
      %p48 = scmp.eq.s32.totalorder %s15, 0
      %p49 = por %p47, %p48
      %p50 = scmp.ne.s32.totalorder %s39, %s42
      %p51 = scmp.eq.s32.totalorder %s20, 7
      %p52 = por %p50, %p51
      %p53 = scmp.ne.s32.totalorder %s42, %s43
      %p54 = scmp.eq.s32.totalorder %s20, 0
      %p55 = por %p53, %p54
      %p56 = scmp.ne.s32.totalorder %s42, %s43
      %p57 = scmp.eq.s32.totalorder %s21, 7
      %p58 = por %p56, %p57
      %p60 = scmp.ne.s32.totalorder %s43, %s59
      %p61 = scmp.eq.s32.totalorder %s21, 0
      %p62 = por %p60, %p61
      %s63 = smul.u32 %s23, 4
      %s64 = ssub.s32 %s63, 1
      %p65 = scmp.gt.s32.totalorder %s64, 0
      %s66 = scalar_select %p65, %s64, 0
      %s67 = smul.u32 %s30, 4
      %s68 = ssub.s32 %s67, 1
      %p69 = scmp.gt.s32.totalorder %s68, 0
      %s70 = scalar_select %p69, %s68, 0
      %s71 = ssub.s32 %s22, %s34
      %s72 = ssub.s32 %s66, %s70
      %s73 = sor.u32 %s71, %s72
      %p74 = scmp.eq.s32.totalorder %s73, 0
      %s76 = sadd.s32 %s75, 1
      %s77 = scalar_select %p74, %s75, %s76
      %p80 = pneg %p74
      %p81 = scmp.eq.s32.totalorder %s15, 7
      %p82 = por %p80, %p81
      %p83 = scmp.ne.s32.totalorder %s75, %s78
      %p84 = scmp.eq.s32.totalorder %s15, 0
      %p85 = por %p83, %p84
      %p86 = scmp.ne.s32.totalorder %s75, %s78
      %p87 = scmp.eq.s32.totalorder %s20, 7
      %p88 = por %p86, %p87
      %p89 = scmp.ne.s32.totalorder %s78, %s79
      %p90 = scmp.eq.s32.totalorder %s20, 0
      %p91 = por %p89, %p90
      %p92 = scmp.ne.s32.totalorder %s78, %s79
      %p93 = scmp.eq.s32.totalorder %s21, 7
      %p94 = por %p92, %p93
      %p96 = scmp.ne.s32.totalorder %s79, %s95
      %p97 = scmp.eq.s32.totalorder %s21, 0
      %p98 = por %p96, %p97
      %s99 = sadd.s32 %s23, 1
      %s100 = smul.u32 %s99, 4
      %p101 = scmp.lt.s32.totalorder %s100, 15
      %s102 = scalar_select %p101, %s100, 15
      %s103 = sadd.s32 %s30, 1
      %s104 = smul.u32 %s103, 4
      %p105 = scmp.lt.s32.totalorder %s104, 15
      %s106 = scalar_select %p105, %s104, 15
      %s107 = ssub.s32 %s22, %s34
      %s108 = ssub.s32 %s102, %s106
      %s109 = sor.u32 %s107, %s108
      %p110 = scmp.eq.s32.totalorder %s109, 0
      %s112 = sadd.s32 %s111, 1
      %s113 = scalar_select %p110, %s111, %s112
      %p116 = pneg %p110
      %p117 = scmp.eq.s32.totalorder %s15, 7
      %p118 = por %p116, %p117
      %p119 = scmp.ne.s32.totalorder %s111, %s114
      %p120 = scmp.eq.s32.totalorder %s15, 0
      %p121 = por %p119, %p120
      %p122 = scmp.ne.s32.totalorder %s111, %s114
      %p123 = scmp.eq.s32.totalorder %s20, 7
      %p124 = por %p122, %p123
      %p125 = scmp.ne.s32.totalorder %s114, %s115
      %p126 = scmp.eq.s32.totalorder %s20, 0
      %p127 = por %p125, %p126
      %p128 = scmp.ne.s32.totalorder %s114, %s115
      %p129 = scmp.eq.s32.totalorder %s21, 7
      %p130 = por %p128, %p129
      %p132 = scmp.ne.s32.totalorder %s115, %s131
      %p133 = scmp.eq.s32.totalorder %s21, 0
      %p134 = por %p132, %p133
      %s136 = sadd.s32 %s135, 1
      %p139 = scmp.eq.s32.totalorder %s15, 7
      %p140 = scmp.ne.s32.totalorder %s135, %s137
      %p141 = scmp.eq.s32.totalorder %s15, 0
      %p142 = por %p140, %p141
      %p143 = scmp.ne.s32.totalorder %s135, %s137
      %p144 = scmp.eq.s32.totalorder %s20, 7
      %p145 = por %p143, %p144
      %p146 = scmp.ne.s32.totalorder %s137, %s138
      %p147 = scmp.eq.s32.totalorder %s20, 0
      %p148 = por %p146, %p147
      %p149 = scmp.ne.s32.totalorder %s137, %s138
      %p150 = scmp.eq.s32.totalorder %s21, 7
      %p151 = por %p149, %p150
      %p153 = scmp.ne.s32.totalorder %s138, %s152
      %p154 = scmp.eq.s32.totalorder %s21, 0
      %p155 = por %p153, %p154
      %s156 = ssub.s32 %s22, %s34
      %s157 = ssub.s32 %s23, %s30
      %s158 = sor.u32 %s156, %s157
      %p159 = scmp.eq.s32.totalorder %s158, 0
      %s161 = sadd.s32 %s160, 1
      %s162 = scalar_select %p159, %s160, %s161
      %p165 = pneg %p159
      %p166 = scmp.eq.s32.totalorder %s15, 7
      %p167 = por %p165, %p166
      %p168 = scmp.ne.s32.totalorder %s160, %s163
      %p169 = scmp.eq.s32.totalorder %s15, 0
      %p170 = por %p168, %p169
      %p171 = scmp.ne.s32.totalorder %s160, %s163
      %p172 = scmp.eq.s32.totalorder %s20, 7
      %p173 = por %p171, %p172
      %p174 = scmp.ne.s32.totalorder %s163, %s164
      %p175 = scmp.eq.s32.totalorder %s20, 0
      %p176 = por %p174, %p175
      %p177 = scmp.ne.s32.totalorder %s163, %s164
      %p178 = scmp.eq.s32.totalorder %s21, 7
      %p179 = por %p177, %p178
      %p181 = scmp.ne.s32.totalorder %s164, %s180
      %p182 = scmp.eq.s32.totalorder %s21, 0
      %p183 = por %p181, %p182
      %s184 = ssub.s32 %s22, %s34
      %s185 = ssub.s32 %s23, %s30
      %s186 = sor.u32 %s184, %s185
      %p187 = scmp.eq.s32.totalorder %s186, 0
      %s189 = sadd.s32 %s188, 1
      %s190 = scalar_select %p187, %s188, %s189
      %p193 = pneg %p187
      %p194 = scmp.eq.s32.totalorder %s15, 7
      %p195 = por %p193, %p194
      %p196 = scmp.ne.s32.totalorder %s188, %s191
      %p197 = scmp.eq.s32.totalorder %s15, 0
      %p198 = por %p196, %p197
      %p199 = scmp.ne.s32.totalorder %s188, %s191
      %p200 = scmp.eq.s32.totalorder %s20, 7
      %p201 = por %p199, %p200
      %p202 = scmp.ne.s32.totalorder %s191, %s192
      %p203 = scmp.eq.s32.totalorder %s20, 0
      %p204 = por %p202, %p203
      %p205 = scmp.ne.s32.totalorder %s191, %s192
      %p206 = scmp.eq.s32.totalorder %s21, 7
      %p207 = por %p205, %p206
      %p209 = scmp.ne.s32.totalorder %s192, %s208
      %p210 = scmp.eq.s32.totalorder %s21, 0
      %p211 = por %p209, %p210
      %p212 = scmp.le.s32.totalorder 1, %s15
      %p213 = scmp.lt.s32.totalorder %s15, 9
      %p214 = pnand %p212, %p213
      %p215 = pneg %p214
      // Predicated region
      $region9: #{_lambda_.3} parent=5 // pred_check
        _
      $region10: #{_lambda_.3} parent=5 // pred_check_branch
        %217 = sbr.rel (%p214) target = $region12
      $region11: #{_lambda_.3} parent=5 // pred_region
        %s218 = ssub.s32 %s15, 1
        // Predicated region
        $region13: #{_lambda_.3} parent=11 // pred_check
          %p219 = pneg %p148
        $region14: #{_lambda_.3} parent=11 // pred_check_branch
          %221 = sbr.rel (%p219) target = $region16
        $region15: #{_lambda_.3} parent=11 // pred_region
          _
        $region16: #{_lambda_.3} parent=11 // pred_fallthru
          _
      $region12: #{_lambda_.3} parent=5 // pred_fallthru
        _
      %p222 = scmp.lt.s32.totalorder %s15, 8
      // Predicated region
      $region17: #{_lambda_.3} parent=5 // pred_check
        %p223 = pneg %p222
      $region18: #{_lambda_.3} parent=5 // pred_check_branch
        %225 = sbr.rel (%p223) target = $region20
      $region19: #{_lambda_.3} parent=5 // pred_region
        // Predicated region
        $region21: #{_lambda_.3} parent=19 // pred_check
          %p226 = pneg %p49
        $region22: #{_lambda_.3} parent=19 // pred_check_branch
          %228 = sbr.rel (%p226) target = $region24
        $region23: #{_lambda_.3} parent=19 // pred_region
          %s229 = sand.u32 %s39, 1
          %s230 = sand.u32 %s39, 1
          %s231 = smul.addr %s230, 160
          %s232 = scalar_lea.vmem [#allocation2], %s231
          %s233 = smul.u32 4, %s23
          %s234 = smul.addr %s22, 80
          %s235 = sadd.s32 %s233, %s234
          %s236 = smul.addr %s235, 8
          %s237 = scalar_lea.vmem %s0, %s236
          // Predicated region
          $region25: #{_lambda_.3} parent=23 // pred_check
            _
          $region26: #{_lambda_.3} parent=23 // pred_check_branch
            %239 = sbr.rel (0) target = $region28
          $region27: #{_lambda_.3} parent=23 // pred_region
            // Predicated region
            $region29: #{_lambda_.3} parent=27 // pred_check
              _
            $region30: #{_lambda_.3} parent=27 // pred_check_branch
              %241 = sbr.rel (0) target = $region32
            $region31: #{_lambda_.3} parent=27 // pred_region
              // Predicated region
              $region44: #{_lambda_.3} parent=31 // pred_check
                _
              $region45: #{_lambda_.3} parent=31 // pred_check_branch
                %294 = sbr.rel (0) target = $region47
              $region46: #{_lambda_.3} parent=31 // pred_region
                loop: start=0, step=1, limit=1
                $region48: #{_lambda_.3} parent=46 // loop_pre_header
                  _
                $region49: #{_lambda_.3} parent=46 // loop_header
                  %s296 = sphi 0, %s300
                  %p297 = scmp.ge.s32.totalorder %s296, 1
                  %s301 = sphi %s237, %s237
                  %s302 = sphi %s232, %s232
                $region50: #{_lambda_.3} parent=46 // loop_header_branch
                  %299 = sbr.rel (%p297) target = $region54
                $region51: #{_lambda_.3} parent=46 // loop_body
                  %v303 = vld [vmem:[%s301] sm:$0xff]
                  %304 = vst [vmem:[%s302] sm:$0xff] %v303
                  %v305 = vld [vmem:[%s301 + $0x8] sm:$0xff]
                  %306 = vst [vmem:[%s302 + $0x8] sm:$0xff] %v305
                  %v307 = vld [vmem:[%s301 + $0x10] sm:$0xff]
                  %308 = vst [vmem:[%s302 + $0x10] sm:$0xff] %v307
                  %v309 = vld [vmem:[%s301 + $0x18] sm:$0xff]
                  %310 = vst [vmem:[%s302 + $0x18] sm:$0xff] %v309
                  %v311 = vld [vmem:[%s301 + $0x80] sm:$0xff]
                  %312 = vst [vmem:[%s302 + $0x20] sm:$0xff] %v311
                  %v313 = vld [vmem:[%s301 + $0x88] sm:$0xff]
                  %314 = vst [vmem:[%s302 + $0x28] sm:$0xff] %v313
                  %v315 = vld [vmem:[%s301 + $0x90] sm:$0xff]
                  %316 = vst [vmem:[%s302 + $0x30] sm:$0xff] %v315
                  %v317 = vld [vmem:[%s301 + $0x98] sm:$0xff]
                  %318 = vst [vmem:[%s302 + $0x38] sm:$0xff] %v317
                  %v319 = vld [vmem:[%s301 + $0x100] sm:$0xff]
                  %320 = vst [vmem:[%s302 + $0x40] sm:$0xff] %v319
                  %v321 = vld [vmem:[%s301 + $0x108] sm:$0xff]
                  %322 = vst [vmem:[%s302 + $0x48] sm:$0xff] %v321
                  %v323 = vld [vmem:[%s301 + $0x110] sm:$0xff]
                  %324 = vst [vmem:[%s302 + $0x50] sm:$0xff] %v323
                  %v325 = vld [vmem:[%s301 + $0x118] sm:$0xff]
                  %326 = vst [vmem:[%s302 + $0x58] sm:$0xff] %v325
                  %v327 = vld [vmem:[%s301 + $0x180] sm:$0xff]
                  %328 = vst [vmem:[%s302 + $0x60] sm:$0xff] %v327
                  %v329 = vld [vmem:[%s301 + $0x188] sm:$0xff]
                  %330 = vst [vmem:[%s302 + $0x68] sm:$0xff] %v329
                  %v331 = vld [vmem:[%s301 + $0x190] sm:$0xff]
                  %332 = vst [vmem:[%s302 + $0x70] sm:$0xff] %v331
                  %v333 = vld [vmem:[%s301 + $0x198] sm:$0xff]
                  %334 = vst [vmem:[%s302 + $0x78] sm:$0xff] %v333
                  %v335 = vld [vmem:[%s301 + $0x200] sm:$0xff]
                  %336 = vst [vmem:[%s302 + $0x80] sm:$0xff] %v335
                  %v337 = vld [vmem:[%s301 + $0x208] sm:$0xff]
                  %338 = vst [vmem:[%s302 + $0x88] sm:$0xff] %v337
                  %v339 = vld [vmem:[%s301 + $0x210] sm:$0xff]
                  %340 = vst [vmem:[%s302 + $0x90] sm:$0xff] %v339
                  %v341 = vld [vmem:[%s301 + $0x218] sm:$0xff]
                  %342 = vst [vmem:[%s302 + $0x98] sm:$0xff] %v341
                $region52: #{_lambda_.3} parent=46 // loop_footer
                  %s300 = sadd.s32 1, %s296
                $region53: #{_lambda_.3} parent=46 // loop_footer_branch
                  %295 = sbr.rel target = $region49
                $region54: #{_lambda_.3} parent=46 // loop_exit
                  _
              $region47: #{_lambda_.3} parent=31 // pred_fallthru
                _
              // Predicated region
              $region55: #{_lambda_.3} parent=31 // pred_check
                _
              $region56: #{_lambda_.3} parent=31 // pred_check_branch
                %344 = sbr.rel target = $region58
              $region57: #{_lambda_.3} parent=31 // pred_region
                _
              $region58: #{_lambda_.3} parent=31 // pred_fallthru
                _
            $region32: #{_lambda_.3} parent=27 // pred_fallthru
              _
            // Predicated region
            $region33: #{_lambda_.3} parent=27 // pred_check
              _
            $region34: #{_lambda_.3} parent=27 // pred_check_branch
              %243 = sbr.rel target = $region36
            $region35: #{_lambda_.3} parent=27 // pred_region
              loop: start=0, step=1, limit=1
              $region37: #{_lambda_.3} parent=35 // loop_pre_header
                _
              $region38: #{_lambda_.3} parent=35 // loop_header
                %s246 = sphi 0, %s250
                %p247 = scmp.ge.s32.totalorder %s246, 1
                %s251 = sphi %s237, %s237
                %s252 = sphi %s232, %s232
              $region39: #{_lambda_.3} parent=35 // loop_header_branch
                %249 = sbr.rel (%p247) target = $region43
              $region40: #{_lambda_.3} parent=35 // loop_body
                %v253 = vld [vmem:[%s251] sm:$0xff]
                %254 = vst [vmem:[%s252] sm:$0xff] %v253
                %v255 = vld [vmem:[%s251 + $0x8] sm:$0xff]
                %256 = vst [vmem:[%s252 + $0x8] sm:$0xff] %v255
                %v257 = vld [vmem:[%s251 + $0x10] sm:$0xff]
                %258 = vst [vmem:[%s252 + $0x10] sm:$0xff] %v257
                %v259 = vld [vmem:[%s251 + $0x18] sm:$0xff]
                %260 = vst [vmem:[%s252 + $0x18] sm:$0xff] %v259
                %v261 = vld [vmem:[%s251 + $0x80] sm:$0xff]
                %262 = vst [vmem:[%s252 + $0x20] sm:$0xff] %v261
                %v263 = vld [vmem:[%s251 + $0x88] sm:$0xff]
                %264 = vst [vmem:[%s252 + $0x28] sm:$0xff] %v263
                %v265 = vld [vmem:[%s251 + $0x90] sm:$0xff]
                %266 = vst [vmem:[%s252 + $0x30] sm:$0xff] %v265
                %v267 = vld [vmem:[%s251 + $0x98] sm:$0xff]
                %268 = vst [vmem:[%s252 + $0x38] sm:$0xff] %v267
                %v269 = vld [vmem:[%s251 + $0x100] sm:$0xff]
                %270 = vst [vmem:[%s252 + $0x40] sm:$0xff] %v269
                %v271 = vld [vmem:[%s251 + $0x108] sm:$0xff]
                %272 = vst [vmem:[%s252 + $0x48] sm:$0xff] %v271
                %v273 = vld [vmem:[%s251 + $0x110] sm:$0xff]
                %274 = vst [vmem:[%s252 + $0x50] sm:$0xff] %v273
                %v275 = vld [vmem:[%s251 + $0x118] sm:$0xff]
                %276 = vst [vmem:[%s252 + $0x58] sm:$0xff] %v275
                %v277 = vld [vmem:[%s251 + $0x180] sm:$0xff]
                %278 = vst [vmem:[%s252 + $0x60] sm:$0xff] %v277
                %v279 = vld [vmem:[%s251 + $0x188] sm:$0xff]
                %280 = vst [vmem:[%s252 + $0x68] sm:$0xff] %v279
                %v281 = vld [vmem:[%s251 + $0x190] sm:$0xff]
                %282 = vst [vmem:[%s252 + $0x70] sm:$0xff] %v281
                %v283 = vld [vmem:[%s251 + $0x198] sm:$0xff]
                %284 = vst [vmem:[%s252 + $0x78] sm:$0xff] %v283
                %v285 = vld [vmem:[%s251 + $0x200] sm:$0xff]
                %286 = vst [vmem:[%s252 + $0x80] sm:$0xff] %v285
                %v287 = vld [vmem:[%s251 + $0x208] sm:$0xff]
                %288 = vst [vmem:[%s252 + $0x88] sm:$0xff] %v287
                %v289 = vld [vmem:[%s251 + $0x210] sm:$0xff]
                %290 = vst [vmem:[%s252 + $0x90] sm:$0xff] %v289
                %v291 = vld [vmem:[%s251 + $0x218] sm:$0xff]
                %292 = vst [vmem:[%s252 + $0x98] sm:$0xff] %v291
              $region41: #{_lambda_.3} parent=35 // loop_footer
                %s250 = sadd.s32 1, %s246
              $region42: #{_lambda_.3} parent=35 // loop_footer_branch
                %245 = sbr.rel target = $region38
              $region43: #{_lambda_.3} parent=35 // loop_exit
                _
            $region36: #{_lambda_.3} parent=27 // pred_fallthru
              _
          $region28: #{_lambda_.3} parent=23 // pred_fallthru
            _
          %345 = vnop
        $region24: #{_lambda_.3} parent=19 // pred_fallthru
          _
        // Predicated region
        $region59: #{_lambda_.3} parent=19 // pred_check
          %p346 = pneg %p85
        $region60: #{_lambda_.3} parent=19 // pred_check_branch
          %348 = sbr.rel (%p346) target = $region62
        $region61: #{_lambda_.3} parent=19 // pred_region
          %s349 = sand.u32 %s75, 1
          %s350 = sand.u32 %s75, 1
          %s351 = smul.addr %s350, 40
          %s352 = scalar_lea.vmem [#allocation3], %s351
          %s353 = smul.u32 %s23, 4
          %s354 = ssub.s32 %s353, 1
          %p355 = scmp.gt.s32.totalorder %s354, 0
          %s356 = scalar_select %p355, %s354, 0
          %s357 = smul.addr %s22, 80
          %s358 = sadd.s32 %s356, %s357
          %s359 = smul.addr %s358, 8
          %s360 = scalar_lea.vmem %s1, %s359
          // Predicated region
          $region63: #{_lambda_.3} parent=61 // pred_check
            _
          $region64: #{_lambda_.3} parent=61 // pred_check_branch
            %362 = sbr.rel (0) target = $region66
          $region65: #{_lambda_.3} parent=61 // pred_region
            // Predicated region
            $region67: #{_lambda_.3} parent=65 // pred_check
              _
            $region68: #{_lambda_.3} parent=65 // pred_check_branch
              %364 = sbr.rel (0) target = $region70
            $region69: #{_lambda_.3} parent=65 // pred_region
              // Predicated region
              $region82: #{_lambda_.3} parent=69 // pred_check
                _
              $region83: #{_lambda_.3} parent=69 // pred_check_branch
                %387 = sbr.rel (0) target = $region85
              $region84: #{_lambda_.3} parent=69 // pred_region
                loop: start=0, step=1, limit=1
                $region86: #{_lambda_.3} parent=84 // loop_pre_header
                  _
                $region87: #{_lambda_.3} parent=84 // loop_header
                  %s389 = sphi 0, %s393
                  %p390 = scmp.ge.s32.totalorder %s389, 1
                  %s394 = sphi %s360, %s360
                  %s395 = sphi %s352, %s352
                $region88: #{_lambda_.3} parent=84 // loop_header_branch
                  %392 = sbr.rel (%p390) target = $region92
                $region89: #{_lambda_.3} parent=84 // loop_body
                  %v396 = vld [vmem:[%s394] sm:$0xff]
                  %397 = vst [vmem:[%s395] sm:$0xff] %v396
                  %v398 = vld [vmem:[%s394 + $0x80] sm:$0xff]
                  %399 = vst [vmem:[%s395 + $0x8] sm:$0xff] %v398
                  %v400 = vld [vmem:[%s394 + $0x100] sm:$0xff]
                  %401 = vst [vmem:[%s395 + $0x10] sm:$0xff] %v400
                  %v402 = vld [vmem:[%s394 + $0x180] sm:$0xff]
                  %403 = vst [vmem:[%s395 + $0x18] sm:$0xff] %v402
                  %v404 = vld [vmem:[%s394 + $0x200] sm:$0xff]
                  %405 = vst [vmem:[%s395 + $0x20] sm:$0xff] %v404
                $region90: #{_lambda_.3} parent=84 // loop_footer
                  %s393 = sadd.s32 1, %s389
                $region91: #{_lambda_.3} parent=84 // loop_footer_branch
                  %388 = sbr.rel target = $region87
                $region92: #{_lambda_.3} parent=84 // loop_exit
                  _
              $region85: #{_lambda_.3} parent=69 // pred_fallthru
                _
              // Predicated region
              $region93: #{_lambda_.3} parent=69 // pred_check
                _
              $region94: #{_lambda_.3} parent=69 // pred_check_branch
                %407 = sbr.rel target = $region96
              $region95: #{_lambda_.3} parent=69 // pred_region
                _
              $region96: #{_lambda_.3} parent=69 // pred_fallthru
                _
            $region70: #{_lambda_.3} parent=65 // pred_fallthru
              _
            // Predicated region
            $region71: #{_lambda_.3} parent=65 // pred_check
              _
            $region72: #{_lambda_.3} parent=65 // pred_check_branch
              %366 = sbr.rel target = $region74
            $region73: #{_lambda_.3} parent=65 // pred_region
              loop: start=0, step=1, limit=1
              $region75: #{_lambda_.3} parent=73 // loop_pre_header
                _
              $region76: #{_lambda_.3} parent=73 // loop_header
                %s369 = sphi 0, %s373
                %p370 = scmp.ge.s32.totalorder %s369, 1
                %s374 = sphi %s360, %s360
                %s375 = sphi %s352, %s352
              $region77: #{_lambda_.3} parent=73 // loop_header_branch
                %372 = sbr.rel (%p370) target = $region81
              $region78: #{_lambda_.3} parent=73 // loop_body
                %v376 = vld [vmem:[%s374] sm:$0xff]
                %377 = vst [vmem:[%s375] sm:$0xff] %v376
                %v378 = vld [vmem:[%s374 + $0x80] sm:$0xff]
                %379 = vst [vmem:[%s375 + $0x8] sm:$0xff] %v378
                %v380 = vld [vmem:[%s374 + $0x100] sm:$0xff]
                %381 = vst [vmem:[%s375 + $0x10] sm:$0xff] %v380
                %v382 = vld [vmem:[%s374 + $0x180] sm:$0xff]
                %383 = vst [vmem:[%s375 + $0x18] sm:$0xff] %v382
                %v384 = vld [vmem:[%s374 + $0x200] sm:$0xff]
                %385 = vst [vmem:[%s375 + $0x20] sm:$0xff] %v384
              $region79: #{_lambda_.3} parent=73 // loop_footer
                %s373 = sadd.s32 1, %s369
              $region80: #{_lambda_.3} parent=73 // loop_footer_branch
                %368 = sbr.rel target = $region76
              $region81: #{_lambda_.3} parent=73 // loop_exit
                _
            $region74: #{_lambda_.3} parent=65 // pred_fallthru
              _
          $region66: #{_lambda_.3} parent=61 // pred_fallthru
            _
          %408 = vnop
        $region62: #{_lambda_.3} parent=19 // pred_fallthru
          _
        // Predicated region
        $region97: #{_lambda_.3} parent=19 // pred_check
          %p409 = pneg %p121
        $region98: #{_lambda_.3} parent=19 // pred_check_branch
          %411 = sbr.rel (%p409) target = $region100
        $region99: #{_lambda_.3} parent=19 // pred_region
          %s412 = sand.u32 %s111, 1
          %s413 = sand.u32 %s111, 1
          %s414 = smul.addr %s413, 40
          %s415 = scalar_lea.vmem [#allocation4], %s414
          %s416 = sadd.s32 %s23, 1
          %s417 = smul.u32 %s416, 4
          %p418 = scmp.lt.s32.totalorder %s417, 15
          %s419 = scalar_select %p418, %s417, 15
          %s420 = smul.addr %s22, 80
          %s421 = sadd.s32 %s419, %s420
          %s422 = smul.addr %s421, 8
          %s423 = scalar_lea.vmem %s2, %s422
          // Predicated region
          $region101: #{_lambda_.3} parent=99 // pred_check
            _
          $region102: #{_lambda_.3} parent=99 // pred_check_branch
            %425 = sbr.rel (0) target = $region104
          $region103: #{_lambda_.3} parent=99 // pred_region
            // Predicated region
            $region105: #{_lambda_.3} parent=103 // pred_check
              _
            $region106: #{_lambda_.3} parent=103 // pred_check_branch
              %427 = sbr.rel (0) target = $region108
            $region107: #{_lambda_.3} parent=103 // pred_region
              // Predicated region
              $region120: #{_lambda_.3} parent=107 // pred_check
                _
              $region121: #{_lambda_.3} parent=107 // pred_check_branch
                %450 = sbr.rel (0) target = $region123
              $region122: #{_lambda_.3} parent=107 // pred_region
                loop: start=0, step=1, limit=1
                $region124: #{_lambda_.3} parent=122 // loop_pre_header
                  _
                $region125: #{_lambda_.3} parent=122 // loop_header
                  %s452 = sphi 0, %s456
                  %p453 = scmp.ge.s32.totalorder %s452, 1
                  %s457 = sphi %s423, %s423
                  %s458 = sphi %s415, %s415
                $region126: #{_lambda_.3} parent=122 // loop_header_branch
                  %455 = sbr.rel (%p453) target = $region130
                $region127: #{_lambda_.3} parent=122 // loop_body
                  %v459 = vld [vmem:[%s457] sm:$0xff]
                  %460 = vst [vmem:[%s458] sm:$0xff] %v459
                  %v461 = vld [vmem:[%s457 + $0x80] sm:$0xff]
                  %462 = vst [vmem:[%s458 + $0x8] sm:$0xff] %v461
                  %v463 = vld [vmem:[%s457 + $0x100] sm:$0xff]
                  %464 = vst [vmem:[%s458 + $0x10] sm:$0xff] %v463
                  %v465 = vld [vmem:[%s457 + $0x180] sm:$0xff]
                  %466 = vst [vmem:[%s458 + $0x18] sm:$0xff] %v465
                  %v467 = vld [vmem:[%s457 + $0x200] sm:$0xff]
                  %468 = vst [vmem:[%s458 + $0x20] sm:$0xff] %v467
                $region128: #{_lambda_.3} parent=122 // loop_footer
                  %s456 = sadd.s32 1, %s452
                $region129: #{_lambda_.3} parent=122 // loop_footer_branch
                  %451 = sbr.rel target = $region125
                $region130: #{_lambda_.3} parent=122 // loop_exit
                  _
              $region123: #{_lambda_.3} parent=107 // pred_fallthru
                _
              // Predicated region
              $region131: #{_lambda_.3} parent=107 // pred_check
                _
              $region132: #{_lambda_.3} parent=107 // pred_check_branch
                %470 = sbr.rel target = $region134
              $region133: #{_lambda_.3} parent=107 // pred_region
                _
              $region134: #{_lambda_.3} parent=107 // pred_fallthru
                _
            $region108: #{_lambda_.3} parent=103 // pred_fallthru
              _
            // Predicated region
            $region109: #{_lambda_.3} parent=103 // pred_check
              _
            $region110: #{_lambda_.3} parent=103 // pred_check_branch
              %429 = sbr.rel target = $region112
            $region111: #{_lambda_.3} parent=103 // pred_region
              loop: start=0, step=1, limit=1
              $region113: #{_lambda_.3} parent=111 // loop_pre_header
                _
              $region114: #{_lambda_.3} parent=111 // loop_header
                %s432 = sphi 0, %s436
                %p433 = scmp.ge.s32.totalorder %s432, 1
                %s437 = sphi %s423, %s423
                %s438 = sphi %s415, %s415
              $region115: #{_lambda_.3} parent=111 // loop_header_branch
                %435 = sbr.rel (%p433) target = $region119
              $region116: #{_lambda_.3} parent=111 // loop_body
                %v439 = vld [vmem:[%s437] sm:$0xff]
                %440 = vst [vmem:[%s438] sm:$0xff] %v439
                %v441 = vld [vmem:[%s437 + $0x80] sm:$0xff]
                %442 = vst [vmem:[%s438 + $0x8] sm:$0xff] %v441
                %v443 = vld [vmem:[%s437 + $0x100] sm:$0xff]
                %444 = vst [vmem:[%s438 + $0x10] sm:$0xff] %v443
                %v445 = vld [vmem:[%s437 + $0x180] sm:$0xff]
                %446 = vst [vmem:[%s438 + $0x18] sm:$0xff] %v445
                %v447 = vld [vmem:[%s437 + $0x200] sm:$0xff]
                %448 = vst [vmem:[%s438 + $0x20] sm:$0xff] %v447
              $region117: #{_lambda_.3} parent=111 // loop_footer
                %s436 = sadd.s32 1, %s432
              $region118: #{_lambda_.3} parent=111 // loop_footer_branch
                %431 = sbr.rel target = $region114
              $region119: #{_lambda_.3} parent=111 // loop_exit
                _
            $region112: #{_lambda_.3} parent=103 // pred_fallthru
              _
          $region104: #{_lambda_.3} parent=99 // pred_fallthru
            _
          %471 = vnop
        $region100: #{_lambda_.3} parent=19 // pred_fallthru
          _
      $region20: #{_lambda_.3} parent=5 // pred_fallthru
        _
      %p472 = scmp.le.s32.totalorder 1, %s15
      %p473 = scmp.lt.s32.totalorder %s15, 9
      %p474 = pnand %p472, %p473
      %p475 = pneg %p474
      // Predicated region
      $region135: #{_lambda_.3} parent=5 // pred_check
        _
      $region136: #{_lambda_.3} parent=5 // pred_check_branch
        %477 = sbr.rel (%p474) target = $region138
      $region137: #{_lambda_.3} parent=5 // pred_region
        %s478 = ssub.s32 %s15, 1
        %s479 = sand.u32 %s42, 1
        %s480 = sand.u32 %s42, 1
        %s481 = smul.addr %s480, 160
        %s482 = scalar_lea.vmem [#allocation2], %s481
        // Predicated region
        $region139: #{_lambda_.3} parent=137 // pred_check
          %p483 = pneg %p55
        $region140: #{_lambda_.3} parent=137 // pred_check_branch
          %485 = sbr.rel (%p483) target = $region142
        $region141: #{_lambda_.3} parent=137 // pred_region
          _
        $region142: #{_lambda_.3} parent=137 // pred_fallthru
          _
        %s486 = sand.u32 %s78, 1
        %s487 = sand.u32 %s78, 1
        %s488 = smul.addr %s487, 40
        %s489 = scalar_lea.vmem [#allocation3], %s488
        // Predicated region
        $region143: #{_lambda_.3} parent=137 // pred_check
          %p490 = pneg %p91
        $region144: #{_lambda_.3} parent=137 // pred_check_branch
          %492 = sbr.rel (%p490) target = $region146
        $region145: #{_lambda_.3} parent=137 // pred_region
          _
        $region146: #{_lambda_.3} parent=137 // pred_fallthru
          _
        %s493 = sand.u32 %s114, 1
        %s494 = sand.u32 %s114, 1
        %s495 = smul.addr %s494, 40
        %s496 = scalar_lea.vmem [#allocation4], %s495
        // Predicated region
        $region147: #{_lambda_.3} parent=137 // pred_check
          %p497 = pneg %p127
        $region148: #{_lambda_.3} parent=137 // pred_check_branch
          %499 = sbr.rel (%p497) target = $region150
        $region149: #{_lambda_.3} parent=137 // pred_region
          _
        $region150: #{_lambda_.3} parent=137 // pred_fallthru
          _
        %s500 = sand.u32 %s42, 1
        %s501 = sand.u32 %s42, 1
        %s502 = smul.addr %s501, 160
        %s503 = scalar_lea.vmem [#allocation2], %s502
        %p504 = pneg %p55
        %p505 = pneg %p52
        %s506 = sand.u32 %s78, 1
        %s507 = sand.u32 %s78, 1
        %s508 = smul.addr %s507, 40
        %s509 = scalar_lea.vmem [#allocation3], %s508
        %p510 = pneg %p91
        %p511 = pneg %p88
        %s512 = sand.u32 %s114, 1
        %s513 = sand.u32 %s114, 1
        %s514 = smul.addr %s513, 40
        %s515 = scalar_lea.vmem [#allocation4], %s514
        %p516 = pneg %p127
        %p517 = pneg %p124
        %p518 = pneg %p148
        %p519 = pneg %p145
        %p520 = pneg %p176
        %p521 = pneg %p173
        %s522 = sand.u32 %s163, 1
        %s523 = sand.u32 %s163, 1
        %s524 = smul.addr %s523, 32
        %s525 = scalar_lea.vmem [#allocation5], %s524
        %p526 = pneg %p204
        %p527 = pneg %p201
        %s528 = sand.u32 %s191, 1
        %s529 = scalar_lea.sflag [#allocation7], %s528
        %s530 = sand.u32 %s191, 1
        %s531 = smul.addr %s530, 128
        %s532 = scalar_lea.vmem [#allocation6], %s531
        %s533 = smul.u32 4, %s25
        %s534 = smul.u32 %s25, 4
        %s535 = ssub.s32 %s534, 1
        %p536 = scmp.gt.s32.totalorder %s535, 0
        %s537 = scalar_select %p536, %s535, 0
        %s538 = sadd.s32 %s25, 1
        %s539 = smul.u32 %s538, 4
        %p540 = scmp.lt.s32.totalorder %s539, 15
        %s541 = scalar_select %p540, %s539, 15
        %s542 = smul.u32 4, %s25
        %v545 = vld [vmem:[%s482] sm:$0xff]
        %v546 = vld [vmem:[%s482 + $0x8] sm:$0xff]
        %v547 = vld [vmem:[%s482 + $0x10] sm:$0xff]
        %v548 = vld [vmem:[%s482 + $0x18] sm:$0xff]
        %v549 = vld [vmem:[%s482 + $0x20] sm:$0xff]
        %v550 = vld [vmem:[%s482 + $0x28] sm:$0xff]
        %v551 = vld [vmem:[%s482 + $0x30] sm:$0xff]
        %v552 = vld [vmem:[%s482 + $0x38] sm:$0xff]
        %v553 = vld [vmem:[%s482 + $0x40] sm:$0xff]
        %v554 = vld [vmem:[%s482 + $0x48] sm:$0xff]
        %v555 = vld [vmem:[%s482 + $0x50] sm:$0xff]
        %v556 = vld [vmem:[%s482 + $0x58] sm:$0xff]
        %v557 = vld [vmem:[%s482 + $0x60] sm:$0xff]
        %v558 = vld [vmem:[%s482 + $0x68] sm:$0xff]
        %v559 = vld [vmem:[%s482 + $0x70] sm:$0xff]
        %v560 = vld [vmem:[%s482 + $0x78] sm:$0xff]
        %v561 = vld [vmem:[%s482 + $0x80] sm:$0xff]
        %v562 = vld [vmem:[%s482 + $0x88] sm:$0xff]
        %v563 = vld [vmem:[%s482 + $0x90] sm:$0xff]
        %v564 = vld [vmem:[%s482 + $0x98] sm:$0xff]
        %v565 = vld [vmem:[%s3] sm:$0x1]
        %v566 = vld [vmem:[%s3 + $0x1] sm:$0x1]
        %v567 = vld [vmem:[%s3 + $0x2] sm:$0x1]
        %v568 = vld [vmem:[%s3 + $0x3] sm:$0x1]
        %v569 = vsub.f32 %v545, %v549
        %v570 = vsub.f32 %v546, %v550
        %v571 = vsub.f32 %v547, %v551
        %v572 = vsub.f32 %v548, %v552
        %v573 = vsub.f32 %v549, %v553
        %v574 = vsub.f32 %v550, %v554
        %v575 = vsub.f32 %v551, %v555
        %v576 = vsub.f32 %v552, %v556
        %v577 = vsub.f32 %v553, %v557
        %v578 = vsub.f32 %v554, %v558
        %v579 = vsub.f32 %v555, %v559
        %v580 = vsub.f32 %v556, %v560
        %v581 = vsub.f32 %v557, %v561
        %v582 = vsub.f32 %v558, %v562
        %v583 = vsub.f32 %v559, %v563
        %v584 = vsub.f32 %v560, %v564
        %v589 = vlaneseq
        %v590 = vshrl.u32 %v589, 7
        %v591 = vsub.s32 0, %v590
        %v592 = vrot.slane %v565, %v591
        %v593 = vlaneseq
        %v594 = vshrl.u32 %v593, 7
        %v595 = vsub.s32 0, %v594
        %v596 = vrot.slane %v566, %v595
        %v597 = vlaneseq
        %v598 = vshrl.u32 %v597, 7
        %v599 = vsub.s32 0, %v598
        %v600 = vrot.slane %v567, %v599
        %v601 = vlaneseq
        %v602 = vshrl.u32 %v601, 7
        %v603 = vsub.s32 0, %v602
        %v604 = vrot.slane %v568, %v603
        %605 = vset.pattern.permute.xlu0 0
        %606 = vperm.xlu0 %605, %v592
        %v607 = vpop.permute.xlu0 %606
        %609 = vset.pattern.permute.xlu0 0
        %610 = vperm.xlu0 %609, %v596
        %v611 = vpop.permute.xlu0 %610
        %613 = vset.pattern.permute.xlu0 0
        %614 = vperm.xlu0 %613, %v600
        %v615 = vpop.permute.xlu0 %614
        %617 = vset.pattern.permute.xlu0 0
        %618 = vperm.xlu0 %617, %v604
        %v619 = vpop.permute.xlu0 %618
        %v621 = vmul.f32 %v569, %v607
        %v622 = vmul.f32 %v570, %v607
        %v623 = vmul.f32 %v571, %v607
        %v624 = vmul.f32 %v572, %v607
        %v625 = vmul.f32 %v573, %v611
        %v626 = vmul.f32 %v574, %v611
        %v627 = vmul.f32 %v575, %v611
        %v628 = vmul.f32 %v576, %v611
        %v629 = vmul.f32 %v577, %v615
        %v630 = vmul.f32 %v578, %v615
        %v631 = vmul.f32 %v579, %v615
        %v632 = vmul.f32 %v580, %v615
        %v633 = vmul.f32 %v581, %v619
        %v634 = vmul.f32 %v582, %v619
        %v635 = vmul.f32 %v583, %v619
        %v636 = vmul.f32 %v584, %v619
        %s637 = smul.u32 %s25, 32
        %v638 = vlaneseq
        %v639 = vshrl.u32 %v638, 7
        %v640 = vadd.s32 %v639, 8
        %v641 = vadd.s32 %v639, 16
        %v642 = vadd.s32 %v639, 24
        %v643 = vstv %s637
        %v644 = vadd.s32 %v643, %v639
        %v645 = vadd.s32 %v643, %v640
        %v646 = vadd.s32 %v643, %v641
        %v647 = vadd.s32 %v643, %v642
        %vm648 = vcmp.lt.s32.totalorder %v644, 128
        %vm649 = vcmp.lt.s32.totalorder %v645, 128
        %vm650 = vcmp.lt.s32.totalorder %v646, 128
        %vm651 = vcmp.lt.s32.totalorder %v647, 128
        %v652 = vsel %vm648, 1, 0
        %v653 = vsel %vm649, 1, 0
        %v654 = vsel %vm650, 1, 0
        %v655 = vsel %vm651, 1, 0
        %vm656 = vcmp.eq.s32.totalorder %v652, 1
        %vm657 = vcmp.eq.s32.totalorder %v653, 1
        %vm658 = vcmp.eq.s32.totalorder %v654, 1
        %vm659 = vcmp.eq.s32.totalorder %v655, 1
        %v660 = vsel %vm656, %v621, -inf
        %v661 = vsel %vm657, %v622, -inf
        %v662 = vsel %vm658, %v623, -inf
        %v663 = vsel %vm659, %v624, -inf
        %v664 = vsel %vm656, %v625, -inf
        %v665 = vsel %vm657, %v626, -inf
        %v666 = vsel %vm658, %v627, -inf
        %v667 = vsel %vm659, %v628, -inf
        %v668 = vsel %vm656, %v629, -inf
        %v669 = vsel %vm657, %v630, -inf
        %v670 = vsel %vm658, %v631, -inf
        %v671 = vsel %vm659, %v632, -inf
        %v672 = vsel %vm656, %v633, -inf
        %v673 = vsel %vm657, %v634, -inf
        %v674 = vsel %vm658, %v635, -inf
        %v675 = vsel %vm659, %v636, -inf
        %v676 = vld [vmem:[%s489] sm:$0xff]
        %v677 = vld [vmem:[%s489 + $0x8] sm:$0xff]
        %v678 = vld [vmem:[%s489 + $0x10] sm:$0xff]
        %v679 = vld [vmem:[%s489 + $0x18] sm:$0xff]
        %v680 = vld [vmem:[%s489 + $0x20] sm:$0xff]
        %v681 = vld [vmem:[%s496] sm:$0xff]
        %v682 = vld [vmem:[%s496 + $0x8] sm:$0xff]
        %v683 = vld [vmem:[%s496 + $0x10] sm:$0xff]
        %v684 = vld [vmem:[%s496 + $0x18] sm:$0xff]
        %v685 = vld [vmem:[%s496 + $0x20] sm:$0xff]
        %v686 = vsub.f32 %v676, %v677
        %v687 = vsub.f32 %v677, %v678
        %v688 = vsub.f32 %v678, %v679
        %v689 = vsub.f32 %v679, %v680
        %690 = vset.pattern.permute.xlu0 0
        %691 = vperm.xlu0 %690, %v565
        %v692 = vpop.permute.xlu0 %691
        %v694 = vlaneseq
        %v695 = vshrl.u32 %v694, 7
        %v696 = vsub.s32 0, %v695
        %v697 = vrot.slane %v692, %v696
        %698 = vset.pattern.permute.xlu0 0
        %699 = vperm.xlu0 %698, %v566
        %v700 = vpop.permute.xlu0 %699
        %v702 = vlaneseq
        %v703 = vshrl.u32 %v702, 7
        %v704 = vsub.s32 0, %v703
        %v705 = vrot.slane %v700, %v704
        %706 = vset.pattern.permute.xlu0 0
        %707 = vperm.xlu0 %706, %v567
        %v708 = vpop.permute.xlu0 %707
        %v710 = vlaneseq
        %v711 = vshrl.u32 %v710, 7
        %v712 = vsub.s32 0, %v711
        %v713 = vrot.slane %v708, %v712
        %714 = vset.pattern.permute.xlu0 0
        %715 = vperm.xlu0 %714, %v568
        %v716 = vpop.permute.xlu0 %715
        %v718 = vlaneseq
        %v719 = vshrl.u32 %v718, 7
        %v720 = vsub.s32 0, %v719
        %v721 = vrot.slane %v716, %v720
        %v722 = vmul.f32 %v686, %v697
        %v723 = vmul.f32 %v687, %v705
        %v724 = vmul.f32 %v688, %v713
        %v725 = vmul.f32 %v689, %v721
        %v726 = vsub.f32 %v681, %v682
        %v727 = vsub.f32 %v682, %v683
        %v728 = vsub.f32 %v683, %v684
        %v729 = vsub.f32 %v684, %v685
        %v730 = vmul.f32 %v726, %v697
        %v731 = vmul.f32 %v727, %v705
        %v732 = vmul.f32 %v728, %v713
        %v733 = vmul.f32 %v729, %v721
        %v734 = vsub.s32 %v644, 1
        %v735 = vadd.s32 %v644, 32
        %vm736 = vcmp.ge.s32.totalorder %v734, 0
        %v737 = vsel %vm736, 1, 0
        %vm738 = vcmp.eq.s32.totalorder %v737, 1
        %v743 = vrot.slane %v722, 7
        %v744 = vrot.slane %v723, 7
        %v745 = vrot.slane %v724, 7
        %v746 = vrot.slane %v725, 7
        %v751 = vsel %vm738, %v743, -inf
        %v752 = vsel %vm738, %v744, -inf
        %v753 = vsel %vm738, %v745, -inf
        %v754 = vsel %vm738, %v746, -inf
        %vm755 = vcmp.lt.s32.totalorder %v735, 128
        %v756 = vsel %vm755, 1, 0
        %vm757 = vcmp.eq.s32.totalorder %v756, 1
        %v758 = vsel %vm757, %v730, -inf
        %v759 = vsel %vm757, %v731, -inf
        %v760 = vsel %vm757, %v732, -inf
        %v761 = vsel %vm757, %v733, -inf
        %vm778 = vcmask 1040384
        %v779 = vrot.slane %v660, 7
        %v780 = vrot.slane %v661, 7
        %v781 = vsel %vm778, %v779, %v780
        %v782 = vrot.slane %v662, 7
        %v783 = vsel %vm778, %v780, %v782
        %v784 = vrot.slane %v663, 7
        %v785 = vsel %vm778, %v782, %v784
        %v786 = vrot.slane %v664, 7
        %v787 = vrot.slane %v665, 7
        %v788 = vsel %vm778, %v786, %v787
        %v789 = vrot.slane %v666, 7
        %v790 = vsel %vm778, %v787, %v789
        %v791 = vrot.slane %v667, 7
        %v792 = vsel %vm778, %v789, %v791
        %v793 = vrot.slane %v668, 7
        %v794 = vrot.slane %v669, 7
        %v795 = vsel %vm778, %v793, %v794
        %v796 = vrot.slane %v670, 7
        %v797 = vsel %vm778, %v794, %v796
        %v798 = vrot.slane %v671, 7
        %v799 = vsel %vm778, %v796, %v798
        %v800 = vrot.slane %v672, 7
        %v801 = vrot.slane %v673, 7
        %v802 = vsel %vm778, %v800, %v801
        %v803 = vrot.slane %v674, 7
        %v804 = vsel %vm778, %v801, %v803
        %v805 = vrot.slane %v675, 7
        %v806 = vsel %vm778, %v803, %v805
        %v823 = vsel %vm778, %v751, %v779
        %v824 = vsel %vm778, %v752, %v786
        %v825 = vsel %vm778, %v753, %v793
        %v826 = vsel %vm778, %v754, %v800
        %vm827 = vcmask 1046528
        %v828 = vrot.slane %v660, 1
        %v829 = vrot.slane %v661, 1
        %v830 = vsel %vm827, %v828, %v829
        %v831 = vrot.slane %v662, 1
        %v832 = vsel %vm827, %v829, %v831
        %v833 = vrot.slane %v663, 1
        %v834 = vsel %vm827, %v831, %v833
        %v835 = vrot.slane %v664, 1
        %v836 = vrot.slane %v665, 1
        %v837 = vsel %vm827, %v835, %v836
        %v838 = vrot.slane %v666, 1
        %v839 = vsel %vm827, %v836, %v838
        %v840 = vrot.slane %v667, 1
        %v841 = vsel %vm827, %v838, %v840
        %v842 = vrot.slane %v668, 1
        %v843 = vrot.slane %v669, 1
        %v844 = vsel %vm827, %v842, %v843
        %v845 = vrot.slane %v670, 1
        %v846 = vsel %vm827, %v843, %v845
        %v847 = vrot.slane %v671, 1
        %v848 = vsel %vm827, %v845, %v847
        %v849 = vrot.slane %v672, 1
        %v850 = vrot.slane %v673, 1
        %v851 = vsel %vm827, %v849, %v850
        %v852 = vrot.slane %v674, 1
        %v853 = vsel %vm827, %v850, %v852
        %v854 = vrot.slane %v675, 1
        %v855 = vsel %vm827, %v852, %v854
        %v876 = vrot.slane %v758, 1
        %v877 = vrot.slane %v759, 1
        %v878 = vrot.slane %v760, 1
        %v879 = vrot.slane %v761, 1
        %v884 = vsel %vm827, %v833, %v876
        %v885 = vsel %vm827, %v840, %v877
        %v886 = vsel %vm827, %v847, %v878
        %v887 = vsel %vm827, %v854, %v879
        %v888 = vmax.f32 %v823, %v660
        %v889 = vmax.f32 %v781, %v661
        %v890 = vmax.f32 %v783, %v662
        %v891 = vmax.f32 %v785, %v663
        %v892 = vmax.f32 %v824, %v664
        %v893 = vmax.f32 %v788, %v665
        %v894 = vmax.f32 %v790, %v666
        %v895 = vmax.f32 %v792, %v667
        %v896 = vmax.f32 %v825, %v668
        %v897 = vmax.f32 %v795, %v669
        %v898 = vmax.f32 %v797, %v670
        %v899 = vmax.f32 %v799, %v671
        %v900 = vmax.f32 %v826, %v672
        %v901 = vmax.f32 %v802, %v673
        %v902 = vmax.f32 %v804, %v674
        %v903 = vmax.f32 %v806, %v675
        %v904 = vmax.f32 %v888, %v830
        %v905 = vmax.f32 %v889, %v832
        %v906 = vmax.f32 %v890, %v834
        %v907 = vmax.f32 %v891, %v884
        %v908 = vmax.f32 %v892, %v837
        %v909 = vmax.f32 %v893, %v839
        %v910 = vmax.f32 %v894, %v841
        %v911 = vmax.f32 %v895, %v885
        %v912 = vmax.f32 %v896, %v844
        %v913 = vmax.f32 %v897, %v846
        %v914 = vmax.f32 %v898, %v848
        %v915 = vmax.f32 %v899, %v886
        %v916 = vmax.f32 %v900, %v851
        %v917 = vmax.f32 %v901, %v853
        %v918 = vmax.f32 %v902, %v855
        %v919 = vmax.f32 %v903, %v887
        %920 = vrot.lane.b32.xlu0 %v904, 1
        %v921 = vpop.permute.xlu0 %920
        %922 = vrot.lane.b32.xlu0 %v905, 1
        %v923 = vpop.permute.xlu0 %922
        %924 = vrot.lane.b32.xlu0 %v906, 1
        %v925 = vpop.permute.xlu0 %924
        %926 = vrot.lane.b32.xlu0 %v907, 1
        %v927 = vpop.permute.xlu0 %926
        %928 = vrot.lane.b32.xlu0 %v908, 1
        %v929 = vpop.permute.xlu0 %928
        %930 = vrot.lane.b32.xlu0 %v909, 1
        %v931 = vpop.permute.xlu0 %930
        %932 = vrot.lane.b32.xlu0 %v910, 1
        %v933 = vpop.permute.xlu0 %932
        %934 = vrot.lane.b32.xlu0 %v911, 1
        %v935 = vpop.permute.xlu0 %934
        %936 = vrot.lane.b32.xlu0 %v912, 1
        %v937 = vpop.permute.xlu0 %936
        %938 = vrot.lane.b32.xlu0 %v913, 1
        %v939 = vpop.permute.xlu0 %938
        %940 = vrot.lane.b32.xlu0 %v914, 1
        %v941 = vpop.permute.xlu0 %940
        %942 = vrot.lane.b32.xlu0 %v915, 1
        %v943 = vpop.permute.xlu0 %942
        %944 = vrot.lane.b32.xlu0 %v916, 1
        %v945 = vpop.permute.xlu0 %944
        %946 = vrot.lane.b32.xlu0 %v917, 1
        %v947 = vpop.permute.xlu0 %946
        %948 = vrot.lane.b32.xlu0 %v918, 1
        %v949 = vpop.permute.xlu0 %948
        %950 = vrot.lane.b32.xlu0 %v919, 1
        %v951 = vpop.permute.xlu0 %950
        %952 = vrot.lane.b32.xlu0 %v904, 127
        %v953 = vpop.permute.xlu0 %952
        %954 = vrot.lane.b32.xlu0 %v905, 127
        %v955 = vpop.permute.xlu0 %954
        %956 = vrot.lane.b32.xlu0 %v906, 127
        %v957 = vpop.permute.xlu0 %956
        %958 = vrot.lane.b32.xlu0 %v907, 127
        %v959 = vpop.permute.xlu0 %958
        %960 = vrot.lane.b32.xlu0 %v908, 127
        %v961 = vpop.permute.xlu0 %960
        %962 = vrot.lane.b32.xlu0 %v909, 127
        %v963 = vpop.permute.xlu0 %962
        %964 = vrot.lane.b32.xlu0 %v910, 127
        %v965 = vpop.permute.xlu0 %964
        %966 = vrot.lane.b32.xlu0 %v911, 127
        %v967 = vpop.permute.xlu0 %966
        %968 = vrot.lane.b32.xlu0 %v912, 127
        %v969 = vpop.permute.xlu0 %968
        %970 = vrot.lane.b32.xlu0 %v913, 127
        %v971 = vpop.permute.xlu0 %970
        %972 = vrot.lane.b32.xlu0 %v914, 127
        %v973 = vpop.permute.xlu0 %972
        %974 = vrot.lane.b32.xlu0 %v915, 127
        %v975 = vpop.permute.xlu0 %974
        %976 = vrot.lane.b32.xlu0 %v916, 127
        %v977 = vpop.permute.xlu0 %976
        %978 = vrot.lane.b32.xlu0 %v917, 127
        %v979 = vpop.permute.xlu0 %978
        %980 = vrot.lane.b32.xlu0 %v918, 127
        %v981 = vpop.permute.xlu0 %980
        %982 = vrot.lane.b32.xlu0 %v919, 127
        %v983 = vpop.permute.xlu0 %982
        %v984 = vmax.f32 %v904, %v921
        %v985 = vmax.f32 %v905, %v923
        %v986 = vmax.f32 %v906, %v925
        %v987 = vmax.f32 %v907, %v927
        %v988 = vmax.f32 %v908, %v929
        %v989 = vmax.f32 %v909, %v931
        %v990 = vmax.f32 %v910, %v933
        %v991 = vmax.f32 %v911, %v935
        %v992 = vmax.f32 %v912, %v937
        %v993 = vmax.f32 %v913, %v939
        %v994 = vmax.f32 %v914, %v941
        %v995 = vmax.f32 %v915, %v943
        %v996 = vmax.f32 %v916, %v945
        %v997 = vmax.f32 %v917, %v947
        %v998 = vmax.f32 %v918, %v949
        %v999 = vmax.f32 %v919, %v951
        %v1000 = vmax.f32 %v984, %v953
        %v1001 = vmax.f32 %v985, %v955
        %v1002 = vmax.f32 %v986, %v957
        %v1003 = vmax.f32 %v987, %v959
        %v1004 = vmax.f32 %v988, %v961
        %v1005 = vmax.f32 %v989, %v963
        %v1006 = vmax.f32 %v990, %v965
        %v1007 = vmax.f32 %v991, %v967
        %v1008 = vmax.f32 %v992, %v969
        %v1009 = vmax.f32 %v993, %v971
        %v1010 = vmax.f32 %v994, %v973
        %v1011 = vmax.f32 %v995, %v975
        %v1012 = vmax.f32 %v996, %v977
        %v1013 = vmax.f32 %v997, %v979
        %v1014 = vmax.f32 %v998, %v981
        %v1015 = vmax.f32 %v999, %v983
        %v1016 = vlaneseq
        %v1017 = vand.u32 %v1016, 127
        %vm1018 = vcmask 15360
        %v1019 = vsel %vm1018, %v904, -inf
        %1020 = vmax.xlane.f32.xlu0 %v1019
        %v1021 = vpop.xlane.xlu0 %1020
        %v1022 = vsel %vm1018, %v905, -inf
        %1023 = vmax.xlane.f32.xlu0 %v1022
        %v1024 = vpop.xlane.xlu0 %1023
        %v1025 = vsel %vm1018, %v906, -inf
        %1026 = vmax.xlane.f32.xlu0 %v1025
        %v1027 = vpop.xlane.xlu0 %1026
        %v1028 = vsel %vm1018, %v907, -inf
        %1029 = vmax.xlane.f32.xlu0 %v1028
        %v1030 = vpop.xlane.xlu0 %1029
        %v1031 = vsel %vm1018, %v908, -inf
        %1032 = vmax.xlane.f32.xlu0 %v1031
        %v1033 = vpop.xlane.xlu0 %1032
        %v1034 = vsel %vm1018, %v909, -inf
        %1035 = vmax.xlane.f32.xlu0 %v1034
        %v1036 = vpop.xlane.xlu0 %1035
        %v1037 = vsel %vm1018, %v910, -inf
        %1038 = vmax.xlane.f32.xlu0 %v1037
        %v1039 = vpop.xlane.xlu0 %1038
        %v1040 = vsel %vm1018, %v911, -inf
        %1041 = vmax.xlane.f32.xlu0 %v1040
        %v1042 = vpop.xlane.xlu0 %1041
        %v1043 = vsel %vm1018, %v912, -inf
        %1044 = vmax.xlane.f32.xlu0 %v1043
        %v1045 = vpop.xlane.xlu0 %1044
        %v1046 = vsel %vm1018, %v913, -inf
        %1047 = vmax.xlane.f32.xlu0 %v1046
        %v1048 = vpop.xlane.xlu0 %1047
        %v1049 = vsel %vm1018, %v914, -inf
        %1050 = vmax.xlane.f32.xlu0 %v1049
        %v1051 = vpop.xlane.xlu0 %1050
        %v1052 = vsel %vm1018, %v915, -inf
        %1053 = vmax.xlane.f32.xlu0 %v1052
        %v1054 = vpop.xlane.xlu0 %1053
        %v1055 = vsel %vm1018, %v916, -inf
        %1056 = vmax.xlane.f32.xlu0 %v1055
        %v1057 = vpop.xlane.xlu0 %1056
        %v1058 = vsel %vm1018, %v917, -inf
        %1059 = vmax.xlane.f32.xlu0 %v1058
        %v1060 = vpop.xlane.xlu0 %1059
        %v1061 = vsel %vm1018, %v918, -inf
        %1062 = vmax.xlane.f32.xlu0 %v1061
        %v1063 = vpop.xlane.xlu0 %1062
        %v1064 = vsel %vm1018, %v919, -inf
        %1065 = vmax.xlane.f32.xlu0 %v1064
        %v1066 = vpop.xlane.xlu0 %1065
        %vm1067 = vcmask 1048560
        %v1068 = vsel %vm1067, %v904, -inf
        %1069 = vmax.xlane.f32.xlu0 %v1068
        %v1070 = vpop.xlane.xlu0 %1069
        %v1071 = vsel %vm1067, %v905, -inf
        %1072 = vmax.xlane.f32.xlu0 %v1071
        %v1073 = vpop.xlane.xlu0 %1072
        %v1074 = vsel %vm1067, %v906, -inf
        %1075 = vmax.xlane.f32.xlu0 %v1074
        %v1076 = vpop.xlane.xlu0 %1075
        %v1077 = vsel %vm1067, %v907, -inf
        %1078 = vmax.xlane.f32.xlu0 %v1077
        %v1079 = vpop.xlane.xlu0 %1078
        %v1080 = vsel %vm1067, %v908, -inf
        %1081 = vmax.xlane.f32.xlu0 %v1080
        %v1082 = vpop.xlane.xlu0 %1081
        %v1083 = vsel %vm1067, %v909, -inf
        %1084 = vmax.xlane.f32.xlu0 %v1083
        %v1085 = vpop.xlane.xlu0 %1084
        %v1086 = vsel %vm1067, %v910, -inf
        %1087 = vmax.xlane.f32.xlu0 %v1086
        %v1088 = vpop.xlane.xlu0 %1087
        %v1089 = vsel %vm1067, %v911, -inf
        %1090 = vmax.xlane.f32.xlu0 %v1089
        %v1091 = vpop.xlane.xlu0 %1090
        %v1092 = vsel %vm1067, %v912, -inf
        %1093 = vmax.xlane.f32.xlu0 %v1092
        %v1094 = vpop.xlane.xlu0 %1093
        %v1095 = vsel %vm1067, %v913, -inf
        %1096 = vmax.xlane.f32.xlu0 %v1095
        %v1097 = vpop.xlane.xlu0 %1096
        %v1098 = vsel %vm1067, %v914, -inf
        %1099 = vmax.xlane.f32.xlu0 %v1098
        %v1100 = vpop.xlane.xlu0 %1099
        %v1101 = vsel %vm1067, %v915, -inf
        %1102 = vmax.xlane.f32.xlu0 %v1101
        %v1103 = vpop.xlane.xlu0 %1102
        %v1104 = vsel %vm1067, %v916, -inf
        %1105 = vmax.xlane.f32.xlu0 %v1104
        %v1106 = vpop.xlane.xlu0 %1105
        %v1107 = vsel %vm1067, %v917, -inf
        %1108 = vmax.xlane.f32.xlu0 %v1107
        %v1109 = vpop.xlane.xlu0 %1108
        %v1110 = vsel %vm1067, %v918, -inf
        %1111 = vmax.xlane.f32.xlu0 %v1110
        %v1112 = vpop.xlane.xlu0 %1111
        %v1113 = vsel %vm1067, %v919, -inf
        %1114 = vmax.xlane.f32.xlu0 %v1113
        %v1115 = vpop.xlane.xlu0 %1114
        %vm1116 = vcmp.eq.s32.totalorder %v1017, 0
        %vm1117 = vcmp.eq.s32.totalorder %v1017, 127
        %v1118 = vsel %vm1117, 1, 0
        %vm1119 = vcmp.eq.s32.totalorder %v1118, 1
        %v1120 = vsel %vm1119, %v1070, %v1000
        %v1121 = vsel %vm1119, %v1073, %v1001
        %v1122 = vsel %vm1119, %v1076, %v1002
        %v1123 = vsel %vm1119, %v1079, %v1003
        %v1124 = vsel %vm1119, %v1082, %v1004
        %v1125 = vsel %vm1119, %v1085, %v1005
        %v1126 = vsel %vm1119, %v1088, %v1006
        %v1127 = vsel %vm1119, %v1091, %v1007
        %v1128 = vsel %vm1119, %v1094, %v1008
        %v1129 = vsel %vm1119, %v1097, %v1009
        %v1130 = vsel %vm1119, %v1100, %v1010
        %v1131 = vsel %vm1119, %v1103, %v1011
        %v1132 = vsel %vm1119, %v1106, %v1012
        %v1133 = vsel %vm1119, %v1109, %v1013
        %v1134 = vsel %vm1119, %v1112, %v1014
        %v1135 = vsel %vm1119, %v1115, %v1015
        %v1136 = vsel %vm1116, 1, 0
        %vm1137 = vcmp.eq.s32.totalorder %v1136, 1
        %v1138 = vsel %vm1137, %v1021, %v1120
        %v1139 = vsel %vm1137, %v1024, %v1121
        %v1140 = vsel %vm1137, %v1027, %v1122
        %v1141 = vsel %vm1137, %v1030, %v1123
        %v1142 = vsel %vm1137, %v1033, %v1124
        %v1143 = vsel %vm1137, %v1036, %v1125
        %v1144 = vsel %vm1137, %v1039, %v1126
        %v1145 = vsel %vm1137, %v1042, %v1127
        %v1146 = vsel %vm1137, %v1045, %v1128
        %v1147 = vsel %vm1137, %v1048, %v1129
        %v1148 = vsel %vm1137, %v1051, %v1130
        %v1149 = vsel %vm1137, %v1054, %v1131
        %v1150 = vsel %vm1137, %v1057, %v1132
        %v1151 = vsel %vm1137, %v1060, %v1133
        %v1152 = vsel %vm1137, %v1063, %v1134
        %v1153 = vsel %vm1137, %v1066, %v1135
        %v1154 = vmax.f32 %v1138, %v1142
        %v1155 = vmax.f32 %v1139, %v1143
        %v1156 = vmax.f32 %v1140, %v1144
        %v1157 = vmax.f32 %v1141, %v1145
        %v1158 = vmax.f32 %v1142, %v1146
        %v1159 = vmax.f32 %v1143, %v1147
        %v1160 = vmax.f32 %v1144, %v1148
        %v1161 = vmax.f32 %v1145, %v1149
        %v1162 = vmax.f32 %v1146, %v1150
        %v1163 = vmax.f32 %v1147, %v1151
        %v1164 = vmax.f32 %v1148, %v1152
        %v1165 = vmax.f32 %v1149, %v1153
        %v1166 = vmax.f32 %v1154, %v1146
        %v1167 = vmax.f32 %v1155, %v1147
        %v1168 = vmax.f32 %v1156, %v1148
        %v1169 = vmax.f32 %v1157, %v1149
        %v1170 = vmax.f32 %v1158, %v1150
        %v1171 = vmax.f32 %v1159, %v1151
        %v1172 = vmax.f32 %v1160, %v1152
        %v1173 = vmax.f32 %v1161, %v1153
        %vm1174 = vcmp.eq.f32.partialorder %v1154, %v660
        %vm1175 = vcmp.eq.f32.partialorder %v1155, %v661
        %vm1176 = vcmp.eq.f32.partialorder %v1156, %v662
        %vm1177 = vcmp.eq.f32.partialorder %v1157, %v663
        %vm1178 = vcmp.eq.f32.partialorder %v1166, %v664
        %vm1179 = vcmp.eq.f32.partialorder %v1167, %v665
        %vm1180 = vcmp.eq.f32.partialorder %v1168, %v666
        %vm1181 = vcmp.eq.f32.partialorder %v1169, %v667
        %vm1182 = vcmp.eq.f32.partialorder %v1170, %v668
        %vm1183 = vcmp.eq.f32.partialorder %v1171, %v669
        %vm1184 = vcmp.eq.f32.partialorder %v1172, %v670
        %vm1185 = vcmp.eq.f32.partialorder %v1173, %v671
        %vm1186 = vcmp.eq.f32.partialorder %v1162, %v672
        %vm1187 = vcmp.eq.f32.partialorder %v1163, %v673
        %vm1188 = vcmp.eq.f32.partialorder %v1164, %v674
        %vm1189 = vcmp.eq.f32.partialorder %v1165, %v675
        %vm1190 = vcmp.gt.f32.partialorder %v660, 0.001
        %vm1191 = vcmp.gt.f32.partialorder %v661, 0.001
        %vm1192 = vcmp.gt.f32.partialorder %v662, 0.001
        %vm1193 = vcmp.gt.f32.partialorder %v663, 0.001
        %vm1194 = vcmp.gt.f32.partialorder %v664, 0.001
        %vm1195 = vcmp.gt.f32.partialorder %v665, 0.001
        %vm1196 = vcmp.gt.f32.partialorder %v666, 0.001
        %vm1197 = vcmp.gt.f32.partialorder %v667, 0.001
        %vm1198 = vcmp.gt.f32.partialorder %v668, 0.001
        %vm1199 = vcmp.gt.f32.partialorder %v669, 0.001
        %vm1200 = vcmp.gt.f32.partialorder %v670, 0.001
        %vm1201 = vcmp.gt.f32.partialorder %v671, 0.001
        %vm1202 = vcmp.gt.f32.partialorder %v672, 0.001
        %vm1203 = vcmp.gt.f32.partialorder %v673, 0.001
        %vm1204 = vcmp.gt.f32.partialorder %v674, 0.001
        %vm1205 = vcmp.gt.f32.partialorder %v675, 0.001
        %vm1206 = vmand %vm1174, %vm1190
        %vm1207 = vmand %vm1175, %vm1191
        %vm1208 = vmand %vm1176, %vm1192
        %vm1209 = vmand %vm1177, %vm1193
        %vm1210 = vmand %vm1178, %vm1194
        %vm1211 = vmand %vm1179, %vm1195
        %vm1212 = vmand %vm1180, %vm1196
        %vm1213 = vmand %vm1181, %vm1197
        %vm1214 = vmand %vm1182, %vm1198
        %vm1215 = vmand %vm1183, %vm1199
        %vm1216 = vmand %vm1184, %vm1200
        %vm1217 = vmand %vm1185, %vm1201
        %vm1218 = vmand %vm1186, %vm1202
        %vm1219 = vmand %vm1187, %vm1203
        %vm1220 = vmand %vm1188, %vm1204
        %vm1221 = vmand %vm1189, %vm1205
        %vm1222 = vmpackc.low %vm1207, %vm1206
        %vm1223 = vmpackc.low %vm1209, %vm1208
        %vm1224 = vmpackc.even %vm1223, %vm1222
        %vm1225 = vmpackc.low %vm1211, %vm1210
        %vm1226 = vmpackc.low %vm1213, %vm1212
        %vm1227 = vmpackc.even %vm1226, %vm1225
        %vm1228 = vmpackc.low %vm1215, %vm1214
        %vm1229 = vmpackc.low %vm1217, %vm1216
        %vm1230 = vmpackc.even %vm1229, %vm1228
        %vm1231 = vmpackc.low %vm1219, %vm1218
        %vm1232 = vmpackc.low %vm1221, %vm1220
        %vm1233 = vmpackc.even %vm1232, %vm1231
        %v1234 = vsel %vm1224, 16843009, 0
        %v1235 = vsel %vm1227, 16843009, 0
        %v1236 = vsel %vm1230, 16843009, 0
        %v1237 = vsel %vm1233, 16843009, 0
        %1238 = vst [vmem:[%s525] sm:$0xff] %v1234
        %1239 = vst [vmem:[%s525 + $0x8] sm:$0xff] %v1235
        %1240 = vst [vmem:[%s525 + $0x10] sm:$0xff] %v1236
        %1241 = vst [vmem:[%s525 + $0x18] sm:$0xff] %v1237
        %1242 = vst [vmem:[%s532] sm:$0xff] %v1154
        %1243 = vst [vmem:[%s532 + $0x8] sm:$0xff] %v1155
        %1244 = vst [vmem:[%s532 + $0x10] sm:$0xff] %v1156
        %1245 = vst [vmem:[%s532 + $0x18] sm:$0xff] %v1157
        %1246 = vst [vmem:[%s532 + $0x20] sm:$0xff] %v1166
        %1247 = vst [vmem:[%s532 + $0x28] sm:$0xff] %v1167
        %1248 = vst [vmem:[%s532 + $0x30] sm:$0xff] %v1168
        %1249 = vst [vmem:[%s532 + $0x38] sm:$0xff] %v1169
        %1250 = vst [vmem:[%s532 + $0x40] sm:$0xff] %v1170
        %1251 = vst [vmem:[%s532 + $0x48] sm:$0xff] %v1171
        %1252 = vst [vmem:[%s532 + $0x50] sm:$0xff] %v1172
        %1253 = vst [vmem:[%s532 + $0x58] sm:$0xff] %v1173
        %1254 = vst [vmem:[%s532 + $0x60] sm:$0xff] %v1162
        %1255 = vst [vmem:[%s532 + $0x68] sm:$0xff] %v1163
        %1256 = vst [vmem:[%s532 + $0x70] sm:$0xff] %v1164
        %1257 = vst [vmem:[%s532 + $0x78] sm:$0xff] %v1165
        %s1258 = sand.u32 %s163, 1
        %s1259 = sand.u32 %s163, 1
        %s1260 = smul.addr %s1259, 32
        %s1261 = scalar_lea.vmem [#allocation5], %s1260
        %s1262 = sand.u32 %s191, 1
        %s1263 = scalar_lea.sflag [#allocation7], %s1262
        %s1264 = sand.u32 %s191, 1
        %s1265 = smul.addr %s1264, 128
        %s1266 = scalar_lea.vmem [#allocation6], %s1265
        // Predicated region
        $region151: #{_lambda_.3} parent=137 // pred_check
          %p1267 = pneg %p173
        $region152: #{_lambda_.3} parent=137 // pred_check_branch
          %1269 = sbr.rel (%p1267) target = $region154
        $region153: #{_lambda_.3} parent=137 // pred_region
          %s1270 = smul.addr %s24, 16
          %s1271 = sadd.s32 %s25, %s1270
          %s1272 = smul.addr %s1271, 8
          %s1273 = scalar_lea.vmem %s4, %s1272
          // Predicated region
          $region155: #{_lambda_.3} parent=153 // pred_check
            _
          $region156: #{_lambda_.3} parent=153 // pred_check_branch
            %1275 = sbr.rel (0) target = $region158
          $region157: #{_lambda_.3} parent=153 // pred_region
            // Predicated region
            $region159: #{_lambda_.3} parent=157 // pred_check
              _
            $region160: #{_lambda_.3} parent=157 // pred_check_branch
              %1277 = sbr.rel (0) target = $region162
            $region161: #{_lambda_.3} parent=157 // pred_region
              // Predicated region
              $region174: #{_lambda_.3} parent=161 // pred_check
                _
              $region175: #{_lambda_.3} parent=161 // pred_check_branch
                %1298 = sbr.rel (0) target = $region177
              $region176: #{_lambda_.3} parent=161 // pred_region
                loop: start=0, step=1, limit=1
                $region178: #{_lambda_.3} parent=176 // loop_pre_header
                  _
                $region179: #{_lambda_.3} parent=176 // loop_header
                  %s1300 = sphi 0, %s1304
                  %p1301 = scmp.ge.s32.totalorder %s1300, 1
                  %s1305 = sphi %s1261, %s1261
                  %s1306 = sphi %s1273, %s1273
                $region180: #{_lambda_.3} parent=176 // loop_header_branch
                  %1303 = sbr.rel (%p1301) target = $region184
                $region181: #{_lambda_.3} parent=176 // loop_body
                  %v1307 = vld [vmem:[%s1305] sm:$0xff]
                  %1308 = vst [vmem:[%s1306] sm:$0xff] %v1307
                  %v1309 = vld [vmem:[%s1305 + $0x8] sm:$0xff]
                  %1310 = vst [vmem:[%s1306 + $0x20] sm:$0xff] %v1309
                  %v1311 = vld [vmem:[%s1305 + $0x10] sm:$0xff]
                  %1312 = vst [vmem:[%s1306 + $0x40] sm:$0xff] %v1311
                  %v1313 = vld [vmem:[%s1305 + $0x18] sm:$0xff]
                  %1314 = vst [vmem:[%s1306 + $0x60] sm:$0xff] %v1313
                $region182: #{_lambda_.3} parent=176 // loop_footer
                  %s1304 = sadd.s32 1, %s1300
                $region183: #{_lambda_.3} parent=176 // loop_footer_branch
                  %1299 = sbr.rel target = $region179
                $region184: #{_lambda_.3} parent=176 // loop_exit
                  _
              $region177: #{_lambda_.3} parent=161 // pred_fallthru
                _
              // Predicated region
              $region185: #{_lambda_.3} parent=161 // pred_check
                _
              $region186: #{_lambda_.3} parent=161 // pred_check_branch
                %1316 = sbr.rel target = $region188
              $region187: #{_lambda_.3} parent=161 // pred_region
                _
              $region188: #{_lambda_.3} parent=161 // pred_fallthru
                _
            $region162: #{_lambda_.3} parent=157 // pred_fallthru
              _
            // Predicated region
            $region163: #{_lambda_.3} parent=157 // pred_check
              _
            $region164: #{_lambda_.3} parent=157 // pred_check_branch
              %1279 = sbr.rel target = $region166
            $region165: #{_lambda_.3} parent=157 // pred_region
              loop: start=0, step=1, limit=1
              $region167: #{_lambda_.3} parent=165 // loop_pre_header
                _
              $region168: #{_lambda_.3} parent=165 // loop_header
                %s1282 = sphi 0, %s1286
                %p1283 = scmp.ge.s32.totalorder %s1282, 1
                %s1287 = sphi %s1261, %s1261
                %s1288 = sphi %s1273, %s1273
              $region169: #{_lambda_.3} parent=165 // loop_header_branch
                %1285 = sbr.rel (%p1283) target = $region173
              $region170: #{_lambda_.3} parent=165 // loop_body
                %v1289 = vld [vmem:[%s1287] sm:$0xff]
                %1290 = vst [vmem:[%s1288] sm:$0xff] %v1289
                %v1291 = vld [vmem:[%s1287 + $0x8] sm:$0xff]
                %1292 = vst [vmem:[%s1288 + $0x20] sm:$0xff] %v1291
                %v1293 = vld [vmem:[%s1287 + $0x10] sm:$0xff]
                %1294 = vst [vmem:[%s1288 + $0x40] sm:$0xff] %v1293
                %v1295 = vld [vmem:[%s1287 + $0x18] sm:$0xff]
                %1296 = vst [vmem:[%s1288 + $0x60] sm:$0xff] %v1295
              $region171: #{_lambda_.3} parent=165 // loop_footer
                %s1286 = sadd.s32 1, %s1282
              $region172: #{_lambda_.3} parent=165 // loop_footer_branch
                %1281 = sbr.rel target = $region168
              $region173: #{_lambda_.3} parent=165 // loop_exit
                _
            $region166: #{_lambda_.3} parent=157 // pred_fallthru
              _
          $region158: #{_lambda_.3} parent=153 // pred_fallthru
            _
          %1317 = vnop
        $region154: #{_lambda_.3} parent=137 // pred_fallthru
          _
        // Predicated region
        $region189: #{_lambda_.3} parent=137 // pred_check
          %p1318 = pneg %p201
        $region190: #{_lambda_.3} parent=137 // pred_check_branch
          %1320 = sbr.rel (%p1318) target = $region192
        $region191: #{_lambda_.3} parent=137 // pred_region
          #allocation9 [shape = 'u32[6]{0}', space=smem, size = 0x18, scoped, tag = 'DMA stride descriptor']
          %s1321 = smul.u32 4, %s25
          %s1323 = ssub.s32 2048, 2048
          %1324 = vsyncadd %s1263, %s1323
          %s1325 = smul.addr %s24, 64
          %s1326 = sadd.s32 %s1321, %s1325
          %s1327 = smul.addr %s1326, 128
          %s1328 = scalar_lea.hbm %s5, %s1327
          %s1330 = sshll.u32 1, 14
          %s1331 = sxor.u32 4294967295, %s1330
          %s1334 = sshll.u32 7, 18
          %s1335 = sxor.u32 4294967295, %s1334
          %s1336 = sand.u32 0, %s1335
          %s1338 = sor.u32 %s1336, 0
          %s1340 = sshll.u32 3, 24
          %s1341 = sxor.u32 4294967295, %s1340
          %s1342 = sand.u32 %s1338, %s1341
          %s1344 = sor.u32 %s1342, 0
          %s1345 = sshll.u32 %s1266, 4
          %s1346 = int_to_ptr.vmem [resolvable:$true] %s1345
          %1352 = sst [smem:[#allocation9]] 512
          %s1353 = scalar_lea.smem [#allocation9], 1
          %1354 = sst [smem:[%s1353]] 2048
          %s1355 = scalar_lea.smem [#allocation9], 2
          %1356 = sst [smem:[%s1355]] 4
          %s1357 = scalar_lea.smem [#allocation9], 3
          %1358 = sst [smem:[%s1357]] 128
          %s1359 = scalar_lea.smem [#allocation9], 4
          %1360 = sst [smem:[%s1359]] 128
          %s1361 = scalar_lea.smem [#allocation9], 5
          %1362 = sst [smem:[%s1361]] 8
          %1364 = dma.general %s1346, 2048, %s1328, %s1263, [#allocation8], [#allocation9], %s1344, 0
        $region192: #{_lambda_.3} parent=137 // pred_fallthru
          _
      $region138: #{_lambda_.3} parent=5 // pred_fallthru
        _
      %p1365 = scmp.le.s32.totalorder 2, %s15
      // Predicated region
      $region193: #{_lambda_.3} parent=5 // pred_check
        %p1366 = pneg %p1365
      $region194: #{_lambda_.3} parent=5 // pred_check_branch
        %1368 = sbr.rel (%p1366) target = $region196
      $region195: #{_lambda_.3} parent=5 // pred_region
        %s1369 = ssub.s32 %s15, 2
        // Predicated region
        $region197: #{_lambda_.3} parent=195 // pred_check
          %p1370 = pneg %p179
        $region198: #{_lambda_.3} parent=195 // pred_check_branch
          %1372 = sbr.rel (%p1370) target = $region200
        $region199: #{_lambda_.3} parent=195 // pred_region
          %s1373 = sand.u32 %s164, 1
          %s1374 = sand.u32 %s164, 1
          %s1375 = smul.addr %s1374, 32
          %s1376 = scalar_lea.vmem [#allocation5], %s1375
        $region200: #{_lambda_.3} parent=195 // pred_fallthru
          _
        // Predicated region
        $region201: #{_lambda_.3} parent=195 // pred_check
          %p1377 = pneg %p207
        $region202: #{_lambda_.3} parent=195 // pred_check_branch
          %1379 = sbr.rel (%p1377) target = $region204
        $region203: #{_lambda_.3} parent=195 // pred_region
          %s1380 = sand.u32 %s192, 1
          %s1381 = scalar_lea.sflag [#allocation7], %s1380
          %s1382 = sand.u32 %s192, 1
          %s1383 = smul.addr %s1382, 128
          %s1384 = scalar_lea.vmem [#allocation6], %s1383
          %1385 = dma.done %s1381, 2048
        $region204: #{_lambda_.3} parent=195 // pred_fallthru
          _
      $region196: #{_lambda_.3} parent=5 // pred_fallthru
        _
    $region6: #{_lambda_.3} parent=1 // loop_footer
      %s19 = sadd.s32 1, %s15
    $region7: #{_lambda_.3} parent=1 // loop_footer_branch
      %14 = sbr.rel target = $region3
    $region8: #{_lambda_.3} parent=1 // loop_exit
      _
    %1386 = vsyncpa [#allocation7], 1
    %s1387 = scalar_lea.sflag [#allocation7], 1
    %1388 = vsyncpa %s1387, 1

</llo_original>
